<compile_context>
chip_gen: v5e
topology: v5e:2x2
jax: 0.10.0
libtpu: 0.0.40
codegen_flags: <defaults>
</compile_context>

<pallas_src>
import math
import functools

import jax
import jax.numpy as jnp
from jax import lax
from jax.experimental import pallas as pl
from jax.experimental.pallas import tpu as pltpu


# ----------------------------------------------------------------------------
# Host-side helpers
# ----------------------------------------------------------------------------
def make_positional_encoding(seq_len, d):
    pos = jnp.arange(seq_len, dtype=jnp.float32)[:, None]
    div = jnp.exp(jnp.arange(0, d, 2, dtype=jnp.float32) * (-math.log(10000.0) / d))
    pe = jnp.zeros((seq_len, d), jnp.float32)
    pe = pe.at[:, 0::2].set(jnp.sin(pos * div))
    pe = pe.at[:, 1::2].set(jnp.cos(pos * div))
    return pe[None]  # (1, S, D)


def init_layer_params(key, d_model, dim_ff):
    # PyTorch layout: nn.Linear weight is (out_features, in_features).
    ks = jax.random.split(key, 8)
    std = 0.02
    return {
        "wq": jax.random.normal(ks[0], (d_model, d_model), jnp.float32) * std,
        "bq": jax.random.normal(ks[1], (1, d_model), jnp.float32) * std,
        "wk": jax.random.normal(ks[2], (d_model, d_model), jnp.float32) * std,
        "bk": jnp.zeros((1, d_model), jnp.float32),
        "wv": jax.random.normal(ks[3], (d_model, d_model), jnp.float32) * std,
        "bv": jnp.zeros((1, d_model), jnp.float32),
        "wo": jax.random.normal(ks[4], (d_model, d_model), jnp.float32) * std,
        "bo": jnp.zeros((1, d_model), jnp.float32),
        "ln1_w": jnp.ones((1, d_model), jnp.float32),
        "ln1_b": jnp.zeros((1, d_model), jnp.float32),
        "w1": jax.random.normal(ks[5], (dim_ff, d_model), jnp.float32) * std,
        "b1": jax.random.normal(ks[6], (1, dim_ff), jnp.float32) * std,
        "w2": jax.random.normal(ks[7], (d_model, dim_ff), jnp.float32) * std,
        "b2": jnp.zeros((1, d_model), jnp.float32),
        "ln2_w": jnp.ones((1, d_model), jnp.float32),
        "ln2_b": jnp.zeros((1, d_model), jnp.float32),
    }


def pack_params(layer_params, num_heads, ff_chunk):
    """Pre-transpose / fuse / stack the PyTorch-layout params so the kernel does
    x @ W directly with well-shaped bf16 MXU matmuls:
      - fused QKV weight (D, 3D) and bias (1, 3D),
      - single output-projection weight (D, D),
      - FF weights chunked on a leading dim for the fori_loop,
      - the 6 remaining tiny f32 vectors packed into one (8, D) slab."""

    def prep(p):
        D = p["wq"].shape[0]
        FF = p["w1"].shape[0]
        NC = FF // ff_chunk
        o = {}
        # qkv = x @ W_qkv + b_qkv  ->  columns [q | k | v], heads contiguous within each
        o["w_qkv"] = jnp.concatenate([p["wq"].T, p["wk"].T, p["wv"].T], axis=1).astype(jnp.bfloat16)
        o["b_qkv"] = jnp.concatenate([p["bq"], p["bk"], p["bv"]], axis=1)          # (1, 3D) f32
        # attn = ctx @ W_o + b_o (ctx heads already in PyTorch concat order)
        o["wo"] = p["wo"].T.astype(jnp.bfloat16)                                   # (D, D)
        # rows: bo, b2, ln1_w, ln1_b, ln2_w, ln2_b, pad, pad
        o["vecs"] = jnp.concatenate(
            [p["bo"], p["b2"], p["ln1_w"], p["ln1_b"], p["ln2_w"], p["ln2_b"],
             jnp.zeros((2, D), jnp.float32)], axis=0)                              # (8, D)
        # FFN chunked over FF: g_c = gelu(h1 @ w1[c] + b1[c]); ff += g_c @ w2[c]
        o["w1"] = p["w1"].reshape(NC, ff_chunk, D).transpose(0, 2, 1).astype(jnp.bfloat16)  # (NC, D, fc)
        o["b1"] = p["b1"].reshape(NC, 1, ff_chunk)                                           # (NC, 1, fc)
        o["w2"] = p["w2"].T.reshape(NC, ff_chunk, D).astype(jnp.bfloat16)                    # (NC, fc, D)
        return o

    prepped = [prep(p) for p in layer_params]
    return {k: jnp.stack([q[k] for q in prepped], axis=0) for k in prepped[0]}


# ----------------------------------------------------------------------------
# In-kernel math helpers (f32)
# ----------------------------------------------------------------------------
def _layer_norm(x, w, b, eps=1e-5):
    mean = jnp.mean(x, axis=-1, keepdims=True)
    var = jnp.mean(jnp.square(x - mean), axis=-1, keepdims=True)
    return (x - mean) * lax.rsqrt(var + eps) * w + b


def _gelu_tanh(x):
    # tanh-approx GELU: routes the transcendental to the EUP slot (VALU-free).
    c = math.sqrt(2.0 / math.pi)
    return 0.5 * x * (1.0 + jnp.tanh(c * (x + 0.044715 * x * x * x)))


# ----------------------------------------------------------------------------
# Fused kernel: PE add + all encoder layers, one pallas_call
# ----------------------------------------------------------------------------
def _fused_transformer_kernel(
    x_ref, pe_ref,
    wqkv_ref, bqkv_ref, wo_ref, vecs_ref,
    w1_ref, b1_ref, w2_ref,
    o_ref,
    *, num_heads,
):
    l = pl.program_id(1)
    B_blk, S, D = x_ref.shape
    M = B_blk * S
    Dh = D // num_heads
    n_ff_chunks = w1_ref.shape[0]
    scale = 1.0 / math.sqrt(Dh)
    bf16 = jnp.bfloat16

    # First layer step: inject input + positional encoding into the resident
    # output VMEM block (dropout is identity in eval mode).
    # TODO(synk): dropout is a no-op here (eval-mode semantics; no RNG masking).
    @pl.when(l == 0)
    def _():
        o_ref[...] = x_ref[...] + pe_ref[...]

    x = o_ref[...].reshape(M, D)       # (M, D) f32, resident across layer steps
    x_b = x.astype(bf16)

    # ---- fused QKV projection: one (M, D) @ (D, 3D) bf16 matmul ----
    qkv = jnp.dot(x_b, wqkv_ref[...], preferred_element_type=jnp.float32) + bqkv_ref[...]

    # ---- attention per sequence / head on static lane slices (Dh multiples of 16) ----
    ctx_rows = []
    for b in range(B_blk):             # static unroll, B_blk is small
        r0 = b * S
        head_ctx = []
        for h in range(num_heads):     # static unroll, H is small
            qo = h * Dh
            ko = D + h * Dh
            vo = 2 * D + h * Dh
            qh = qkv[r0:r0 + S, qo:qo + Dh].astype(bf16)
            kh = qkv[r0:r0 + S, ko:ko + Dh].astype(bf16)
            vh = qkv[r0:r0 + S, vo:vo + Dh].astype(bf16)
            s = lax.dot_general(
                qh, kh, (((1,), (1,)), ((), ())),          # contract head dims; no .T
                preferred_element_type=jnp.float32,
            ) * scale
            s = s - jnp.max(s, axis=-1, keepdims=True)
            p = jnp.exp(s)
            p = p * pl.reciprocal(jnp.sum(p, axis=-1, keepdims=True), approx=True)
            head_ctx.append(jnp.dot(p.astype(bf16), vh, preferred_element_type=jnp.float32))
        ctx_rows.append(jnp.concatenate(head_ctx, axis=-1))    # (S, D) lane concat
    ctx = jnp.concatenate(ctx_rows, axis=0)                    # (M, D)

    bo = vecs_ref[0:1, :]
    b2 = vecs_ref[1:2, :]
    ln1_w = vecs_ref[2:3, :]
    ln1_b = vecs_ref[3:4, :]
    ln2_w = vecs_ref[4:5, :]
    ln2_b = vecs_ref[5:6, :]

    # ---- fused output projection: single (M, D) @ (D, D) matmul ----
    attn = jnp.dot(ctx.astype(bf16), wo_ref[...], preferred_element_type=jnp.float32) + bo

    # ---- residual + LayerNorm1 (f32) ----
    h1 = _layer_norm(x + attn, ln1_w, ln1_b)
    h1_b = h1.astype(bf16)

    # ---- feed-forward: fori_loop over FF chunks, single running f32 accumulator ----
    def ff_body(c, acc):
        g = jnp.dot(h1_b, w1_ref[c], preferred_element_type=jnp.float32) + b1_ref[c]
        g = _gelu_tanh(g)
        return acc + jnp.dot(g.astype(bf16), w2_ref[c], preferred_element_type=jnp.float32)

    ff = lax.fori_loop(0, n_ff_chunks, ff_body, jnp.zeros((M, D), jnp.float32))

    # ---- residual + LayerNorm2 (f32), write back into the resident block ----
    out = _layer_norm(h1 + ff + b2, ln2_w, ln2_b)
    o_ref[...] = out.reshape(B_blk, S, D).astype(o_ref.dtype)


def transformer_forward(x, pe, packed, num_heads, batch_block=None):
    B, S, D = x.shape
    L = packed["w_qkv"].shape[0]

    if batch_block is None:
        # Keep a 2-way "parallel" leading axis (megacore / dual TC) when possible.
        batch_block = B // 2 if (B >= 2 and B % 2 == 0) else B
    assert B % batch_block == 0
    nb = B // batch_block

    order = ["w_qkv", "b_qkv", "wo", "vecs", "w1", "b1", "w2"]
    weight_args = [packed[k] for k in order]

    def layer_spec(arr):
        rest = tuple(arr.shape[1:])
        nd = len(rest)
        # layer dim squeezed out of the kernel view; block = full non-layer extents
        return pl.BlockSpec((None,) + rest, lambda b, l, _nd=nd: (l,) + (0,) * _nd)

    in_specs = (
        [pl.BlockSpec((batch_block, S, D), lambda b, l: (b, 0, 0)),   # x
         pl.BlockSpec((1, S, D), lambda b, l: (0, 0, 0))]             # positional encoding
        + [layer_spec(a) for a in weight_args]
    )

    return pl.pallas_call(
        functools.partial(_fused_transformer_kernel, num_heads=num_heads),
        out_shape=jax.ShapeDtypeStruct((B, S, D), x.dtype),
        grid_spec=pltpu.PrefetchScalarGridSpec(
            num_scalar_prefetch=0,
            grid=(nb, L),                                             # batch-blocks parallel, layers sequential
            in_specs=in_specs,
            out_specs=pl.BlockSpec((batch_block, S, D), lambda b, l: (b, 0, 0)),
        ),
        compiler_params=pltpu.CompilerParams(
            dimension_semantics=("parallel", "arbitrary"),
            vmem_limit_bytes=32 << 20,                                # real footprint ~2 MiB
        ),
    )(x, pe, *weight_args)


# ----------------------------------------------------------------------------
# Pure-JAX f32 reference (PyTorch semantics, exact-erf gelu) for correctness
# ----------------------------------------------------------------------------
def reference_forward(x, pe, layer_params, num_heads):
    x = x + pe
    for p in layer_params:
        B, S, D = x.shape
        Dh = D // num_heads
        q = x @ p["wq"].T + p["bq"]
        k = x @ p["wk"].T + p["bk"]
        v = x @ p["wv"].T + p["bv"]
        q = q.reshape(B, S, num_heads, Dh).transpose(0, 2, 1, 3)
        k = k.reshape(B, S, num_heads, Dh).transpose(0, 2, 1, 3)
        v = v.reshape(B, S, num_heads, Dh).transpose(0, 2, 1, 3)
        s = jnp.einsum("bhqd,bhkd->bhqk", q, k) / math.sqrt(Dh)
        a = jax.nn.softmax(s, axis=-1)
        ctx = jnp.einsum("bhqk,bhkd->bhqd", a, v).transpose(0, 2, 1, 3).reshape(B, S, D)
        attn = ctx @ p["wo"].T + p["bo"]
        h1 = x + attn
        mean = h1.mean(-1, keepdims=True)
        var = ((h1 - mean) ** 2).mean(-1, keepdims=True)
        h1 = (h1 - mean) / jnp.sqrt(var + 1e-5) * p["ln1_w"] + p["ln1_b"]
        f = jax.nn.gelu(h1 @ p["w1"].T + p["b1"], approximate=False)
        f = f @ p["w2"].T + p["b2"]
        h2 = h1 + f
        mean = h2.mean(-1, keepdims=True)
        var = ((h2 - mean) ** 2).mean(-1, keepdims=True)
        x = (h2 - mean) / jnp.sqrt(var + 1e-5) * p["ln2_w"] + p["ln2_b"]
    return x


if __name__ == "__main__":
    # Small shapes consistent with the module: feature_dim=64, nhead=4,
    # dim_feedforward=2048 (nn.TransformerEncoderLayer default), num_layers=2.
    # batch=4 so the batch-folding path (2 batch-blocks of 2 sequences) is exercised.
    B, S, D, H, FF, L = 4, 64, 64, 4, 2048, 2
    FF_CHUNK = 512

    key = jax.random.PRNGKey(0)
    kx, *kls = jax.random.split(key, L + 1)
    x = jax.random.normal(kx, (B, S, D), jnp.float32)
    pe = make_positional_encoding(S, D)
    layer_params = [init_layer_params(k, D, FF) for k in kls]
    packed = pack_params(layer_params, num_heads=H, ff_chunk=FF_CHUNK)

    out = transformer_forward(x, pe, packed, H)
    out = jax.block_until_ready(out)

    ref = reference_forward(x, pe, layer_params, H)
    assert out.shape == (B, S, D)
    max_err = float(jnp.max(jnp.abs(out - ref)))
    # bf16 MXU inputs + approx reciprocal + tanh-approx gelu vs f32/exact reference.
    assert jnp.allclose(out, ref, atol=2.5e-2, rtol=2.5e-2), max_err

    print("KERNEL_OK")
</pallas_src>

<mosaic_0001>
module attributes {stable_mosaic.version = 11 : i64} {
  func.func @_fused_transformer_kernel(%arg0: i32, %arg1: i32, %arg2: memref<2x64x64xf32, #tpu.memory_space<vmem>>, %arg3: memref<1x64x64xf32, #tpu.memory_space<vmem>>, %arg4: memref<1x64x192xbf16, #tpu.memory_space<vmem>>, %arg5: memref<1x1x192xf32, #tpu.memory_space<vmem>>, %arg6: memref<1x64x64xbf16, #tpu.memory_space<vmem>>, %arg7: memref<1x8x64xf32, #tpu.memory_space<vmem>>, %arg8: memref<1x4x64x512xbf16, #tpu.memory_space<vmem>>, %arg9: memref<1x4x1x512xf32, #tpu.memory_space<vmem>>, %arg10: memref<1x4x512x64xbf16, #tpu.memory_space<vmem>>, %arg11: memref<2x64x64xf32, #tpu.memory_space<vmem>>) attributes {dimension_semantics = [#tpu.dimension_semantics<parallel>, #tpu.dimension_semantics<arbitrary>], iteration_bounds = array<i64: 2, 2>, scalar_prefetch = 0 : i64, scratch_operands = 0 : i64, tpu.core_type = #tpu.core_type<tc>, window_params = [{transform_indices = @transform_0, window_bounds = array<i64: 2, 64, 64>}, {pipeline_mode = #tpu.pipeline_mode<synchronous>, transform_indices = @transform_1, window_bounds = array<i64: 1, 64, 64>}, {transform_indices = @transform_2, window_bounds = array<i64: 1, 64, 192>}, {transform_indices = @transform_3, window_bounds = array<i64: 1, 1, 192>}, {transform_indices = @transform_4, window_bounds = array<i64: 1, 64, 64>}, {transform_indices = @transform_5, window_bounds = array<i64: 1, 8, 64>}, {transform_indices = @transform_6, window_bounds = array<i64: 1, 4, 64, 512>}, {transform_indices = @transform_7, window_bounds = array<i64: 1, 4, 1, 512>}, {transform_indices = @transform_8, window_bounds = array<i64: 1, 4, 512, 64>}, {transform_indices = @transform_9, window_bounds = array<i64: 2, 64, 64>}]} {
    %c0_i32 = arith.constant 0 : i32
    %0 = arith.cmpi eq, %arg1, %c0_i32 : i32
    %1 = arith.extui %0 : i1 to i32
    %c0_i32_0 = arith.constant 0 : i32
    %2 = arith.cmpi ne, %1, %c0_i32_0 : i32
    scf.if %2 {
      %c0_82 = arith.constant 0 : index
      %c0_83 = arith.constant 0 : index
      %c0_84 = arith.constant 0 : index
      %256 = vector.load %arg2[%c0_82, %c0_83, %c0_84] : memref<2x64x64xf32, #tpu.memory_space<vmem>>, vector<2x64x64xf32>
      %c0_85 = arith.constant 0 : index
      %c0_86 = arith.constant 0 : index
      %c0_87 = arith.constant 0 : index
      %257 = vector.load %arg3[%c0_85, %c0_86, %c0_87] : memref<1x64x64xf32, #tpu.memory_space<vmem>>, vector<1x64x64xf32>
      %258 = vector.broadcast %257 : vector<1x64x64xf32> to vector<2x64x64xf32>
      %259 = arith.addf %256, %258 : vector<2x64x64xf32>
      %c0_88 = arith.constant 0 : index
      %c0_89 = arith.constant 0 : index
      %c0_90 = arith.constant 0 : index
      %260 = vector.load %arg11[%c0_88, %c0_89, %c0_90] : memref<2x64x64xf32, #tpu.memory_space<vmem>>, vector<2x64x64xf32>
      tpu.vector_store %arg11[%c0_88, %c0_89, %c0_90], %259 {strides = array<i32>} : memref<2x64x64xf32, #tpu.memory_space<vmem>>, vector<2x64x64xf32>,
    } else {
    }
    %c0 = arith.constant 0 : index
    %c0_1 = arith.constant 0 : index
    %c0_2 = arith.constant 0 : index
    %3 = vector.load %arg11[%c0, %c0_1, %c0_2] : memref<2x64x64xf32, #tpu.memory_space<vmem>>, vector<2x64x64xf32>
    %4 = vector.shape_cast %3 : vector<2x64x64xf32> to vector<128x64xf32>
    %5 = arith.truncf %4 : vector<128x64xf32> to vector<128x64xbf16>
    %c0_3 = arith.constant 0 : index
    %c0_4 = arith.constant 0 : index
    %c0_5 = arith.constant 0 : index
    %6 = vector.load %arg4[%c0_3, %c0_4, %c0_5] : memref<1x64x192xbf16, #tpu.memory_space<vmem>>, vector<1x64x192xbf16>
    %7 = vector.shape_cast %6 : vector<1x64x192xbf16> to vector<64x192xbf16>
    %cst = arith.constant dense<0.000000e+00> : vector<128x192xf32>
    %8 = tpu.matmul %5, %7, %cst {dimension_numbers = #tpu.dot_dimension_numbers<[1], [0], [0], [1], [0, 0, 1, 1], [], []>} : vector<128x64xbf16>, vector<64x192xbf16>, vector<128x192xf32> -> vector<128x192xf32>
    %c0_6 = arith.constant 0 : index
    %c0_7 = arith.constant 0 : index
    %c0_8 = arith.constant 0 : index
    %9 = vector.load %arg5[%c0_6, %c0_7, %c0_8] : memref<1x1x192xf32, #tpu.memory_space<vmem>>, vector<1x1x192xf32>
    %10 = vector.shape_cast %9 : vector<1x1x192xf32> to vector<1x192xf32>
    %11 = vector.broadcast %10 : vector<1x192xf32> to vector<128x192xf32>
    %12 = arith.addf %8, %11 : vector<128x192xf32>
    %13 = vector.extract_strided_slice %12 {offsets = [0, 0], sizes = [64, 16], strides = [1, 1]} : vector<128x192xf32> to vector<64x16xf32>
    %14 = arith.truncf %13 : vector<64x16xf32> to vector<64x16xbf16>
    %15 = vector.extract_strided_slice %12 {offsets = [0, 64], sizes = [64, 16], strides = [1, 1]} : vector<128x192xf32> to vector<64x16xf32>
    %16 = arith.truncf %15 : vector<64x16xf32> to vector<64x16xbf16>
    %17 = vector.extract_strided_slice %12 {offsets = [0, 128], sizes = [64, 16], strides = [1, 1]} : vector<128x192xf32> to vector<64x16xf32>
    %18 = arith.truncf %17 : vector<64x16xf32> to vector<64x16xbf16>
    %cst_9 = arith.constant dense<0.000000e+00> : vector<64x64xf32>
    %19 = tpu.matmul %14, %16, %cst_9 {dimension_numbers = #tpu.dot_dimension_numbers<[1], [1], [0], [0], [0, 0, 1, 0], [], []>} : vector<64x16xbf16>, vector<64x16xbf16>, vector<64x64xf32> -> vector<64x64xf32>
    %cst_10 = arith.constant 2.500000e-01 : f32
    %20 = vector.broadcast %cst_10 : f32 to vector<64x64xf32>
    %21 = arith.mulf %19, %20 : vector<64x64xf32>
    %cst_11 = arith.constant dense<0xFF800000> : vector<64xf32>
    %22 = vector.multi_reduction <maximumf>, %21, %cst_11 [1] : vector<64x64xf32> to vector<64xf32>
    %23 = vector.shape_cast %22 : vector<64xf32> to vector<64x1xf32>
    %24 = vector.broadcast %23 : vector<64x1xf32> to vector<64x64xf32>
    %25 = arith.subf %21, %24 : vector<64x64xf32>
    %26 = math.exp %25 : vector<64x64xf32>
    %cst_12 = arith.constant dense<0.000000e+00> : vector<64xf32>
    %27 = vector.multi_reduction <add>, %26, %cst_12 [1] : vector<64x64xf32> to vector<64xf32>
    %28 = vector.shape_cast %27 : vector<64xf32> to vector<64x1xf32>
    %29 = tpu.reciprocal %28 {approx = true} : vector<64x1xf32> -> vector<64x1xf32>
    %30 = vector.broadcast %29 : vector<64x1xf32> to vector<64x64xf32>
    %31 = arith.mulf %26, %30 : vector<64x64xf32>
    %32 = arith.truncf %31 : vector<64x64xf32> to vector<64x64xbf16>
    %cst_13 = arith.constant dense<0.000000e+00> : vector<64x16xf32>
    %33 = tpu.matmul %32, %18, %cst_13 {dimension_numbers = #tpu.dot_dimension_numbers<[1], [0], [0], [1], [0, 0, 1, 1], [], []>} : vector<64x64xbf16>, vector<64x16xbf16>, vector<64x16xf32> -> vector<64x16xf32>
    %34 = vector.extract_strided_slice %12 {offsets = [0, 16], sizes = [64, 16], strides = [1, 1]} : vector<128x192xf32> to vector<64x16xf32>
    %35 = arith.truncf %34 : vector<64x16xf32> to vector<64x16xbf16>
    %36 = vector.extract_strided_slice %12 {offsets = [0, 80], sizes = [64, 16], strides = [1, 1]} : vector<128x192xf32> to vector<64x16xf32>
    %37 = arith.truncf %36 : vector<64x16xf32> to vector<64x16xbf16>
    %38 = vector.extract_strided_slice %12 {offsets = [0, 144], sizes = [64, 16], strides = [1, 1]} : vector<128x192xf32> to vector<64x16xf32>
    %39 = arith.truncf %38 : vector<64x16xf32> to vector<64x16xbf16>
    %cst_14 = arith.constant dense<0.000000e+00> : vector<64x64xf32>
    %40 = tpu.matmul %35, %37, %cst_14 {dimension_numbers = #tpu.dot_dimension_numbers<[1], [1], [0], [0], [0, 0, 1, 0], [], []>} : vector<64x16xbf16>, vector<64x16xbf16>, vector<64x64xf32> -> vector<64x64xf32>
    %cst_15 = arith.constant 2.500000e-01 : f32
    %41 = vector.broadcast %cst_15 : f32 to vector<64x64xf32>
    %42 = arith.mulf %40, %41 : vector<64x64xf32>
    %cst_16 = arith.constant dense<0xFF800000> : vector<64xf32>
    %43 = vector.multi_reduction <maximumf>, %42, %cst_16 [1] : vector<64x64xf32> to vector<64xf32>
    %44 = vector.shape_cast %43 : vector<64xf32> to vector<64x1xf32>
    %45 = vector.broadcast %44 : vector<64x1xf32> to vector<64x64xf32>
    %46 = arith.subf %42, %45 : vector<64x64xf32>
    %47 = math.exp %46 : vector<64x64xf32>
    %cst_17 = arith.constant dense<0.000000e+00> : vector<64xf32>
    %48 = vector.multi_reduction <add>, %47, %cst_17 [1] : vector<64x64xf32> to vector<64xf32>
    %49 = vector.shape_cast %48 : vector<64xf32> to vector<64x1xf32>
    %50 = tpu.reciprocal %49 {approx = true} : vector<64x1xf32> -> vector<64x1xf32>
    %51 = vector.broadcast %50 : vector<64x1xf32> to vector<64x64xf32>
    %52 = arith.mulf %47, %51 : vector<64x64xf32>
    %53 = arith.truncf %52 : vector<64x64xf32> to vector<64x64xbf16>
    %cst_18 = arith.constant dense<0.000000e+00> : vector<64x16xf32>
    %54 = tpu.matmul %53, %39, %cst_18 {dimension_numbers = #tpu.dot_dimension_numbers<[1], [0], [0], [1], [0, 0, 1, 1], [], []>} : vector<64x64xbf16>, vector<64x16xbf16>, vector<64x16xf32> -> vector<64x16xf32>
    %55 = vector.extract_strided_slice %12 {offsets = [0, 32], sizes = [64, 16], strides = [1, 1]} : vector<128x192xf32> to vector<64x16xf32>
    %56 = arith.truncf %55 : vector<64x16xf32> to vector<64x16xbf16>
    %57 = vector.extract_strided_slice %12 {offsets = [0, 96], sizes = [64, 16], strides = [1, 1]} : vector<128x192xf32> to vector<64x16xf32>
    %58 = arith.truncf %57 : vector<64x16xf32> to vector<64x16xbf16>
    %59 = vector.extract_strided_slice %12 {offsets = [0, 160], sizes = [64, 16], strides = [1, 1]} : vector<128x192xf32> to vector<64x16xf32>
    %60 = arith.truncf %59 : vector<64x16xf32> to vector<64x16xbf16>
    %cst_19 = arith.constant dense<0.000000e+00> : vector<64x64xf32>
    %61 = tpu.matmul %56, %58, %cst_19 {dimension_numbers = #tpu.dot_dimension_numbers<[1], [1], [0], [0], [0, 0, 1, 0], [], []>} : vector<64x16xbf16>, vector<64x16xbf16>, vector<64x64xf32> -> vector<64x64xf32>
    %cst_20 = arith.constant 2.500000e-01 : f32
    %62 = vector.broadcast %cst_20 : f32 to vector<64x64xf32>
    %63 = arith.mulf %61, %62 : vector<64x64xf32>
    %cst_21 = arith.constant dense<0xFF800000> : vector<64xf32>
    %64 = vector.multi_reduction <maximumf>, %63, %cst_21 [1] : vector<64x64xf32> to vector<64xf32>
    %65 = vector.shape_cast %64 : vector<64xf32> to vector<64x1xf32>
    %66 = vector.broadcast %65 : vector<64x1xf32> to vector<64x64xf32>
    %67 = arith.subf %63, %66 : vector<64x64xf32>
    %68 = math.exp %67 : vector<64x64xf32>
    %cst_22 = arith.constant dense<0.000000e+00> : vector<64xf32>
    %69 = vector.multi_reduction <add>, %68, %cst_22 [1] : vector<64x64xf32> to vector<64xf32>
    %70 = vector.shape_cast %69 : vector<64xf32> to vector<64x1xf32>
    %71 = tpu.reciprocal %70 {approx = true} : vector<64x1xf32> -> vector<64x1xf32>
    %72 = vector.broadcast %71 : vector<64x1xf32> to vector<64x64xf32>
    %73 = arith.mulf %68, %72 : vector<64x64xf32>
    %74 = arith.truncf %73 : vector<64x64xf32> to vector<64x64xbf16>
    %cst_23 = arith.constant dense<0.000000e+00> : vector<64x16xf32>
    %75 = tpu.matmul %74, %60, %cst_23 {dimension_numbers = #tpu.dot_dimension_numbers<[1], [0], [0], [1], [0, 0, 1, 1], [], []>} : vector<64x64xbf16>, vector<64x16xbf16>, vector<64x16xf32> -> vector<64x16xf32>
    %76 = vector.extract_strided_slice %12 {offsets = [0, 48], sizes = [64, 16], strides = [1, 1]} : vector<128x192xf32> to vector<64x16xf32>
    %77 = arith.truncf %76 : vector<64x16xf32> to vector<64x16xbf16>
    %78 = vector.extract_strided_slice %12 {offsets = [0, 112], sizes = [64, 16], strides = [1, 1]} : vector<128x192xf32> to vector<64x16xf32>
    %79 = arith.truncf %78 : vector<64x16xf32> to vector<64x16xbf16>
    %80 = vector.extract_strided_slice %12 {offsets = [0, 176], sizes = [64, 16], strides = [1, 1]} : vector<128x192xf32> to vector<64x16xf32>
    %81 = arith.truncf %80 : vector<64x16xf32> to vector<64x16xbf16>
    %cst_24 = arith.constant dense<0.000000e+00> : vector<64x64xf32>
    %82 = tpu.matmul %77, %79, %cst_24 {dimension_numbers = #tpu.dot_dimension_numbers<[1], [1], [0], [0], [0, 0, 1, 0], [], []>} : vector<64x16xbf16>, vector<64x16xbf16>, vector<64x64xf32> -> vector<64x64xf32>
    %cst_25 = arith.constant 2.500000e-01 : f32
    %83 = vector.broadcast %cst_25 : f32 to vector<64x64xf32>
    %84 = arith.mulf %82, %83 : vector<64x64xf32>
    %cst_26 = arith.constant dense<0xFF800000> : vector<64xf32>
    %85 = vector.multi_reduction <maximumf>, %84, %cst_26 [1] : vector<64x64xf32> to vector<64xf32>
    %86 = vector.shape_cast %85 : vector<64xf32> to vector<64x1xf32>
    %87 = vector.broadcast %86 : vector<64x1xf32> to vector<64x64xf32>
    %88 = arith.subf %84, %87 : vector<64x64xf32>
    %89 = math.exp %88 : vector<64x64xf32>
    %cst_27 = arith.constant dense<0.000000e+00> : vector<64xf32>
    %90 = vector.multi_reduction <add>, %89, %cst_27 [1] : vector<64x64xf32> to vector<64xf32>
    %91 = vector.shape_cast %90 : vector<64xf32> to vector<64x1xf32>
    %92 = tpu.reciprocal %91 {approx = true} : vector<64x1xf32> -> vector<64x1xf32>
    %93 = vector.broadcast %92 : vector<64x1xf32> to vector<64x64xf32>
    %94 = arith.mulf %89, %93 : vector<64x64xf32>
    %95 = arith.truncf %94 : vector<64x64xf32> to vector<64x64xbf16>
    %cst_28 = arith.constant dense<0.000000e+00> : vector<64x16xf32>
    %96 = tpu.matmul %95, %81, %cst_28 {dimension_numbers = #tpu.dot_dimension_numbers<[1], [0], [0], [1], [0, 0, 1, 1], [], []>} : vector<64x64xbf16>, vector<64x16xbf16>, vector<64x16xf32> -> vector<64x16xf32>
    %97 = tpu.concatenate %33, %54, %75, %96 in 1 : vector<64x16xf32>, vector<64x16xf32>, vector<64x16xf32>, vector<64x16xf32> -> vector<64x64xf32>
    %98 = vector.extract_strided_slice %12 {offsets = [64, 0], sizes = [64, 16], strides = [1, 1]} : vector<128x192xf32> to vector<64x16xf32>
    %99 = arith.truncf %98 : vector<64x16xf32> to vector<64x16xbf16>
    %100 = vector.extract_strided_slice %12 {offsets = [64, 64], sizes = [64, 16], strides = [1, 1]} : vector<128x192xf32> to vector<64x16xf32>
    %101 = arith.truncf %100 : vector<64x16xf32> to vector<64x16xbf16>
    %102 = vector.extract_strided_slice %12 {offsets = [64, 128], sizes = [64, 16], strides = [1, 1]} : vector<128x192xf32> to vector<64x16xf32>
    %103 = arith.truncf %102 : vector<64x16xf32> to vector<64x16xbf16>
    %cst_29 = arith.constant dense<0.000000e+00> : vector<64x64xf32>
    %104 = tpu.matmul %99, %101, %cst_29 {dimension_numbers = #tpu.dot_dimension_numbers<[1], [1], [0], [0], [0, 0, 1, 0], [], []>} : vector<64x16xbf16>, vector<64x16xbf16>, vector<64x64xf32> -> vector<64x64xf32>
    %cst_30 = arith.constant 2.500000e-01 : f32
    %105 = vector.broadcast %cst_30 : f32 to vector<64x64xf32>
    %106 = arith.mulf %104, %105 : vector<64x64xf32>
    %cst_31 = arith.constant dense<0xFF800000> : vector<64xf32>
    %107 = vector.multi_reduction <maximumf>, %106, %cst_31 [1] : vector<64x64xf32> to vector<64xf32>
    %108 = vector.shape_cast %107 : vector<64xf32> to vector<64x1xf32>
    %109 = vector.broadcast %108 : vector<64x1xf32> to vector<64x64xf32>
    %110 = arith.subf %106, %109 : vector<64x64xf32>
    %111 = math.exp %110 : vector<64x64xf32>
    %cst_32 = arith.constant dense<0.000000e+00> : vector<64xf32>
    %112 = vector.multi_reduction <add>, %111, %cst_32 [1] : vector<64x64xf32> to vector<64xf32>
    %113 = vector.shape_cast %112 : vector<64xf32> to vector<64x1xf32>
    %114 = tpu.reciprocal %113 {approx = true} : vector<64x1xf32> -> vector<64x1xf32>
    %115 = vector.broadcast %114 : vector<64x1xf32> to vector<64x64xf32>
    %116 = arith.mulf %111, %115 : vector<64x64xf32>
    %117 = arith.truncf %116 : vector<64x64xf32> to vector<64x64xbf16>
    %cst_33 = arith.constant dense<0.000000e+00> : vector<64x16xf32>
    %118 = tpu.matmul %117, %103, %cst_33 {dimension_numbers = #tpu.dot_dimension_numbers<[1], [0], [0], [1], [0, 0, 1, 1], [], []>} : vector<64x64xbf16>, vector<64x16xbf16>, vector<64x16xf32> -> vector<64x16xf32>
    %119 = vector.extract_strided_slice %12 {offsets = [64, 16], sizes = [64, 16], strides = [1, 1]} : vector<128x192xf32> to vector<64x16xf32>
    %120 = arith.truncf %119 : vector<64x16xf32> to vector<64x16xbf16>
    %121 = vector.extract_strided_slice %12 {offsets = [64, 80], sizes = [64, 16], strides = [1, 1]} : vector<128x192xf32> to vector<64x16xf32>
    %122 = arith.truncf %121 : vector<64x16xf32> to vector<64x16xbf16>
    %123 = vector.extract_strided_slice %12 {offsets = [64, 144], sizes = [64, 16], strides = [1, 1]} : vector<128x192xf32> to vector<64x16xf32>
    %124 = arith.truncf %123 : vector<64x16xf32> to vector<64x16xbf16>
    %cst_34 = arith.constant dense<0.000000e+00> : vector<64x64xf32>
    %125 = tpu.matmul %120, %122, %cst_34 {dimension_numbers = #tpu.dot_dimension_numbers<[1], [1], [0], [0], [0, 0, 1, 0], [], []>} : vector<64x16xbf16>, vector<64x16xbf16>, vector<64x64xf32> -> vector<64x64xf32>
    %cst_35 = arith.constant 2.500000e-01 : f32
    %126 = vector.broadcast %cst_35 : f32 to vector<64x64xf32>
    %127 = arith.mulf %125, %126 : vector<64x64xf32>
    %cst_36 = arith.constant dense<0xFF800000> : vector<64xf32>
    %128 = vector.multi_reduction <maximumf>, %127, %cst_36 [1] : vector<64x64xf32> to vector<64xf32>
    %129 = vector.shape_cast %128 : vector<64xf32> to vector<64x1xf32>
    %130 = vector.broadcast %129 : vector<64x1xf32> to vector<64x64xf32>
    %131 = arith.subf %127, %130 : vector<64x64xf32>
    %132 = math.exp %131 : vector<64x64xf32>
    %cst_37 = arith.constant dense<0.000000e+00> : vector<64xf32>
    %133 = vector.multi_reduction <add>, %132, %cst_37 [1] : vector<64x64xf32> to vector<64xf32>
    %134 = vector.shape_cast %133 : vector<64xf32> to vector<64x1xf32>
    %135 = tpu.reciprocal %134 {approx = true} : vector<64x1xf32> -> vector<64x1xf32>
    %136 = vector.broadcast %135 : vector<64x1xf32> to vector<64x64xf32>
    %137 = arith.mulf %132, %136 : vector<64x64xf32>
    %138 = arith.truncf %137 : vector<64x64xf32> to vector<64x64xbf16>
    %cst_38 = arith.constant dense<0.000000e+00> : vector<64x16xf32>
    %139 = tpu.matmul %138, %124, %cst_38 {dimension_numbers = #tpu.dot_dimension_numbers<[1], [0], [0], [1], [0, 0, 1, 1], [], []>} : vector<64x64xbf16>, vector<64x16xbf16>, vector<64x16xf32> -> vector<64x16xf32>
    %140 = vector.extract_strided_slice %12 {offsets = [64, 32], sizes = [64, 16], strides = [1, 1]} : vector<128x192xf32> to vector<64x16xf32>
    %141 = arith.truncf %140 : vector<64x16xf32> to vector<64x16xbf16>
    %142 = vector.extract_strided_slice %12 {offsets = [64, 96], sizes = [64, 16], strides = [1, 1]} : vector<128x192xf32> to vector<64x16xf32>
    %143 = arith.truncf %142 : vector<64x16xf32> to vector<64x16xbf16>
    %144 = vector.extract_strided_slice %12 {offsets = [64, 160], sizes = [64, 16], strides = [1, 1]} : vector<128x192xf32> to vector<64x16xf32>
    %145 = arith.truncf %144 : vector<64x16xf32> to vector<64x16xbf16>
    %cst_39 = arith.constant dense<0.000000e+00> : vector<64x64xf32>
    %146 = tpu.matmul %141, %143, %cst_39 {dimension_numbers = #tpu.dot_dimension_numbers<[1], [1], [0], [0], [0, 0, 1, 0], [], []>} : vector<64x16xbf16>, vector<64x16xbf16>, vector<64x64xf32> -> vector<64x64xf32>
    %cst_40 = arith.constant 2.500000e-01 : f32
    %147 = vector.broadcast %cst_40 : f32 to vector<64x64xf32>
    %148 = arith.mulf %146, %147 : vector<64x64xf32>
    %cst_41 = arith.constant dense<0xFF800000> : vector<64xf32>
    %149 = vector.multi_reduction <maximumf>, %148, %cst_41 [1] : vector<64x64xf32> to vector<64xf32>
    %150 = vector.shape_cast %149 : vector<64xf32> to vector<64x1xf32>
    %151 = vector.broadcast %150 : vector<64x1xf32> to vector<64x64xf32>
    %152 = arith.subf %148, %151 : vector<64x64xf32>
    %153 = math.exp %152 : vector<64x64xf32>
    %cst_42 = arith.constant dense<0.000000e+00> : vector<64xf32>
    %154 = vector.multi_reduction <add>, %153, %cst_42 [1] : vector<64x64xf32> to vector<64xf32>
    %155 = vector.shape_cast %154 : vector<64xf32> to vector<64x1xf32>
    %156 = tpu.reciprocal %155 {approx = true} : vector<64x1xf32> -> vector<64x1xf32>
    %157 = vector.broadcast %156 : vector<64x1xf32> to vector<64x64xf32>
    %158 = arith.mulf %153, %157 : vector<64x64xf32>
    %159 = arith.truncf %158 : vector<64x64xf32> to vector<64x64xbf16>
    %cst_43 = arith.constant dense<0.000000e+00> : vector<64x16xf32>
    %160 = tpu.matmul %159, %145, %cst_43 {dimension_numbers = #tpu.dot_dimension_numbers<[1], [0], [0], [1], [0, 0, 1, 1], [], []>} : vector<64x64xbf16>, vector<64x16xbf16>, vector<64x16xf32> -> vector<64x16xf32>
    %161 = vector.extract_strided_slice %12 {offsets = [64, 48], sizes = [64, 16], strides = [1, 1]} : vector<128x192xf32> to vector<64x16xf32>
    %162 = arith.truncf %161 : vector<64x16xf32> to vector<64x16xbf16>
    %163 = vector.extract_strided_slice %12 {offsets = [64, 112], sizes = [64, 16], strides = [1, 1]} : vector<128x192xf32> to vector<64x16xf32>
    %164 = arith.truncf %163 : vector<64x16xf32> to vector<64x16xbf16>
    %165 = vector.extract_strided_slice %12 {offsets = [64, 176], sizes = [64, 16], strides = [1, 1]} : vector<128x192xf32> to vector<64x16xf32>
    %166 = arith.truncf %165 : vector<64x16xf32> to vector<64x16xbf16>
    %cst_44 = arith.constant dense<0.000000e+00> : vector<64x64xf32>
    %167 = tpu.matmul %162, %164, %cst_44 {dimension_numbers = #tpu.dot_dimension_numbers<[1], [1], [0], [0], [0, 0, 1, 0], [], []>} : vector<64x16xbf16>, vector<64x16xbf16>, vector<64x64xf32> -> vector<64x64xf32>
    %cst_45 = arith.constant 2.500000e-01 : f32
    %168 = vector.broadcast %cst_45 : f32 to vector<64x64xf32>
    %169 = arith.mulf %167, %168 : vector<64x64xf32>
    %cst_46 = arith.constant dense<0xFF800000> : vector<64xf32>
    %170 = vector.multi_reduction <maximumf>, %169, %cst_46 [1] : vector<64x64xf32> to vector<64xf32>
    %171 = vector.shape_cast %170 : vector<64xf32> to vector<64x1xf32>
    %172 = vector.broadcast %171 : vector<64x1xf32> to vector<64x64xf32>
    %173 = arith.subf %169, %172 : vector<64x64xf32>
    %174 = math.exp %173 : vector<64x64xf32>
    %cst_47 = arith.constant dense<0.000000e+00> : vector<64xf32>
    %175 = vector.multi_reduction <add>, %174, %cst_47 [1] : vector<64x64xf32> to vector<64xf32>
    %176 = vector.shape_cast %175 : vector<64xf32> to vector<64x1xf32>
    %177 = tpu.reciprocal %176 {approx = true} : vector<64x1xf32> -> vector<64x1xf32>
    %178 = vector.broadcast %177 : vector<64x1xf32> to vector<64x64xf32>
    %179 = arith.mulf %174, %178 : vector<64x64xf32>
    %180 = arith.truncf %179 : vector<64x64xf32> to vector<64x64xbf16>
    %cst_48 = arith.constant dense<0.000000e+00> : vector<64x16xf32>
    %181 = tpu.matmul %180, %166, %cst_48 {dimension_numbers = #tpu.dot_dimension_numbers<[1], [0], [0], [1], [0, 0, 1, 1], [], []>} : vector<64x64xbf16>, vector<64x16xbf16>, vector<64x16xf32> -> vector<64x16xf32>
    %182 = tpu.concatenate %118, %139, %160, %181 in 1 : vector<64x16xf32>, vector<64x16xf32>, vector<64x16xf32>, vector<64x16xf32> -> vector<64x64xf32>
    %183 = tpu.concatenate %97, %182 in 0 : vector<64x64xf32>, vector<64x64xf32> -> vector<128x64xf32>
    %c0_49 = arith.constant 0 : index
    %c0_50 = arith.constant 0 : index
    %c0_51 = arith.constant 0 : index
    %184 = vector.load %arg7[%c0_49, %c0_50, %c0_51] : memref<1x8x64xf32, #tpu.memory_space<vmem>>, vector<1x1x64xf32>
    %185 = vector.shape_cast %184 : vector<1x1x64xf32> to vector<1x64xf32>
    %c0_52 = arith.constant 0 : index
    %c1 = arith.constant 1 : index
    %c0_53 = arith.constant 0 : index
    %186 = vector.load %arg7[%c0_52, %c1, %c0_53] : memref<1x8x64xf32, #tpu.memory_space<vmem>>, vector<1x1x64xf32>
    %187 = vector.shape_cast %186 : vector<1x1x64xf32> to vector<1x64xf32>
    %c0_54 = arith.constant 0 : index
    %c2 = arith.constant 2 : index
    %c0_55 = arith.constant 0 : index
    %188 = vector.load %arg7[%c0_54, %c2, %c0_55] : memref<1x8x64xf32, #tpu.memory_space<vmem>>, vector<1x1x64xf32>
    %189 = vector.shape_cast %188 : vector<1x1x64xf32> to vector<1x64xf32>
    %c0_56 = arith.constant 0 : index
    %c3 = arith.constant 3 : index
    %c0_57 = arith.constant 0 : index
    %190 = vector.load %arg7[%c0_56, %c3, %c0_57] : memref<1x8x64xf32, #tpu.memory_space<vmem>>, vector<1x1x64xf32>
    %191 = vector.shape_cast %190 : vector<1x1x64xf32> to vector<1x64xf32>
    %c0_58 = arith.constant 0 : index
    %c4 = arith.constant 4 : index
    %c0_59 = arith.constant 0 : index
    %192 = vector.load %arg7[%c0_58, %c4, %c0_59] : memref<1x8x64xf32, #tpu.memory_space<vmem>>, vector<1x1x64xf32>
    %193 = vector.shape_cast %192 : vector<1x1x64xf32> to vector<1x64xf32>
    %c0_60 = arith.constant 0 : index
    %c5 = arith.constant 5 : index
    %c0_61 = arith.constant 0 : index
    %194 = vector.load %arg7[%c0_60, %c5, %c0_61] : memref<1x8x64xf32, #tpu.memory_space<vmem>>, vector<1x1x64xf32>
    %195 = vector.shape_cast %194 : vector<1x1x64xf32> to vector<1x64xf32>
    %196 = arith.truncf %183 : vector<128x64xf32> to vector<128x64xbf16>
    %c0_62 = arith.constant 0 : index
    %c0_63 = arith.constant 0 : index
    %c0_64 = arith.constant 0 : index
    %197 = vector.load %arg6[%c0_62, %c0_63, %c0_64] : memref<1x64x64xbf16, #tpu.memory_space<vmem>>, vector<1x64x64xbf16>
    %198 = vector.shape_cast %197 : vector<1x64x64xbf16> to vector<64x64xbf16>
    %cst_65 = arith.constant dense<0.000000e+00> : vector<128x64xf32>
    %199 = tpu.matmul %196, %198, %cst_65 {dimension_numbers = #tpu.dot_dimension_numbers<[1], [0], [0], [1], [0, 0, 1, 1], [], []>} : vector<128x64xbf16>, vector<64x64xbf16>, vector<128x64xf32> -> vector<128x64xf32>
    %200 = vector.broadcast %185 : vector<1x64xf32> to vector<128x64xf32>
    %201 = arith.addf %199, %200 : vector<128x64xf32>
    %202 = arith.addf %4, %201 : vector<128x64xf32>
    %cst_66 = arith.constant dense<0.000000e+00> : vector<128xf32>
    %203 = vector.multi_reduction <add>, %202, %cst_66 [1] : vector<128x64xf32> to vector<128xf32>
    %204 = vector.shape_cast %203 : vector<128xf32> to vector<128x1xf32>
    %cst_67 = arith.constant 6.400000e+01 : f32
    %205 = vector.broadcast %cst_67 : f32 to vector<128x1xf32>
    %206 = arith.divf %204, %205 : vector<128x1xf32>
    %207 = vector.broadcast %206 : vector<128x1xf32> to vector<128x64xf32>
    %208 = arith.subf %202, %207 : vector<128x64xf32>
    %209 = arith.mulf %208, %208 : vector<128x64xf32>
    %cst_68 = arith.constant dense<0.000000e+00> : vector<128xf32>
    %210 = vector.multi_reduction <add>, %209, %cst_68 [1] : vector<128x64xf32> to vector<128xf32>
    %211 = vector.shape_cast %210 : vector<128xf32> to vector<128x1xf32>
    %cst_69 = arith.constant 6.400000e+01 : f32
    %212 = vector.broadcast %cst_69 : f32 to vector<128x1xf32>
    %213 = arith.divf %211, %212 : vector<128x1xf32>
    %214 = vector.broadcast %206 : vector<128x1xf32> to vector<128x64xf32>
    %215 = arith.subf %202, %214 : vector<128x64xf32>
    %cst_70 = arith.constant 9.99999974E-6 : f32
    %216 = vector.broadcast %cst_70 : f32 to vector<128x1xf32>
    %217 = arith.addf %213, %216 : vector<128x1xf32>
    %218 = math.rsqrt %217 : vector<128x1xf32>
    %219 = vector.broadcast %218 : vector<128x1xf32> to vector<128x64xf32>
    %220 = arith.mulf %215, %219 : vector<128x64xf32>
    %221 = vector.broadcast %189 : vector<1x64xf32> to vector<128x64xf32>
    %222 = arith.mulf %220, %221 : vector<128x64xf32>
    %223 = vector.broadcast %191 : vector<1x64xf32> to vector<128x64xf32>
    %224 = arith.addf %222, %223 : vector<128x64xf32>
    %225 = arith.truncf %224 : vector<128x64xf32> to vector<128x64xbf16>
    %cst_71 = arith.constant 0.000000e+00 : f32
    %226 = vector.broadcast %cst_71 : f32 to vector<128x64xf32>
    %c0_i32_72 = arith.constant 0 : i32
    %c4_i32 = arith.constant 4 : i32
    %227 = arith.addi %c0_i32_72, %c4_i32 : i32
    %c1_i32 = arith.constant 1 : i32
    %228 = scf.for %arg12 = %c0_i32_72 to %227 step %c1_i32 iter_args(%arg13 = %226) -> (vector<128x64xf32>)  : i32 {
      %c0_82 = arith.constant 0 : index
      %256 = arith.index_cast %arg12 : i32 to index
      %c0_83 = arith.constant 0 : index
      %c0_84 = arith.constant 0 : index
      %257 = vector.load %arg8[%c0_82, %256, %c0_83, %c0_84] : memref<1x4x64x512xbf16, #tpu.memory_space<vmem>>, vector<1x1x64x512xbf16>
      %258 = vector.shape_cast %257 : vector<1x1x64x512xbf16> to vector<64x512xbf16>
      %cst_85 = arith.constant dense<0.000000e+00> : vector<128x512xf32>
      %259 = tpu.matmul %225, %258, %cst_85 {dimension_numbers = #tpu.dot_dimension_numbers<[1], [0], [0], [1], [0, 0, 1, 1], [], []>} : vector<128x64xbf16>, vector<64x512xbf16>, vector<128x512xf32> -> vector<128x512xf32>
      %c0_86 = arith.constant 0 : index
      %260 = arith.index_cast %arg12 : i32 to index
      %c0_87 = arith.constant 0 : index
      %c0_88 = arith.constant 0 : index
      %261 = vector.load %arg9[%c0_86, %260, %c0_87, %c0_88] : memref<1x4x1x512xf32, #tpu.memory_space<vmem>>, vector<1x1x1x512xf32>
      %262 = vector.shape_cast %261 : vector<1x1x1x512xf32> to vector<1x512xf32>
      %263 = vector.broadcast %262 : vector<1x512xf32> to vector<128x512xf32>
      %264 = arith.addf %259, %263 : vector<128x512xf32>
      %cst_89 = arith.constant 5.000000e-01 : f32
      %265 = vector.broadcast %cst_89 : f32 to vector<128x512xf32>
      %266 = arith.mulf %265, %264 : vector<128x512xf32>
      %cst_90 = arith.constant 4.471500e-02 : f32
      %267 = vector.broadcast %cst_90 : f32 to vector<128x512xf32>
      %268 = arith.mulf %267, %264 : vector<128x512xf32>
      %269 = arith.mulf %268, %264 : vector<128x512xf32>
      %270 = arith.mulf %269, %264 : vector<128x512xf32>
      %271 = arith.addf %264, %270 : vector<128x512xf32>
      %cst_91 = arith.constant 0.797884583 : f32
      %272 = vector.broadcast %cst_91 : f32 to vector<128x512xf32>
      %273 = arith.mulf %272, %271 : vector<128x512xf32>
      %274 = math.tanh %273 : vector<128x512xf32>
      %cst_92 = arith.constant 1.000000e+00 : f32
      %275 = vector.broadcast %cst_92 : f32 to vector<128x512xf32>
      %276 = arith.addf %275, %274 : vector<128x512xf32>
      %277 = arith.mulf %266, %276 : vector<128x512xf32>
      %278 = arith.truncf %277 : vector<128x512xf32> to vector<128x512xbf16>
      %c0_93 = arith.constant 0 : index
      %279 = arith.index_cast %arg12 : i32 to index
      %c0_94 = arith.constant 0 : index
      %c0_95 = arith.constant 0 : index
      %280 = vector.load %arg10[%c0_93, %279, %c0_94, %c0_95] : memref<1x4x512x64xbf16, #tpu.memory_space<vmem>>, vector<1x1x512x64xbf16>
      %281 = vector.shape_cast %280 : vector<1x1x512x64xbf16> to vector<512x64xbf16>
      %cst_96 = arith.constant dense<0.000000e+00> : vector<128x64xf32>
      %282 = tpu.matmul %278, %281, %cst_96 {dimension_numbers = #tpu.dot_dimension_numbers<[1], [0], [0], [1], [0, 0, 1, 1], [], []>} : vector<128x512xbf16>, vector<512x64xbf16>, vector<128x64xf32> -> vector<128x64xf32>
      %283 = arith.addf %arg13, %282 : vector<128x64xf32>
      scf.yield %283 : vector<128x64xf32>
    }
    %c4_i32_73 = arith.constant 4 : i32
    %229 = arith.addf %224, %228 : vector<128x64xf32>
    %230 = vector.broadcast %187 : vector<1x64xf32> to vector<128x64xf32>
    %231 = arith.addf %229, %230 : vector<128x64xf32>
    %cst_74 = arith.constant dense<0.000000e+00> : vector<128xf32>
    %232 = vector.multi_reduction <add>, %231, %cst_74 [1] : vector<128x64xf32> to vector<128xf32>
    %233 = vector.shape_cast %232 : vector<128xf32> to vector<128x1xf32>
    %cst_75 = arith.constant 6.400000e+01 : f32
    %234 = vector.broadcast %cst_75 : f32 to vector<128x1xf32>
    %235 = arith.divf %233, %234 : vector<128x1xf32>
    %236 = vector.broadcast %235 : vector<128x1xf32> to vector<128x64xf32>
    %237 = arith.subf %231, %236 : vector<128x64xf32>
    %238 = arith.mulf %237, %237 : vector<128x64xf32>
    %cst_76 = arith.constant dense<0.000000e+00> : vector<128xf32>
    %239 = vector.multi_reduction <add>, %238, %cst_76 [1] : vector<128x64xf32> to vector<128xf32>
    %240 = vector.shape_cast %239 : vector<128xf32> to vector<128x1xf32>
    %cst_77 = arith.constant 6.400000e+01 : f32
    %241 = vector.broadcast %cst_77 : f32 to vector<128x1xf32>
    %242 = arith.divf %240, %241 : vector<128x1xf32>
    %243 = vector.broadcast %235 : vector<128x1xf32> to vector<128x64xf32>
    %244 = arith.subf %231, %243 : vector<128x64xf32>
    %cst_78 = arith.constant 9.99999974E-6 : f32
    %245 = vector.broadcast %cst_78 : f32 to vector<128x1xf32>
    %246 = arith.addf %242, %245 : vector<128x1xf32>
    %247 = math.rsqrt %246 : vector<128x1xf32>
    %248 = vector.broadcast %247 : vector<128x1xf32> to vector<128x64xf32>
    %249 = arith.mulf %244, %248 : vector<128x64xf32>
    %250 = vector.broadcast %193 : vector<1x64xf32> to vector<128x64xf32>
    %251 = arith.mulf %249, %250 : vector<128x64xf32>
    %252 = vector.broadcast %195 : vector<1x64xf32> to vector<128x64xf32>
    %253 = arith.addf %251, %252 : vector<128x64xf32>
    %254 = vector.shape_cast %253 : vector<128x64xf32> to vector<2x64x64xf32>
    %c0_79 = arith.constant 0 : index
    %c0_80 = arith.constant 0 : index
    %c0_81 = arith.constant 0 : index
    %255 = vector.load %arg11[%c0_79, %c0_80, %c0_81] : memref<2x64x64xf32, #tpu.memory_space<vmem>>, vector<2x64x64xf32>
    tpu.vector_store %arg11[%c0_79, %c0_80, %c0_81], %254 {strides = array<i32>} : memref<2x64x64xf32, #tpu.memory_space<vmem>>, vector<2x64x64xf32>,
    return
  }
  func.func @transform_0(%arg0: i32, %arg1: i32) -> (i32, i32, i32) {
    %c0_i32 = arith.constant 0 : i32
    %c0_i32_0 = arith.constant 0 : i32
    %c0_i32_1 = arith.constant 0 : i32
    return %arg0, %c0_i32, %c0_i32_0 : i32, i32, i32
  }
  func.func @transform_1(%arg0: i32, %arg1: i32) -> (i32, i32, i32) {
    %c0_i32 = arith.constant 0 : i32
    %c0_i32_0 = arith.constant 0 : i32
    %c0_i32_1 = arith.constant 0 : i32
    %c0_i32_2 = arith.constant 0 : i32
    return %c0_i32, %c0_i32_0, %c0_i32_1 : i32, i32, i32
  }
  func.func @transform_2(%arg0: i32, %arg1: i32) -> (i32, i32, i32) {
    %c0_i32 = arith.constant 0 : i32
    %c0_i32_0 = arith.constant 0 : i32
    %c0_i32_1 = arith.constant 0 : i32
    return %arg1, %c0_i32, %c0_i32_0 : i32, i32, i32
  }
  func.func @transform_3(%arg0: i32, %arg1: i32) -> (i32, i32, i32) {
    %c0_i32 = arith.constant 0 : i32
    %c0_i32_0 = arith.constant 0 : i32
    %c0_i32_1 = arith.constant 0 : i32
    return %arg1, %c0_i32, %c0_i32_0 : i32, i32, i32
  }
  func.func @transform_4(%arg0: i32, %arg1: i32) -> (i32, i32, i32) {
    %c0_i32 = arith.constant 0 : i32
    %c0_i32_0 = arith.constant 0 : i32
    %c0_i32_1 = arith.constant 0 : i32
    return %arg1, %c0_i32, %c0_i32_0 : i32, i32, i32
  }
  func.func @transform_5(%arg0: i32, %arg1: i32) -> (i32, i32, i32) {
    %c0_i32 = arith.constant 0 : i32
    %c0_i32_0 = arith.constant 0 : i32
    %c0_i32_1 = arith.constant 0 : i32
    return %arg1, %c0_i32, %c0_i32_0 : i32, i32, i32
  }
  func.func @transform_6(%arg0: i32, %arg1: i32) -> (i32, i32, i32, i32) {
    %c0_i32 = arith.constant 0 : i32
    %c0_i32_0 = arith.constant 0 : i32
    %c0_i32_1 = arith.constant 0 : i32
    %c0_i32_2 = arith.constant 0 : i32
    return %arg1, %c0_i32, %c0_i32_0, %c0_i32_1 : i32, i32, i32, i32
  }
  func.func @transform_7(%arg0: i32, %arg1: i32) -> (i32, i32, i32, i32) {
    %c0_i32 = arith.constant 0 : i32
    %c0_i32_0 = arith.constant 0 : i32
    %c0_i32_1 = arith.constant 0 : i32
    %c0_i32_2 = arith.constant 0 : i32
    return %arg1, %c0_i32, %c0_i32_0, %c0_i32_1 : i32, i32, i32, i32
  }
  func.func @transform_8(%arg0: i32, %arg1: i32) -> (i32, i32, i32, i32) {
    %c0_i32 = arith.constant 0 : i32
    %c0_i32_0 = arith.constant 0 : i32
    %c0_i32_1 = arith.constant 0 : i32
    %c0_i32_2 = arith.constant 0 : i32
    return %arg1, %c0_i32, %c0_i32_0, %c0_i32_1 : i32, i32, i32, i32
  }
  func.func @transform_9(%arg0: i32, %arg1: i32) -> (i32, i32, i32) {
    %c0_i32 = arith.constant 0 : i32
    %c0_i32_0 = arith.constant 0 : i32
    %c0_i32_1 = arith.constant 0 : i32
    return %arg0, %c0_i32, %c0_i32_0 : i32, i32, i32
  }
}

</mosaic_0001>

<llo_original>
// kernel: tpu_custom_call.1
$region0: #{tpu_custom_call.1}
  #allocation0 [shape = 'u32[]', space=smem, size = 0x4, offset = 0x4, fixed_abs, tag = 'smem constant byte address 0x4 - core index']
  #allocation1 [shape = 'u32[72,128]{1,0:T(1,128)}', space=vmem, size = 0x9000, scoped, tag = 'internal scratch']
  %s0 = inlined_call_operand.vmem [shape: f32[4,64,64], index: 0, kind: input, shape index: {}]
  %s1 = inlined_call_operand.vmem [shape: f32[1,64,64], index: 1, kind: input, shape index: {}]
  %s2 = inlined_call_operand.vmem [shape: bf16[2,64,192], index: 2, kind: input, shape index: {}]
  %s3 = inlined_call_operand.vmem [shape: f32[2,1,192], index: 3, kind: input, shape index: {}]
  %s4 = inlined_call_operand.vmem [shape: bf16[2,64,64], index: 4, kind: input, shape index: {}]
  %s5 = inlined_call_operand.vmem [shape: f32[2,8,64], index: 5, kind: input, shape index: {}]
  %s6 = inlined_call_operand.vmem [shape: bf16[2,4,64,512], index: 6, kind: input, shape index: {}]
  %s7 = inlined_call_operand.vmem [shape: f32[2,4,1,512], index: 7, kind: input, shape index: {}]
  %s8 = inlined_call_operand.vmem [shape: bf16[2,4,512,64], index: 8, kind: input, shape index: {}]
  %s9 = inlined_call_operand.hbm [shape: f32[4,64,64], index: 9, kind: output, shape index: {}]
  %s10 = sld [smem:[#allocation0]]
  $region80: #{tpu_custom_call.1} parent=0
    _
  %s12 = ssub.s32 1, %s10
  %s13 = scalar_select 0, %s12, %s10
  $region1: #{tpu_custom_call.1} parent=0
    #allocation2 [shape = 'u8[131072]{0}', space=vmem, size = 0x20000, scoped, tag = 'output window, operand 0']
    #allocation3 [shape = 's32[2]{0}', space=sflag, size = 0x8, scoped, tag = 'scoped memory for tpu_custom_call.1']
    %14 = vsyncpa [#allocation3], 0
    %s15 = scalar_lea.sflag [#allocation3], 1
    %16 = vsyncpa %s15, 0
    loop: start=0, step=1, limit=6
    $region2: #{tpu_custom_call.1} parent=1 // loop_pre_header
      _
    $region3: #{tpu_custom_call.1} parent=1 // loop_header
      %s18 = sphi 0, %s22
      %p19 = scmp.ge.s32.totalorder %s18, 6
      %s25 = sphi 0, %s37
      %s26 = sphi 0, %s33
      %s27 = sphi 0, %s25
      %s28 = sphi 0, %s26
      %s29 = sphi 0, %s27
      %s30 = sphi 0, %s28
      %s40 = sphi 0, %s42
      %s43 = sphi 0, %s40
      %s44 = sphi 0, %s43
      %s60 = sphi 0, %s44
      %s64 = sphi 0, %s64
      %s66 = sphi 0, %s64
      %s67 = sphi 0, %s66
      %s81 = sphi 0, %s67
      %s87 = sphi 0, %s89
      %s90 = sphi 0, %s87
      %s91 = sphi 0, %s90
      %s107 = sphi 0, %s91
      %s113 = sphi 0, %s115
      %s116 = sphi 0, %s113
      %s117 = sphi 0, %s116
      %s133 = sphi 0, %s117
      %s139 = sphi 0, %s141
      %s142 = sphi 0, %s139
      %s143 = sphi 0, %s142
      %s159 = sphi 0, %s143
      %s165 = sphi 0, %s167
      %s168 = sphi 0, %s165
      %s169 = sphi 0, %s168
      %s185 = sphi 0, %s169
      %s191 = sphi 0, %s193
      %s194 = sphi 0, %s191
      %s195 = sphi 0, %s194
      %s211 = sphi 0, %s195
      %s217 = sphi 0, %s219
      %s220 = sphi 0, %s217
      %s221 = sphi 0, %s220
      %s237 = sphi 0, %s221
      %s243 = sphi 0, %s245
      %s246 = sphi 0, %s243
      %s247 = sphi 0, %s246
      %s263 = sphi 0, %s247
      %s269 = sphi 0, %s271
      %s272 = sphi 0, %s269
      %s273 = sphi 0, %s272
      %s289 = sphi 0, %s273
    $region4: #{tpu_custom_call.1} parent=1 // loop_header_branch
      %21 = sbr.rel (%p19) target = $region8
    $region5: #{tpu_custom_call.1} parent=1 // loop_body
      %s23 = ssub.s32 %s18, 1
      %s24 = ssub.s32 %s18, 2
      %s31 = sadd.s32 1, %s26
      %p32 = scmp.ge.s32.totalorder %s31, 2
      %s33 = scalar_select %p32, 0, %s31
      %s34 = sadd.s32 1, %s25
      %s35 = scalar_select %p32, %s34, %s25
      %p36 = scmp.ge.s32.totalorder %s35, 2
      %s37 = scalar_select %p36, 0, %s35
      %s38 = ssub.s32 %s25, %s37
      %p39 = scmp.eq.s32.totalorder %s38, 0
      %s41 = sadd.s32 %s40, 1
      %s42 = scalar_select %p39, %s40, %s41
      %p45 = pneg %p39
      %p46 = scmp.eq.s32.totalorder %s18, 3
      %p47 = por %p45, %p46
      %p48 = scmp.ne.s32.totalorder %s40, %s43
      %p49 = scmp.eq.s32.totalorder %s18, 0
      %p50 = por %p48, %p49
      %p51 = scmp.ne.s32.totalorder %s40, %s43
      %p52 = scmp.eq.s32.totalorder %s23, 3
      %p53 = por %p51, %p52
      %p54 = scmp.ne.s32.totalorder %s43, %s44
      %p55 = scmp.eq.s32.totalorder %s23, 0
      %p56 = por %p54, %p55
      %p57 = scmp.ne.s32.totalorder %s43, %s44
      %p58 = scmp.eq.s32.totalorder %s24, 3
      %p59 = por %p57, %p58
      %p61 = scmp.ne.s32.totalorder %s44, %s60
      %p62 = scmp.eq.s32.totalorder %s24, 0
      %p63 = por %p61, %p62
      %s65 = sadd.s32 %s64, 1
      %p68 = scmp.eq.s32.totalorder %s18, 3
      %p69 = scmp.ne.s32.totalorder %s64, %s66
      %p70 = scmp.eq.s32.totalorder %s18, 0
      %p71 = por %p69, %p70
      %p72 = scmp.ne.s32.totalorder %s64, %s66
      %p73 = scmp.eq.s32.totalorder %s23, 3
      %p74 = por %p72, %p73
      %p75 = scmp.ne.s32.totalorder %s66, %s67
      %p76 = scmp.eq.s32.totalorder %s23, 0
      %p77 = por %p75, %p76
      %p78 = scmp.ne.s32.totalorder %s66, %s67
      %p79 = scmp.eq.s32.totalorder %s24, 3
      %p80 = por %p78, %p79
      %p82 = scmp.ne.s32.totalorder %s67, %s81
      %p83 = scmp.eq.s32.totalorder %s24, 0
      %p84 = por %p82, %p83
      %s85 = ssub.s32 %s26, %s33
      %p86 = scmp.eq.s32.totalorder %s85, 0
      %s88 = sadd.s32 %s87, 1
      %s89 = scalar_select %p86, %s87, %s88
      %p92 = pneg %p86
      %p93 = scmp.eq.s32.totalorder %s18, 3
      %p94 = por %p92, %p93
      %p95 = scmp.ne.s32.totalorder %s87, %s90
      %p96 = scmp.eq.s32.totalorder %s18, 0
      %p97 = por %p95, %p96
      %p98 = scmp.ne.s32.totalorder %s87, %s90
      %p99 = scmp.eq.s32.totalorder %s23, 3
      %p100 = por %p98, %p99
      %p101 = scmp.ne.s32.totalorder %s90, %s91
      %p102 = scmp.eq.s32.totalorder %s23, 0
      %p103 = por %p101, %p102
      %p104 = scmp.ne.s32.totalorder %s90, %s91
      %p105 = scmp.eq.s32.totalorder %s24, 3
      %p106 = por %p104, %p105
      %p108 = scmp.ne.s32.totalorder %s91, %s107
      %p109 = scmp.eq.s32.totalorder %s24, 0
      %p110 = por %p108, %p109
      %s111 = ssub.s32 %s26, %s33
      %p112 = scmp.eq.s32.totalorder %s111, 0
      %s114 = sadd.s32 %s113, 1
      %s115 = scalar_select %p112, %s113, %s114
      %p118 = pneg %p112
      %p119 = scmp.eq.s32.totalorder %s18, 3
      %p120 = por %p118, %p119
      %p121 = scmp.ne.s32.totalorder %s113, %s116
      %p122 = scmp.eq.s32.totalorder %s18, 0
      %p123 = por %p121, %p122
      %p124 = scmp.ne.s32.totalorder %s113, %s116
      %p125 = scmp.eq.s32.totalorder %s23, 3
      %p126 = por %p124, %p125
      %p127 = scmp.ne.s32.totalorder %s116, %s117
      %p128 = scmp.eq.s32.totalorder %s23, 0
      %p129 = por %p127, %p128
      %p130 = scmp.ne.s32.totalorder %s116, %s117
      %p131 = scmp.eq.s32.totalorder %s24, 3
      %p132 = por %p130, %p131
      %p134 = scmp.ne.s32.totalorder %s117, %s133
      %p135 = scmp.eq.s32.totalorder %s24, 0
      %p136 = por %p134, %p135
      %s137 = ssub.s32 %s26, %s33
      %p138 = scmp.eq.s32.totalorder %s137, 0
      %s140 = sadd.s32 %s139, 1
      %s141 = scalar_select %p138, %s139, %s140
      %p144 = pneg %p138
      %p145 = scmp.eq.s32.totalorder %s18, 3
      %p146 = por %p144, %p145
      %p147 = scmp.ne.s32.totalorder %s139, %s142
      %p148 = scmp.eq.s32.totalorder %s18, 0
      %p149 = por %p147, %p148
      %p150 = scmp.ne.s32.totalorder %s139, %s142
      %p151 = scmp.eq.s32.totalorder %s23, 3
      %p152 = por %p150, %p151
      %p153 = scmp.ne.s32.totalorder %s142, %s143
      %p154 = scmp.eq.s32.totalorder %s23, 0
      %p155 = por %p153, %p154
      %p156 = scmp.ne.s32.totalorder %s142, %s143
      %p157 = scmp.eq.s32.totalorder %s24, 3
      %p158 = por %p156, %p157
      %p160 = scmp.ne.s32.totalorder %s143, %s159
      %p161 = scmp.eq.s32.totalorder %s24, 0
      %p162 = por %p160, %p161
      %s163 = ssub.s32 %s26, %s33
      %p164 = scmp.eq.s32.totalorder %s163, 0
      %s166 = sadd.s32 %s165, 1
      %s167 = scalar_select %p164, %s165, %s166
      %p170 = pneg %p164
      %p171 = scmp.eq.s32.totalorder %s18, 3
      %p172 = por %p170, %p171
      %p173 = scmp.ne.s32.totalorder %s165, %s168
      %p174 = scmp.eq.s32.totalorder %s18, 0
      %p175 = por %p173, %p174
      %p176 = scmp.ne.s32.totalorder %s165, %s168
      %p177 = scmp.eq.s32.totalorder %s23, 3
      %p178 = por %p176, %p177
      %p179 = scmp.ne.s32.totalorder %s168, %s169
      %p180 = scmp.eq.s32.totalorder %s23, 0
      %p181 = por %p179, %p180
      %p182 = scmp.ne.s32.totalorder %s168, %s169
      %p183 = scmp.eq.s32.totalorder %s24, 3
      %p184 = por %p182, %p183
      %p186 = scmp.ne.s32.totalorder %s169, %s185
      %p187 = scmp.eq.s32.totalorder %s24, 0
      %p188 = por %p186, %p187
      %s189 = ssub.s32 %s26, %s33
      %p190 = scmp.eq.s32.totalorder %s189, 0
      %s192 = sadd.s32 %s191, 1
      %s193 = scalar_select %p190, %s191, %s192
      %p196 = pneg %p190
      %p197 = scmp.eq.s32.totalorder %s18, 3
      %p198 = por %p196, %p197
      %p199 = scmp.ne.s32.totalorder %s191, %s194
      %p200 = scmp.eq.s32.totalorder %s18, 0
      %p201 = por %p199, %p200
      %p202 = scmp.ne.s32.totalorder %s191, %s194
      %p203 = scmp.eq.s32.totalorder %s23, 3
      %p204 = por %p202, %p203
      %p205 = scmp.ne.s32.totalorder %s194, %s195
      %p206 = scmp.eq.s32.totalorder %s23, 0
      %p207 = por %p205, %p206
      %p208 = scmp.ne.s32.totalorder %s194, %s195
      %p209 = scmp.eq.s32.totalorder %s24, 3
      %p210 = por %p208, %p209
      %p212 = scmp.ne.s32.totalorder %s195, %s211
      %p213 = scmp.eq.s32.totalorder %s24, 0
      %p214 = por %p212, %p213
      %s215 = ssub.s32 %s26, %s33
      %p216 = scmp.eq.s32.totalorder %s215, 0
      %s218 = sadd.s32 %s217, 1
      %s219 = scalar_select %p216, %s217, %s218
      %p222 = pneg %p216
      %p223 = scmp.eq.s32.totalorder %s18, 3
      %p224 = por %p222, %p223
      %p225 = scmp.ne.s32.totalorder %s217, %s220
      %p226 = scmp.eq.s32.totalorder %s18, 0
      %p227 = por %p225, %p226
      %p228 = scmp.ne.s32.totalorder %s217, %s220
      %p229 = scmp.eq.s32.totalorder %s23, 3
      %p230 = por %p228, %p229
      %p231 = scmp.ne.s32.totalorder %s220, %s221
      %p232 = scmp.eq.s32.totalorder %s23, 0
      %p233 = por %p231, %p232
      %p234 = scmp.ne.s32.totalorder %s220, %s221
      %p235 = scmp.eq.s32.totalorder %s24, 3
      %p236 = por %p234, %p235
      %p238 = scmp.ne.s32.totalorder %s221, %s237
      %p239 = scmp.eq.s32.totalorder %s24, 0
      %p240 = por %p238, %p239
      %s241 = ssub.s32 %s26, %s33
      %p242 = scmp.eq.s32.totalorder %s241, 0
      %s244 = sadd.s32 %s243, 1
      %s245 = scalar_select %p242, %s243, %s244
      %p248 = pneg %p242
      %p249 = scmp.eq.s32.totalorder %s18, 3
      %p250 = por %p248, %p249
      %p251 = scmp.ne.s32.totalorder %s243, %s246
      %p252 = scmp.eq.s32.totalorder %s18, 0
      %p253 = por %p251, %p252
      %p254 = scmp.ne.s32.totalorder %s243, %s246
      %p255 = scmp.eq.s32.totalorder %s23, 3
      %p256 = por %p254, %p255
      %p257 = scmp.ne.s32.totalorder %s246, %s247
      %p258 = scmp.eq.s32.totalorder %s23, 0
      %p259 = por %p257, %p258
      %p260 = scmp.ne.s32.totalorder %s246, %s247
      %p261 = scmp.eq.s32.totalorder %s24, 3
      %p262 = por %p260, %p261
      %p264 = scmp.ne.s32.totalorder %s247, %s263
      %p265 = scmp.eq.s32.totalorder %s24, 0
      %p266 = por %p264, %p265
      %s267 = ssub.s32 %s25, %s37
      %p268 = scmp.eq.s32.totalorder %s267, 0
      %s270 = sadd.s32 %s269, 1
      %s271 = scalar_select %p268, %s269, %s270
      %p274 = pneg %p268
      %p275 = scmp.eq.s32.totalorder %s18, 3
      %p276 = por %p274, %p275
      %p277 = scmp.ne.s32.totalorder %s269, %s272
      %p278 = scmp.eq.s32.totalorder %s18, 0
      %p279 = por %p277, %p278
      %p280 = scmp.ne.s32.totalorder %s269, %s272
      %p281 = scmp.eq.s32.totalorder %s23, 3
      %p282 = por %p280, %p281
      %p283 = scmp.ne.s32.totalorder %s272, %s273
      %p284 = scmp.eq.s32.totalorder %s23, 0
      %p285 = por %p283, %p284
      %p286 = scmp.ne.s32.totalorder %s272, %s273
      %p287 = scmp.eq.s32.totalorder %s24, 3
      %p288 = por %p286, %p287
      %p290 = scmp.ne.s32.totalorder %s273, %s289
      %p291 = scmp.eq.s32.totalorder %s24, 0
      %p292 = por %p290, %p291
      %p293 = scmp.le.s32.totalorder 1, %s18
      %p294 = scmp.lt.s32.totalorder %s18, 5
      %p295 = pnand %p293, %p294
      %p296 = pneg %p295
      // Predicated region
      $region9: #{tpu_custom_call.1} parent=5 // pred_check
        _
      $region10: #{tpu_custom_call.1} parent=5 // pred_check_branch
        %298 = sbr.rel (%p295) target = $region12
      $region11: #{tpu_custom_call.1} parent=5 // pred_region
        %s299 = ssub.s32 %s18, 1
        // Predicated region
        $region13: #{tpu_custom_call.1} parent=11 // pred_check
          %p300 = pneg %p77
        $region14: #{tpu_custom_call.1} parent=11 // pred_check_branch
          %302 = sbr.rel (%p300) target = $region16
        $region15: #{tpu_custom_call.1} parent=11 // pred_region
          _
        $region16: #{tpu_custom_call.1} parent=11 // pred_fallthru
          _
      $region12: #{tpu_custom_call.1} parent=5 // pred_fallthru
        _
      %p303 = scmp.lt.s32.totalorder %s18, 4
      // Predicated region
      $region17: #{tpu_custom_call.1} parent=5 // pred_check
        %p304 = pneg %p303
      $region18: #{tpu_custom_call.1} parent=5 // pred_check_branch
        %306 = sbr.rel (%p304) target = $region20
      $region19: #{tpu_custom_call.1} parent=5 // pred_region
        // Predicated region
        $region21: #{tpu_custom_call.1} parent=19 // pred_check
          %p307 = pneg %p50
        $region22: #{tpu_custom_call.1} parent=19 // pred_check_branch
          %309 = sbr.rel (%p307) target = $region24
        $region23: #{tpu_custom_call.1} parent=19 // pred_region
          %s310 = smul.u32 2, %s25
          %p311 = scmp.lt.s32.totalorder %s310, 3
          %s312 = scalar_select %p311, %s310, 3
          %s313 = smul.addr %s312, 8
          %s314 = smul.addr %s313, 8
          %s315 = scalar_lea.vmem %s0, %s314
          %s316 = smul.u32 2, %s25
        $region24: #{tpu_custom_call.1} parent=19 // pred_fallthru
          _
        // Predicated region
        $region25: #{tpu_custom_call.1} parent=19 // pred_check
          %p317 = pneg %p97
        $region26: #{tpu_custom_call.1} parent=19 // pred_check_branch
          %319 = sbr.rel (%p317) target = $region28
        $region27: #{tpu_custom_call.1} parent=19 // pred_region
          %p320 = scmp.lt.s32.totalorder %s26, 1
          %s321 = scalar_select %p320, %s26, 1
          %s322 = smul.addr %s321, 16
          %s323 = smul.addr %s322, 4
          %s324 = scalar_lea.vmem %s2, %s323
        $region28: #{tpu_custom_call.1} parent=19 // pred_fallthru
          _
        // Predicated region
        $region29: #{tpu_custom_call.1} parent=19 // pred_check
          %p325 = pneg %p123
        $region30: #{tpu_custom_call.1} parent=19 // pred_check_branch
          %327 = sbr.rel (%p325) target = $region32
        $region31: #{tpu_custom_call.1} parent=19 // pred_region
          %p328 = scmp.lt.s32.totalorder %s26, 1
          %s329 = scalar_select %p328, %s26, 1
          %s330 = smul.addr %s329, 2
          %s331 = scalar_lea.vmem %s3, %s330
        $region32: #{tpu_custom_call.1} parent=19 // pred_fallthru
          _
        // Predicated region
        $region33: #{tpu_custom_call.1} parent=19 // pred_check
          %p332 = pneg %p149
        $region34: #{tpu_custom_call.1} parent=19 // pred_check_branch
          %334 = sbr.rel (%p332) target = $region36
        $region35: #{tpu_custom_call.1} parent=19 // pred_region
          %p335 = scmp.lt.s32.totalorder %s26, 1
          %s336 = scalar_select %p335, %s26, 1
          %s337 = smul.addr %s336, 8
          %s338 = smul.addr %s337, 4
          %s339 = scalar_lea.vmem %s4, %s338
        $region36: #{tpu_custom_call.1} parent=19 // pred_fallthru
          _
        // Predicated region
        $region37: #{tpu_custom_call.1} parent=19 // pred_check
          %p340 = pneg %p175
        $region38: #{tpu_custom_call.1} parent=19 // pred_check_branch
          %342 = sbr.rel (%p340) target = $region40
        $region39: #{tpu_custom_call.1} parent=19 // pred_region
          %p343 = scmp.lt.s32.totalorder %s26, 1
          %s344 = scalar_select %p343, %s26, 1
          %s345 = smul.addr %s344, 8
          %s346 = scalar_lea.vmem %s5, %s345
        $region40: #{tpu_custom_call.1} parent=19 // pred_fallthru
          _
        // Predicated region
        $region41: #{tpu_custom_call.1} parent=19 // pred_check
          %p347 = pneg %p201
        $region42: #{tpu_custom_call.1} parent=19 // pred_check_branch
          %349 = sbr.rel (%p347) target = $region44
        $region43: #{tpu_custom_call.1} parent=19 // pred_region
          %p350 = scmp.lt.s32.totalorder %s26, 1
          %s351 = scalar_select %p350, %s26, 1
          %s352 = smul.addr %s351, 128
          %s353 = smul.addr %s352, 4
          %s354 = scalar_lea.vmem %s6, %s353
        $region44: #{tpu_custom_call.1} parent=19 // pred_fallthru
          _
        // Predicated region
        $region45: #{tpu_custom_call.1} parent=19 // pred_check
          %p355 = pneg %p227
        $region46: #{tpu_custom_call.1} parent=19 // pred_check_branch
          %357 = sbr.rel (%p355) target = $region48
        $region47: #{tpu_custom_call.1} parent=19 // pred_region
          %p358 = scmp.lt.s32.totalorder %s26, 1
          %s359 = scalar_select %p358, %s26, 1
          %s360 = smul.addr %s359, 16
          %s361 = scalar_lea.vmem %s7, %s360
        $region48: #{tpu_custom_call.1} parent=19 // pred_fallthru
          _
        // Predicated region
        $region49: #{tpu_custom_call.1} parent=19 // pred_check
          %p362 = pneg %p253
        $region50: #{tpu_custom_call.1} parent=19 // pred_check_branch
          %364 = sbr.rel (%p362) target = $region52
        $region51: #{tpu_custom_call.1} parent=19 // pred_region
          %p365 = scmp.lt.s32.totalorder %s26, 1
          %s366 = scalar_select %p365, %s26, 1
          %s367 = smul.addr %s366, 256
          %s368 = smul.addr %s367, 4
          %s369 = scalar_lea.vmem %s8, %s368
        $region52: #{tpu_custom_call.1} parent=19 // pred_fallthru
          _
      $region20: #{tpu_custom_call.1} parent=5 // pred_fallthru
        _
      %p370 = scmp.le.s32.totalorder 1, %s18
      %p371 = scmp.lt.s32.totalorder %s18, 5
      %p372 = pnand %p370, %p371
      %p373 = pneg %p372
      // Predicated region
      $region53: #{tpu_custom_call.1} parent=5 // pred_check
        _
      $region54: #{tpu_custom_call.1} parent=5 // pred_check_branch
        %375 = sbr.rel (%p372) target = $region56
      $region55: #{tpu_custom_call.1} parent=5 // pred_region
        %s376 = ssub.s32 %s18, 1
        %s377 = smul.u32 2, %s27
        %p378 = scmp.lt.s32.totalorder %s377, 3
        %s379 = scalar_select %p378, %s377, 3
        %s380 = smul.addr %s379, 8
        %s381 = smul.addr %s380, 8
        %s382 = scalar_lea.vmem %s0, %s381
        %p383 = pneg %p56
        %p384 = pneg %p53
        %p385 = pneg %p77
        %p386 = pneg %p74
        %p387 = scmp.lt.s32.totalorder %s28, 1
        %s388 = scalar_select %p387, %s28, 1
        %s389 = smul.addr %s388, 16
        %s390 = smul.addr %s389, 4
        %s391 = scalar_lea.vmem %s2, %s390
        %p392 = pneg %p103
        %p393 = pneg %p100
        %p394 = scmp.lt.s32.totalorder %s28, 1
        %s395 = scalar_select %p394, %s28, 1
        %s396 = smul.addr %s395, 2
        %s397 = scalar_lea.vmem %s3, %s396
        %p398 = pneg %p129
        %p399 = pneg %p126
        %p400 = scmp.lt.s32.totalorder %s28, 1
        %s401 = scalar_select %p400, %s28, 1
        %s402 = smul.addr %s401, 8
        %s403 = smul.addr %s402, 4
        %s404 = scalar_lea.vmem %s4, %s403
        %p405 = pneg %p155
        %p406 = pneg %p152
        %p407 = scmp.lt.s32.totalorder %s28, 1
        %s408 = scalar_select %p407, %s28, 1
        %s409 = smul.addr %s408, 8
        %s410 = scalar_lea.vmem %s5, %s409
        %p411 = pneg %p181
        %p412 = pneg %p178
        %p413 = scmp.lt.s32.totalorder %s28, 1
        %s414 = scalar_select %p413, %s28, 1
        %s415 = smul.addr %s414, 128
        %s416 = smul.addr %s415, 4
        %s417 = scalar_lea.vmem %s6, %s416
        %p418 = pneg %p207
        %p419 = pneg %p204
        %p420 = scmp.lt.s32.totalorder %s28, 1
        %s421 = scalar_select %p420, %s28, 1
        %s422 = smul.addr %s421, 16
        %s423 = scalar_lea.vmem %s7, %s422
        %p424 = pneg %p233
        %p425 = pneg %p230
        %p426 = scmp.lt.s32.totalorder %s28, 1
        %s427 = scalar_select %p426, %s28, 1
        %s428 = smul.addr %s427, 256
        %s429 = smul.addr %s428, 4
        %s430 = scalar_lea.vmem %s8, %s429
        %p431 = pneg %p259
        %p432 = pneg %p256
        %p433 = pneg %p285
        %p434 = pneg %p282
        %s435 = sand.u32 %s272, 1
        %s436 = scalar_lea.sflag [#allocation3], %s435
        %s437 = sand.u32 %s272, 1
        %s438 = smul.addr %s437, 128
        %s439 = scalar_lea.vmem [#allocation2], %s438
        %s440 = smul.u32 2, %s27
        %p441 = scmp.lt.s32.totalorder %s440, 3
        %s442 = scalar_select %p441, %s440, 3
        %s443 = smul.addr %s442, 8
        %s444 = smul.addr %s443, 8
        %s445 = scalar_lea.vmem %s0, %s444
        %s446 = smul.u32 2, %s27
        %p447 = scmp.lt.s32.totalorder %s28, 1
        %s448 = scalar_select %p447, %s28, 1
        %s449 = smul.addr %s448, 16
        %s450 = smul.addr %s449, 4
        %s451 = scalar_lea.vmem %s2, %s450
        %p452 = scmp.lt.s32.totalorder %s28, 1
        %s453 = scalar_select %p452, %s28, 1
        %s454 = smul.addr %s453, 2
        %s455 = scalar_lea.vmem %s3, %s454
        %p456 = scmp.lt.s32.totalorder %s28, 1
        %s457 = scalar_select %p456, %s28, 1
        %s458 = smul.addr %s457, 8
        %s459 = smul.addr %s458, 4
        %s460 = scalar_lea.vmem %s4, %s459
        %p461 = scmp.lt.s32.totalorder %s28, 1
        %s462 = scalar_select %p461, %s28, 1
        %s463 = smul.addr %s462, 8
        %s464 = scalar_lea.vmem %s5, %s463
        %p465 = scmp.lt.s32.totalorder %s28, 1
        %s466 = scalar_select %p465, %s28, 1
        %s467 = smul.addr %s466, 128
        %s468 = smul.addr %s467, 4
        %s469 = scalar_lea.vmem %s6, %s468
        %p470 = scmp.lt.s32.totalorder %s28, 1
        %s471 = scalar_select %p470, %s28, 1
        %s472 = smul.addr %s471, 16
        %s473 = scalar_lea.vmem %s7, %s472
        %p474 = scmp.lt.s32.totalorder %s28, 1
        %s475 = scalar_select %p474, %s28, 1
        %s476 = smul.addr %s475, 256
        %s477 = smul.addr %s476, 4
        %s478 = scalar_lea.vmem %s8, %s477
        %s479 = smul.u32 2, %s27
        %p481 = scmp.eq.s32.totalorder %s28, 0
        // Predicated region
        $region57: #{tpu_custom_call.1} parent=55 // pred_check
          %p482 = pneg %p481
        $region58: #{tpu_custom_call.1} parent=55 // pred_check_branch
          %484 = sbr.rel (%p482) target = $region60
        $region59: #{tpu_custom_call.1} parent=55 // pred_region
          %v485 = vld [vmem:[%s445] sm:$0xff]
          %v486 = vld [vmem:[%s445 + $0x8] sm:$0xff]
          %v487 = vld [vmem:[%s445 + $0x10] sm:$0xff]
          %v488 = vld [vmem:[%s445 + $0x18] sm:$0xff]
          %v489 = vld [vmem:[%s445 + $0x20] sm:$0xff]
          %v490 = vld [vmem:[%s445 + $0x28] sm:$0xff]
          %v491 = vld [vmem:[%s445 + $0x30] sm:$0xff]
          %v492 = vld [vmem:[%s445 + $0x38] sm:$0xff]
          %v493 = vld [vmem:[%s445 + $0x40] sm:$0xff]
          %v494 = vld [vmem:[%s445 + $0x48] sm:$0xff]
          %v495 = vld [vmem:[%s445 + $0x50] sm:$0xff]
          %v496 = vld [vmem:[%s445 + $0x58] sm:$0xff]
          %v497 = vld [vmem:[%s445 + $0x60] sm:$0xff]
          %v498 = vld [vmem:[%s445 + $0x68] sm:$0xff]
          %v499 = vld [vmem:[%s445 + $0x70] sm:$0xff]
          %v500 = vld [vmem:[%s445 + $0x78] sm:$0xff]
          %v501 = vld [vmem:[%s1] sm:$0xff]
          %v502 = vld [vmem:[%s1 + $0x8] sm:$0xff]
          %v503 = vld [vmem:[%s1 + $0x10] sm:$0xff]
          %v504 = vld [vmem:[%s1 + $0x18] sm:$0xff]
          %v505 = vld [vmem:[%s1 + $0x20] sm:$0xff]
          %v506 = vld [vmem:[%s1 + $0x28] sm:$0xff]
          %v507 = vld [vmem:[%s1 + $0x30] sm:$0xff]
          %v508 = vld [vmem:[%s1 + $0x38] sm:$0xff]
          %v509 = vadd.f32 %v485, %v501
          %v510 = vadd.f32 %v486, %v502
          %v511 = vadd.f32 %v487, %v503
          %v512 = vadd.f32 %v488, %v504
          %v513 = vadd.f32 %v489, %v505
          %v514 = vadd.f32 %v490, %v506
          %v515 = vadd.f32 %v491, %v507
          %v516 = vadd.f32 %v492, %v508
          %v517 = vadd.f32 %v493, %v501
          %v518 = vadd.f32 %v494, %v502
          %v519 = vadd.f32 %v495, %v503
          %v520 = vadd.f32 %v496, %v504
          %v521 = vadd.f32 %v497, %v505
          %v522 = vadd.f32 %v498, %v506
          %v523 = vadd.f32 %v499, %v507
          %v524 = vadd.f32 %v500, %v508
          %vm525 = vcmask 523264
          %526 = vst.msk [vmem:[%s439] sm:$0xff] %vm525, %v509
          %527 = vst.msk [vmem:[%s439 + $0x8] sm:$0xff] %vm525, %v510
          %528 = vst.msk [vmem:[%s439 + $0x10] sm:$0xff] %vm525, %v511
          %529 = vst.msk [vmem:[%s439 + $0x18] sm:$0xff] %vm525, %v512
          %530 = vst.msk [vmem:[%s439 + $0x20] sm:$0xff] %vm525, %v513
          %531 = vst.msk [vmem:[%s439 + $0x28] sm:$0xff] %vm525, %v514
          %532 = vst.msk [vmem:[%s439 + $0x30] sm:$0xff] %vm525, %v515
          %533 = vst.msk [vmem:[%s439 + $0x38] sm:$0xff] %vm525, %v516
          %534 = vst.msk [vmem:[%s439 + $0x40] sm:$0xff] %vm525, %v517
          %535 = vst.msk [vmem:[%s439 + $0x48] sm:$0xff] %vm525, %v518
          %536 = vst.msk [vmem:[%s439 + $0x50] sm:$0xff] %vm525, %v519
          %537 = vst.msk [vmem:[%s439 + $0x58] sm:$0xff] %vm525, %v520
          %538 = vst.msk [vmem:[%s439 + $0x60] sm:$0xff] %vm525, %v521
          %539 = vst.msk [vmem:[%s439 + $0x68] sm:$0xff] %vm525, %v522
          %540 = vst.msk [vmem:[%s439 + $0x70] sm:$0xff] %vm525, %v523
          %541 = vst.msk [vmem:[%s439 + $0x78] sm:$0xff] %vm525, %v524
        $region60: #{tpu_custom_call.1} parent=55 // pred_fallthru
          _
        %v542 = vld [vmem:[%s439] sm:$0xff]
        %v543 = vld [vmem:[%s439 + $0x8] sm:$0xff]
        %v544 = vld [vmem:[%s439 + $0x10] sm:$0xff]
        %v545 = vld [vmem:[%s439 + $0x18] sm:$0xff]
        %v546 = vld [vmem:[%s439 + $0x20] sm:$0xff]
        %v547 = vld [vmem:[%s439 + $0x28] sm:$0xff]
        %v548 = vld [vmem:[%s439 + $0x30] sm:$0xff]
        %v549 = vld [vmem:[%s439 + $0x38] sm:$0xff]
        %v550 = vld [vmem:[%s439 + $0x40] sm:$0xff]
        %v551 = vld [vmem:[%s439 + $0x48] sm:$0xff]
        %v552 = vld [vmem:[%s439 + $0x50] sm:$0xff]
        %v553 = vld [vmem:[%s439 + $0x58] sm:$0xff]
        %v554 = vld [vmem:[%s439 + $0x60] sm:$0xff]
        %v555 = vld [vmem:[%s439 + $0x68] sm:$0xff]
        %v556 = vld [vmem:[%s439 + $0x70] sm:$0xff]
        %v557 = vld [vmem:[%s439 + $0x78] sm:$0xff]
        %v558 = vpack.c.bf16 %v543, %v542
        %v559 = vpack.c.bf16 %v545, %v544
        %v560 = vpack.c.bf16 %v547, %v546
        %v561 = vpack.c.bf16 %v549, %v548
        %v562 = vpack.c.bf16 %v551, %v550
        %v563 = vpack.c.bf16 %v553, %v552
        %v564 = vpack.c.bf16 %v555, %v554
        %v565 = vpack.c.bf16 %v557, %v556
        %v566 = vld [vmem:[%s451] sm:$0xff]
        %v567 = vld [vmem:[%s451 + $0x8] sm:$0xff]
        %v568 = vld [vmem:[%s451 + $0x10] sm:$0xff]
        %v569 = vld [vmem:[%s451 + $0x18] sm:$0xff]
        %v570 = vld [vmem:[%s451 + $0x20] sm:$0xff]
        %v571 = vld [vmem:[%s451 + $0x28] sm:$0xff]
        %v572 = vld [vmem:[%s451 + $0x30] sm:$0xff]
        %v573 = vld [vmem:[%s451 + $0x38] sm:$0xff]
        %v574 = vld [vmem:[%s455] sm:$0x3]
        %v576 = vperm.slane %v574, 0
        %v577 = vperm.slane %v574, 1
        %v588 = vunpack.c.l.b16 %v566
        %v589 = vunpack.c.h.b16 %v566
        %v590 = vunpack.c.l.b16 %v567
        %v591 = vunpack.c.h.b16 %v567
        %v592 = vunpack.c.l.b16 %v568
        %v593 = vunpack.c.h.b16 %v568
        %v594 = vunpack.c.l.b16 %v569
        %v595 = vunpack.c.h.b16 %v569
        %v596 = vunpack.c.l.b16 %v570
        %v597 = vunpack.c.h.b16 %v570
        %v598 = vunpack.c.l.b16 %v571
        %v599 = vunpack.c.h.b16 %v571
        %v600 = vunpack.c.l.b16 %v572
        %v601 = vunpack.c.h.b16 %v572
        %v602 = vunpack.c.l.b16 %v573
        %v603 = vunpack.c.h.b16 %v573
        %v604 = vpack.c.b16 %v590, %v588
        %v605 = vpack.c.b16 %v591, %v589
        %v606 = vpack.c.b16 %v594, %v592
        %v607 = vpack.c.b16 %v595, %v593
        %v608 = vpack.c.b16 %v598, %v596
        %v609 = vpack.c.b16 %v599, %v597
        %v610 = vpack.c.b16 %v602, %v600
        %v611 = vpack.c.b16 %v603, %v601
        %vm620 = vcmask 523264
        %v622 = vsel %vm620, %v558, 0
        %v625 = vsel %vm620, %v559, 0
        %v628 = vsel %vm620, %v560, 0
        %v631 = vsel %vm620, %v561, 0
        %v634 = vsel %vm620, %v562, 0
        %v637 = vsel %vm620, %v563, 0
        %v640 = vsel %vm620, %v564, 0
        %v643 = vsel %vm620, %v565, 0
        %645 = vmatpush.bf16.msra.mxu0 0
        %646 = vmatpush.bf16.msra.mxu0 0
        %647 = vmatpush.bf16.msra.mxu0 0
        %648 = vmatpush.bf16.msra.mxu0 0
        %649 = vmatpush.bf16.msra.mxu0 %v610
        %650 = vmatpush.bf16.msra.mxu0 %v608
        %651 = vmatpush.bf16.msra.mxu0 %v606
        %652 = vmatpush.bf16.msra.mxu0 %v604
        %653 = vmatmul.bf16.gmra.mxu0 %v622
        %v654 = vpop.f32.mrf.mxu0
        %v655 = vadd.f32 %v576, %v654
        %v656 = vpop.f32.mrf.mxu0
        %v657 = vadd.f32 %v576, %v656
        %658 = vmatmul.bf16.gmra.mxu0 %v625
        %v659 = vpop.f32.mrf.mxu0
        %v660 = vadd.f32 %v576, %v659
        %v661 = vpop.f32.mrf.mxu0
        %v662 = vadd.f32 %v576, %v661
        %663 = vmatmul.bf16.gmra.mxu0 %v628
        %v664 = vpop.f32.mrf.mxu0
        %v665 = vadd.f32 %v576, %v664
        %v666 = vpop.f32.mrf.mxu0
        %v667 = vadd.f32 %v576, %v666
        %668 = vmatmul.bf16.gmra.mxu0 %v631
        %v669 = vpop.f32.mrf.mxu0
        %v670 = vadd.f32 %v576, %v669
        %v671 = vpop.f32.mrf.mxu0
        %v672 = vadd.f32 %v576, %v671
        %673 = vmatmul.bf16.gmra.mxu0 %v634
        %v674 = vpop.f32.mrf.mxu0
        %v675 = vadd.f32 %v576, %v674
        %v676 = vpop.f32.mrf.mxu0
        %v677 = vadd.f32 %v576, %v676
        %678 = vmatmul.bf16.gmra.mxu0 %v637
        %v679 = vpop.f32.mrf.mxu0
        %v680 = vadd.f32 %v576, %v679
        %v681 = vpop.f32.mrf.mxu0
        %v682 = vadd.f32 %v576, %v681
        %683 = vmatmul.bf16.gmra.mxu0 %v640
        %v684 = vpop.f32.mrf.mxu0
        %v685 = vadd.f32 %v576, %v684
        %v686 = vpop.f32.mrf.mxu0
        %v687 = vadd.f32 %v576, %v686
        %688 = vmatmul.bf16.gmra.mxu0 %v643
        %v689 = vpop.f32.mrf.mxu0
        %v690 = vadd.f32 %v576, %v689
        %v691 = vpop.f32.mrf.mxu0
        %v692 = vadd.f32 %v576, %v691
        %693 = vdwg.mxu0
        %694 = vmatpush.bf16.msra.mxu0 0
        %695 = vmatpush.bf16.msra.mxu0 0
        %696 = vmatpush.bf16.msra.mxu0 0
        %697 = vmatpush.bf16.msra.mxu0 0
        %698 = vmatpush.bf16.msra.mxu0 %v611
        %699 = vmatpush.bf16.msra.mxu0 %v609
        %700 = vmatpush.bf16.msra.mxu0 %v607
        %701 = vmatpush.bf16.msra.mxu0 %v605
        %702 = vmatmul.bf16.gmra.mxu0 %v622
        %v703 = vpop.f32.mrf.mxu0
        %v704 = vadd.f32 %v577, %v703
        %v705 = vpop.f32.mrf.mxu0
        %v706 = vadd.f32 %v577, %v705
        %707 = vmatmul.bf16.gmra.mxu0 %v625
        %v708 = vpop.f32.mrf.mxu0
        %v709 = vadd.f32 %v577, %v708
        %v710 = vpop.f32.mrf.mxu0
        %v711 = vadd.f32 %v577, %v710
        %712 = vmatmul.bf16.gmra.mxu0 %v628
        %v713 = vpop.f32.mrf.mxu0
        %v714 = vadd.f32 %v577, %v713
        %v715 = vpop.f32.mrf.mxu0
        %v716 = vadd.f32 %v577, %v715
        %717 = vmatmul.bf16.gmra.mxu0 %v631
        %v718 = vpop.f32.mrf.mxu0
        %v719 = vadd.f32 %v577, %v718
        %v720 = vpop.f32.mrf.mxu0
        %v721 = vadd.f32 %v577, %v720
        %722 = vmatmul.bf16.gmra.mxu0 %v634
        %v723 = vpop.f32.mrf.mxu0
        %v724 = vadd.f32 %v577, %v723
        %v725 = vpop.f32.mrf.mxu0
        %v726 = vadd.f32 %v577, %v725
        %727 = vmatmul.bf16.gmra.mxu0 %v637
        %v728 = vpop.f32.mrf.mxu0
        %v729 = vadd.f32 %v577, %v728
        %v730 = vpop.f32.mrf.mxu0
        %v731 = vadd.f32 %v577, %v730
        %732 = vmatmul.bf16.gmra.mxu0 %v640
        %v733 = vpop.f32.mrf.mxu0
        %v734 = vadd.f32 %v577, %v733
        %v735 = vpop.f32.mrf.mxu0
        %v736 = vadd.f32 %v577, %v735
        %737 = vmatmul.bf16.gmra.mxu0 %v643
        %v738 = vpop.f32.mrf.mxu0
        %v739 = vadd.f32 %v577, %v738
        %v740 = vpop.f32.mrf.mxu0
        %v741 = vadd.f32 %v577, %v740
        %742 = vdwg.mxu0
        %v743 = vpack.c.bf16 %v657, %v655
        %v744 = vpack.c.bf16 %v662, %v660
        %v745 = vpack.c.bf16 %v667, %v665
        %v746 = vpack.c.bf16 %v672, %v670
        %v747 = vpack.c.bf16 %v706, %v704
        %v748 = vpack.c.bf16 %v711, %v709
        %v749 = vpack.c.bf16 %v716, %v714
        %v750 = vpack.c.bf16 %v721, %v719
        %755 = vrot.lane.b32.xlu0 %v743, 64
        %v756 = vpop.permute.xlu0 %755
        %757 = vrot.lane.b32.xlu0 %v744, 64
        %v758 = vpop.permute.xlu0 %757
        %759 = vrot.lane.b32.xlu0 %v745, 64
        %v760 = vpop.permute.xlu0 %759
        %761 = vrot.lane.b32.xlu0 %v746, 64
        %v762 = vpop.permute.xlu0 %761
        %vm763 = vcmask 130048
        %v765 = vsel %vm763, %v743, 0
        %v768 = vsel %vm763, %v744, 0
        %v771 = vsel %vm763, %v745, 0
        %v774 = vsel %vm763, %v746, 0
        %v777 = vsel %vm763, %v756, 0
        %v780 = vsel %vm763, %v758, 0
        %v783 = vsel %vm763, %v760, 0
        %v786 = vsel %vm763, %v762, 0
        %788 = vmatpush.bf16.xpose.msra.mxu0 0
        %789 = vmatpush.bf16.xpose.msra.mxu0 0
        %790 = vmatpush.bf16.xpose.msra.mxu0 0
        %791 = vmatpush.bf16.xpose.msra.mxu0 0
        %792 = vmatpush.bf16.xpose.msra.mxu0 %v786
        %793 = vmatpush.bf16.xpose.msra.mxu0 %v783
        %794 = vmatpush.bf16.xpose.msra.mxu0 %v780
        %795 = vmatpush.bf16.xpose.msra.mxu0 %v777
        %796 = vmatmul.bf16.gmra.mxu0 %v765
        %v797 = vpop.f32.mrf.mxu0
        %v798 = vadd.f32 0.0, %v797
        %v799 = vpop.f32.mrf.mxu0
        %v800 = vadd.f32 0.0, %v799
        %801 = vmatmul.bf16.gmra.mxu0 %v768
        %v802 = vpop.f32.mrf.mxu0
        %v803 = vadd.f32 0.0, %v802
        %v804 = vpop.f32.mrf.mxu0
        %v805 = vadd.f32 0.0, %v804
        %806 = vmatmul.bf16.gmra.mxu0 %v771
        %v807 = vpop.f32.mrf.mxu0
        %v808 = vadd.f32 0.0, %v807
        %v809 = vpop.f32.mrf.mxu0
        %v810 = vadd.f32 0.0, %v809
        %811 = vmatmul.bf16.gmra.mxu0 %v774
        %v812 = vpop.f32.mrf.mxu0
        %v813 = vadd.f32 0.0, %v812
        %v814 = vpop.f32.mrf.mxu0
        %v815 = vadd.f32 0.0, %v814
        %816 = vdwg.mxu0
        %v817 = vmul.f32 %v798, 0.25
        %v818 = vmul.f32 %v800, 0.25
        %v819 = vmul.f32 %v803, 0.25
        %v820 = vmul.f32 %v805, 0.25
        %v821 = vmul.f32 %v808, 0.25
        %v822 = vmul.f32 %v810, 0.25
        %v823 = vmul.f32 %v813, 0.25
        %v824 = vmul.f32 %v815, 0.25
        %v825 = vsel %vm620, %v817, -inf
        %826 = vmax.xlane.f32.xlu0 %v825
        %v827 = vpop.xlane.xlu0 %826
        %v828 = vsel %vm620, %v818, -inf
        %829 = vmax.xlane.f32.xlu0 %v828
        %v830 = vpop.xlane.xlu0 %829
        %v831 = vsel %vm620, %v819, -inf
        %832 = vmax.xlane.f32.xlu0 %v831
        %v833 = vpop.xlane.xlu0 %832
        %v834 = vsel %vm620, %v820, -inf
        %835 = vmax.xlane.f32.xlu0 %v834
        %v836 = vpop.xlane.xlu0 %835
        %v837 = vsel %vm620, %v821, -inf
        %838 = vmax.xlane.f32.xlu0 %v837
        %v839 = vpop.xlane.xlu0 %838
        %v840 = vsel %vm620, %v822, -inf
        %841 = vmax.xlane.f32.xlu0 %v840
        %v842 = vpop.xlane.xlu0 %841
        %v843 = vsel %vm620, %v823, -inf
        %844 = vmax.xlane.f32.xlu0 %v843
        %v845 = vpop.xlane.xlu0 %844
        %v846 = vsel %vm620, %v824, -inf
        %847 = vmax.xlane.f32.xlu0 %v846
        %v848 = vpop.xlane.xlu0 %847
        %v849 = vsub.f32 %v817, %v827
        %v850 = vsub.f32 %v818, %v830
        %v851 = vsub.f32 %v819, %v833
        %v852 = vsub.f32 %v820, %v836
        %v853 = vsub.f32 %v821, %v839
        %v854 = vsub.f32 %v822, %v842
        %v855 = vsub.f32 %v823, %v845
        %v856 = vsub.f32 %v824, %v848
        %v857 = vmul.f32 %v849, 1.442695
        %v858 = vpow.pop %v857
        %v859 = vmul.f32 %v850, 1.442695
        %v860 = vpow.pop %v859
        %v861 = vmul.f32 %v851, 1.442695
        %v862 = vpow.pop %v861
        %v863 = vmul.f32 %v852, 1.442695
        %v864 = vpow.pop %v863
        %v865 = vmul.f32 %v853, 1.442695
        %v866 = vpow.pop %v865
        %v867 = vmul.f32 %v854, 1.442695
        %v868 = vpow.pop %v867
        %v869 = vmul.f32 %v855, 1.442695
        %v870 = vpow.pop %v869
        %v871 = vmul.f32 %v856, 1.442695
        %v872 = vpow.pop %v871
        %v873 = vsel %vm620, %v858, 0.0
        %874 = vadd.xlane.f32.xlu0 %v873
        %v875 = vpop.xlane.xlu0 %874
        %v876 = vsel %vm620, %v860, 0.0
        %877 = vadd.xlane.f32.xlu0 %v876
        %v878 = vpop.xlane.xlu0 %877
        %v879 = vsel %vm620, %v862, 0.0
        %880 = vadd.xlane.f32.xlu0 %v879
        %v881 = vpop.xlane.xlu0 %880
        %v882 = vsel %vm620, %v864, 0.0
        %883 = vadd.xlane.f32.xlu0 %v882
        %v884 = vpop.xlane.xlu0 %883
        %v885 = vsel %vm620, %v866, 0.0
        %886 = vadd.xlane.f32.xlu0 %v885
        %v887 = vpop.xlane.xlu0 %886
        %v888 = vsel %vm620, %v868, 0.0
        %889 = vadd.xlane.f32.xlu0 %v888
        %v890 = vpop.xlane.xlu0 %889
        %v891 = vsel %vm620, %v870, 0.0
        %892 = vadd.xlane.f32.xlu0 %v891
        %v893 = vpop.xlane.xlu0 %892
        %v894 = vsel %vm620, %v872, 0.0
        %895 = vadd.xlane.f32.xlu0 %v894
        %v896 = vpop.xlane.xlu0 %895
        %v897 = vrcp.pop %v875
        %v898 = vrcp.pop %v878
        %v899 = vrcp.pop %v881
        %v900 = vrcp.pop %v884
        %v901 = vrcp.pop %v887
        %v902 = vrcp.pop %v890
        %v903 = vrcp.pop %v893
        %v904 = vrcp.pop %v896
        %v905 = vmul.f32 %v858, %v897
        %v906 = vmul.f32 %v860, %v898
        %v907 = vmul.f32 %v862, %v899
        %v908 = vmul.f32 %v864, %v900
        %v909 = vmul.f32 %v866, %v901
        %v910 = vmul.f32 %v868, %v902
        %v911 = vmul.f32 %v870, %v903
        %v912 = vmul.f32 %v872, %v904
        %v913 = vpack.c.bf16 %v906, %v905
        %v914 = vpack.c.bf16 %v908, %v907
        %v915 = vpack.c.bf16 %v910, %v909
        %v916 = vpack.c.bf16 %v912, %v911
        %v918 = vsel %vm620, %v913, 0
        %v921 = vsel %vm620, %v914, 0
        %v924 = vsel %vm620, %v915, 0
        %v927 = vsel %vm620, %v916, 0
        %929 = vmatpush.bf16.msra.mxu0 0
        %930 = vmatpush.bf16.msra.mxu0 0
        %931 = vmatpush.bf16.msra.mxu0 0
        %932 = vmatpush.bf16.msra.mxu0 0
        %933 = vmatpush.bf16.msra.mxu0 %v750
        %934 = vmatpush.bf16.msra.mxu0 %v749
        %935 = vmatpush.bf16.msra.mxu0 %v748
        %936 = vmatpush.bf16.msra.mxu0 %v747
        %937 = vmatmul.bf16.gmra.mxu0 %v918
        %v938 = vpop.f32.mrf.mxu0
        %v939 = vadd.f32 0.0, %v938
        %v940 = vpop.f32.mrf.mxu0
        %v941 = vadd.f32 0.0, %v940
        %942 = vmatmul.bf16.gmra.mxu0 %v921
        %v943 = vpop.f32.mrf.mxu0
        %v944 = vadd.f32 0.0, %v943
        %v945 = vpop.f32.mrf.mxu0
        %v946 = vadd.f32 0.0, %v945
        %947 = vmatmul.bf16.gmra.mxu0 %v924
        %v948 = vpop.f32.mrf.mxu0
        %v949 = vadd.f32 0.0, %v948
        %v950 = vpop.f32.mrf.mxu0
        %v951 = vadd.f32 0.0, %v950
        %952 = vmatmul.bf16.gmra.mxu0 %v927
        %v953 = vpop.f32.mrf.mxu0
        %v954 = vadd.f32 0.0, %v953
        %v955 = vpop.f32.mrf.mxu0
        %v956 = vadd.f32 0.0, %v955
        %957 = vdwg.mxu0
        %958 = vrot.lane.b32.xlu0 %v743, 112
        %v959 = vpop.permute.xlu0 %958
        %960 = vrot.lane.b32.xlu0 %v744, 112
        %v961 = vpop.permute.xlu0 %960
        %962 = vrot.lane.b32.xlu0 %v745, 112
        %v963 = vpop.permute.xlu0 %962
        %964 = vrot.lane.b32.xlu0 %v746, 112
        %v965 = vpop.permute.xlu0 %964
        %966 = vrot.lane.b32.xlu0 %v743, 48
        %v967 = vpop.permute.xlu0 %966
        %968 = vrot.lane.b32.xlu0 %v744, 48
        %v969 = vpop.permute.xlu0 %968
        %970 = vrot.lane.b32.xlu0 %v745, 48
        %v971 = vpop.permute.xlu0 %970
        %972 = vrot.lane.b32.xlu0 %v746, 48
        %v973 = vpop.permute.xlu0 %972
        %v975 = vsel %vm763, %v959, 0
        %v978 = vsel %vm763, %v961, 0
        %v981 = vsel %vm763, %v963, 0
        %v984 = vsel %vm763, %v965, 0
        %v987 = vsel %vm763, %v967, 0
        %v990 = vsel %vm763, %v969, 0
        %v993 = vsel %vm763, %v971, 0
        %v996 = vsel %vm763, %v973, 0
        %998 = vmatpush.bf16.xpose.msra.mxu0 0
        %999 = vmatpush.bf16.xpose.msra.mxu0 0
        %1000 = vmatpush.bf16.xpose.msra.mxu0 0
        %1001 = vmatpush.bf16.xpose.msra.mxu0 0
        %1002 = vmatpush.bf16.xpose.msra.mxu0 %v996
        %1003 = vmatpush.bf16.xpose.msra.mxu0 %v993
        %1004 = vmatpush.bf16.xpose.msra.mxu0 %v990
        %1005 = vmatpush.bf16.xpose.msra.mxu0 %v987
        %1006 = vmatmul.bf16.gmra.mxu0 %v975
        %v1007 = vpop.f32.mrf.mxu0
        %v1008 = vadd.f32 0.0, %v1007
        %v1009 = vpop.f32.mrf.mxu0
        %v1010 = vadd.f32 0.0, %v1009
        %1011 = vmatmul.bf16.gmra.mxu0 %v978
        %v1012 = vpop.f32.mrf.mxu0
        %v1013 = vadd.f32 0.0, %v1012
        %v1014 = vpop.f32.mrf.mxu0
        %v1015 = vadd.f32 0.0, %v1014
        %1016 = vmatmul.bf16.gmra.mxu0 %v981
        %v1017 = vpop.f32.mrf.mxu0
        %v1018 = vadd.f32 0.0, %v1017
        %v1019 = vpop.f32.mrf.mxu0
        %v1020 = vadd.f32 0.0, %v1019
        %1021 = vmatmul.bf16.gmra.mxu0 %v984
        %v1022 = vpop.f32.mrf.mxu0
        %v1023 = vadd.f32 0.0, %v1022
        %v1024 = vpop.f32.mrf.mxu0
        %v1025 = vadd.f32 0.0, %v1024
        %1026 = vdwg.mxu0
        %v1027 = vmul.f32 %v1008, 0.25
        %v1028 = vmul.f32 %v1010, 0.25
        %v1029 = vmul.f32 %v1013, 0.25
        %v1030 = vmul.f32 %v1015, 0.25
        %v1031 = vmul.f32 %v1018, 0.25
        %v1032 = vmul.f32 %v1020, 0.25
        %v1033 = vmul.f32 %v1023, 0.25
        %v1034 = vmul.f32 %v1025, 0.25
        %v1035 = vsel %vm620, %v1027, -inf
        %1036 = vmax.xlane.f32.xlu0 %v1035
        %v1037 = vpop.xlane.xlu0 %1036
        %v1038 = vsel %vm620, %v1028, -inf
        %1039 = vmax.xlane.f32.xlu0 %v1038
        %v1040 = vpop.xlane.xlu0 %1039
        %v1041 = vsel %vm620, %v1029, -inf
        %1042 = vmax.xlane.f32.xlu0 %v1041
        %v1043 = vpop.xlane.xlu0 %1042
        %v1044 = vsel %vm620, %v1030, -inf
        %1045 = vmax.xlane.f32.xlu0 %v1044
        %v1046 = vpop.xlane.xlu0 %1045
        %v1047 = vsel %vm620, %v1031, -inf
        %1048 = vmax.xlane.f32.xlu0 %v1047
        %v1049 = vpop.xlane.xlu0 %1048
        %v1050 = vsel %vm620, %v1032, -inf
        %1051 = vmax.xlane.f32.xlu0 %v1050
        %v1052 = vpop.xlane.xlu0 %1051
        %v1053 = vsel %vm620, %v1033, -inf
        %1054 = vmax.xlane.f32.xlu0 %v1053
        %v1055 = vpop.xlane.xlu0 %1054
        %v1056 = vsel %vm620, %v1034, -inf
        %1057 = vmax.xlane.f32.xlu0 %v1056
        %v1058 = vpop.xlane.xlu0 %1057
        %v1059 = vsub.f32 %v1027, %v1037
        %v1060 = vsub.f32 %v1028, %v1040
        %v1061 = vsub.f32 %v1029, %v1043
        %v1062 = vsub.f32 %v1030, %v1046
        %v1063 = vsub.f32 %v1031, %v1049
        %v1064 = vsub.f32 %v1032, %v1052
        %v1065 = vsub.f32 %v1033, %v1055
        %v1066 = vsub.f32 %v1034, %v1058
        %v1067 = vmul.f32 %v1059, 1.442695
        %v1068 = vpow.pop %v1067
        %v1069 = vmul.f32 %v1060, 1.442695
        %v1070 = vpow.pop %v1069
        %v1071 = vmul.f32 %v1061, 1.442695
        %v1072 = vpow.pop %v1071
        %v1073 = vmul.f32 %v1062, 1.442695
        %v1074 = vpow.pop %v1073
        %v1075 = vmul.f32 %v1063, 1.442695
        %v1076 = vpow.pop %v1075
        %v1077 = vmul.f32 %v1064, 1.442695
        %v1078 = vpow.pop %v1077
        %v1079 = vmul.f32 %v1065, 1.442695
        %v1080 = vpow.pop %v1079
        %v1081 = vmul.f32 %v1066, 1.442695
        %v1082 = vpow.pop %v1081
        %v1083 = vsel %vm620, %v1068, 0.0
        %1084 = vadd.xlane.f32.xlu0 %v1083
        %v1085 = vpop.xlane.xlu0 %1084
        %v1086 = vsel %vm620, %v1070, 0.0
        %1087 = vadd.xlane.f32.xlu0 %v1086
        %v1088 = vpop.xlane.xlu0 %1087
        %v1089 = vsel %vm620, %v1072, 0.0
        %1090 = vadd.xlane.f32.xlu0 %v1089
        %v1091 = vpop.xlane.xlu0 %1090
        %v1092 = vsel %vm620, %v1074, 0.0
        %1093 = vadd.xlane.f32.xlu0 %v1092
        %v1094 = vpop.xlane.xlu0 %1093
        %v1095 = vsel %vm620, %v1076, 0.0
        %1096 = vadd.xlane.f32.xlu0 %v1095
        %v1097 = vpop.xlane.xlu0 %1096
        %v1098 = vsel %vm620, %v1078, 0.0
        %1099 = vadd.xlane.f32.xlu0 %v1098
        %v1100 = vpop.xlane.xlu0 %1099
        %v1101 = vsel %vm620, %v1080, 0.0
        %1102 = vadd.xlane.f32.xlu0 %v1101
        %v1103 = vpop.xlane.xlu0 %1102
        %v1104 = vsel %vm620, %v1082, 0.0
        %1105 = vadd.xlane.f32.xlu0 %v1104
        %v1106 = vpop.xlane.xlu0 %1105
        %v1107 = vrcp.pop %v1085
        %v1108 = vrcp.pop %v1088
        %v1109 = vrcp.pop %v1091
        %v1110 = vrcp.pop %v1094
        %v1111 = vrcp.pop %v1097
        %v1112 = vrcp.pop %v1100
        %v1113 = vrcp.pop %v1103
        %v1114 = vrcp.pop %v1106
        %v1115 = vmul.f32 %v1068, %v1107
        %v1116 = vmul.f32 %v1070, %v1108
        %v1117 = vmul.f32 %v1072, %v1109
        %v1118 = vmul.f32 %v1074, %v1110
        %v1119 = vmul.f32 %v1076, %v1111
        %v1120 = vmul.f32 %v1078, %v1112
        %v1121 = vmul.f32 %v1080, %v1113
        %v1122 = vmul.f32 %v1082, %v1114
        %v1123 = vpack.c.bf16 %v1116, %v1115
        %v1124 = vpack.c.bf16 %v1118, %v1117
        %v1125 = vpack.c.bf16 %v1120, %v1119
        %v1126 = vpack.c.bf16 %v1122, %v1121
        %1131 = vrot.lane.b32.xlu0 %v747, 112
        %v1132 = vpop.permute.xlu0 %1131
        %1133 = vrot.lane.b32.xlu0 %v748, 112
        %v1134 = vpop.permute.xlu0 %1133
        %1135 = vrot.lane.b32.xlu0 %v749, 112
        %v1136 = vpop.permute.xlu0 %1135
        %1137 = vrot.lane.b32.xlu0 %v750, 112
        %v1138 = vpop.permute.xlu0 %1137
        %v1144 = vsel %vm620, %v1123, 0
        %v1147 = vsel %vm620, %v1124, 0
        %v1150 = vsel %vm620, %v1125, 0
        %v1153 = vsel %vm620, %v1126, 0
        %1155 = vmatpush.bf16.msra.mxu0 0
        %1156 = vmatpush.bf16.msra.mxu0 0
        %1157 = vmatpush.bf16.msra.mxu0 0
        %1158 = vmatpush.bf16.msra.mxu0 0
        %1159 = vmatpush.bf16.msra.mxu0 %v1138
        %1160 = vmatpush.bf16.msra.mxu0 %v1136
        %1161 = vmatpush.bf16.msra.mxu0 %v1134
        %1162 = vmatpush.bf16.msra.mxu0 %v1132
        %1163 = vmatmul.bf16.gmra.mxu0 %v1144
        %v1164 = vpop.f32.mrf.mxu0
        %v1165 = vadd.f32 0.0, %v1164
        %v1166 = vpop.f32.mrf.mxu0
        %v1167 = vadd.f32 0.0, %v1166
        %1168 = vmatmul.bf16.gmra.mxu0 %v1147
        %v1169 = vpop.f32.mrf.mxu0
        %v1170 = vadd.f32 0.0, %v1169
        %v1171 = vpop.f32.mrf.mxu0
        %v1172 = vadd.f32 0.0, %v1171
        %1173 = vmatmul.bf16.gmra.mxu0 %v1150
        %v1174 = vpop.f32.mrf.mxu0
        %v1175 = vadd.f32 0.0, %v1174
        %v1176 = vpop.f32.mrf.mxu0
        %v1177 = vadd.f32 0.0, %v1176
        %1178 = vmatmul.bf16.gmra.mxu0 %v1153
        %v1179 = vpop.f32.mrf.mxu0
        %v1180 = vadd.f32 0.0, %v1179
        %v1181 = vpop.f32.mrf.mxu0
        %v1182 = vadd.f32 0.0, %v1181
        %1183 = vdwg.mxu0
        %1184 = vrot.lane.b32.xlu0 %v743, 96
        %v1185 = vpop.permute.xlu0 %1184
        %1186 = vrot.lane.b32.xlu0 %v744, 96
        %v1187 = vpop.permute.xlu0 %1186
        %1188 = vrot.lane.b32.xlu0 %v745, 96
        %v1189 = vpop.permute.xlu0 %1188
        %1190 = vrot.lane.b32.xlu0 %v746, 96
        %v1191 = vpop.permute.xlu0 %1190
        %1192 = vrot.lane.b32.xlu0 %v743, 32
        %v1193 = vpop.permute.xlu0 %1192
        %1194 = vrot.lane.b32.xlu0 %v744, 32
        %v1195 = vpop.permute.xlu0 %1194
        %1196 = vrot.lane.b32.xlu0 %v745, 32
        %v1197 = vpop.permute.xlu0 %1196
        %1198 = vrot.lane.b32.xlu0 %v746, 32
        %v1199 = vpop.permute.xlu0 %1198
        %v1201 = vsel %vm763, %v1185, 0
        %v1204 = vsel %vm763, %v1187, 0
        %v1207 = vsel %vm763, %v1189, 0
        %v1210 = vsel %vm763, %v1191, 0
        %v1213 = vsel %vm763, %v1193, 0
        %v1216 = vsel %vm763, %v1195, 0
        %v1219 = vsel %vm763, %v1197, 0
        %v1222 = vsel %vm763, %v1199, 0
        %1224 = vmatpush.bf16.xpose.msra.mxu0 0
        %1225 = vmatpush.bf16.xpose.msra.mxu0 0
        %1226 = vmatpush.bf16.xpose.msra.mxu0 0
        %1227 = vmatpush.bf16.xpose.msra.mxu0 0
        %1228 = vmatpush.bf16.xpose.msra.mxu0 %v1222
        %1229 = vmatpush.bf16.xpose.msra.mxu0 %v1219
        %1230 = vmatpush.bf16.xpose.msra.mxu0 %v1216
        %1231 = vmatpush.bf16.xpose.msra.mxu0 %v1213
        %1232 = vmatmul.bf16.gmra.mxu0 %v1201
        %v1233 = vpop.f32.mrf.mxu0
        %v1234 = vadd.f32 0.0, %v1233
        %v1235 = vpop.f32.mrf.mxu0
        %v1236 = vadd.f32 0.0, %v1235
        %1237 = vmatmul.bf16.gmra.mxu0 %v1204
        %v1238 = vpop.f32.mrf.mxu0
        %v1239 = vadd.f32 0.0, %v1238
        %v1240 = vpop.f32.mrf.mxu0
        %v1241 = vadd.f32 0.0, %v1240
        %1242 = vmatmul.bf16.gmra.mxu0 %v1207
        %v1243 = vpop.f32.mrf.mxu0
        %v1244 = vadd.f32 0.0, %v1243
        %v1245 = vpop.f32.mrf.mxu0
        %v1246 = vadd.f32 0.0, %v1245
        %1247 = vmatmul.bf16.gmra.mxu0 %v1210
        %v1248 = vpop.f32.mrf.mxu0
        %v1249 = vadd.f32 0.0, %v1248
        %v1250 = vpop.f32.mrf.mxu0
        %v1251 = vadd.f32 0.0, %v1250
        %1252 = vdwg.mxu0
        %v1253 = vmul.f32 %v1234, 0.25
        %v1254 = vmul.f32 %v1236, 0.25
        %v1255 = vmul.f32 %v1239, 0.25
        %v1256 = vmul.f32 %v1241, 0.25
        %v1257 = vmul.f32 %v1244, 0.25
        %v1258 = vmul.f32 %v1246, 0.25
        %v1259 = vmul.f32 %v1249, 0.25
        %v1260 = vmul.f32 %v1251, 0.25
        %v1261 = vsel %vm620, %v1253, -inf
        %1262 = vmax.xlane.f32.xlu0 %v1261
        %v1263 = vpop.xlane.xlu0 %1262
        %v1264 = vsel %vm620, %v1254, -inf
        %1265 = vmax.xlane.f32.xlu0 %v1264
        %v1266 = vpop.xlane.xlu0 %1265
        %v1267 = vsel %vm620, %v1255, -inf
        %1268 = vmax.xlane.f32.xlu0 %v1267
        %v1269 = vpop.xlane.xlu0 %1268
        %v1270 = vsel %vm620, %v1256, -inf
        %1271 = vmax.xlane.f32.xlu0 %v1270
        %v1272 = vpop.xlane.xlu0 %1271
        %v1273 = vsel %vm620, %v1257, -inf
        %1274 = vmax.xlane.f32.xlu0 %v1273
        %v1275 = vpop.xlane.xlu0 %1274
        %v1276 = vsel %vm620, %v1258, -inf
        %1277 = vmax.xlane.f32.xlu0 %v1276
        %v1278 = vpop.xlane.xlu0 %1277
        %v1279 = vsel %vm620, %v1259, -inf
        %1280 = vmax.xlane.f32.xlu0 %v1279
        %v1281 = vpop.xlane.xlu0 %1280
        %v1282 = vsel %vm620, %v1260, -inf
        %1283 = vmax.xlane.f32.xlu0 %v1282
        %v1284 = vpop.xlane.xlu0 %1283
        %v1285 = vsub.f32 %v1253, %v1263
        %v1286 = vsub.f32 %v1254, %v1266
        %v1287 = vsub.f32 %v1255, %v1269
        %v1288 = vsub.f32 %v1256, %v1272
        %v1289 = vsub.f32 %v1257, %v1275
        %v1290 = vsub.f32 %v1258, %v1278
        %v1291 = vsub.f32 %v1259, %v1281
        %v1292 = vsub.f32 %v1260, %v1284
        %v1293 = vmul.f32 %v1285, 1.442695
        %v1294 = vpow.pop %v1293
        %v1295 = vmul.f32 %v1286, 1.442695
        %v1296 = vpow.pop %v1295
        %v1297 = vmul.f32 %v1287, 1.442695
        %v1298 = vpow.pop %v1297
        %v1299 = vmul.f32 %v1288, 1.442695
        %v1300 = vpow.pop %v1299
        %v1301 = vmul.f32 %v1289, 1.442695
        %v1302 = vpow.pop %v1301
        %v1303 = vmul.f32 %v1290, 1.442695
        %v1304 = vpow.pop %v1303
        %v1305 = vmul.f32 %v1291, 1.442695
        %v1306 = vpow.pop %v1305
        %v1307 = vmul.f32 %v1292, 1.442695
        %v1308 = vpow.pop %v1307
        %v1309 = vsel %vm620, %v1294, 0.0
        %1310 = vadd.xlane.f32.xlu0 %v1309
        %v1311 = vpop.xlane.xlu0 %1310
        %v1312 = vsel %vm620, %v1296, 0.0
        %1313 = vadd.xlane.f32.xlu0 %v1312
        %v1314 = vpop.xlane.xlu0 %1313
        %v1315 = vsel %vm620, %v1298, 0.0
        %1316 = vadd.xlane.f32.xlu0 %v1315
        %v1317 = vpop.xlane.xlu0 %1316
        %v1318 = vsel %vm620, %v1300, 0.0
        %1319 = vadd.xlane.f32.xlu0 %v1318
        %v1320 = vpop.xlane.xlu0 %1319
        %v1321 = vsel %vm620, %v1302, 0.0
        %1322 = vadd.xlane.f32.xlu0 %v1321
        %v1323 = vpop.xlane.xlu0 %1322
        %v1324 = vsel %vm620, %v1304, 0.0
        %1325 = vadd.xlane.f32.xlu0 %v1324
        %v1326 = vpop.xlane.xlu0 %1325
        %v1327 = vsel %vm620, %v1306, 0.0
        %1328 = vadd.xlane.f32.xlu0 %v1327
        %v1329 = vpop.xlane.xlu0 %1328
        %v1330 = vsel %vm620, %v1308, 0.0
        %1331 = vadd.xlane.f32.xlu0 %v1330
        %v1332 = vpop.xlane.xlu0 %1331
        %v1333 = vrcp.pop %v1311
        %v1334 = vrcp.pop %v1314
        %v1335 = vrcp.pop %v1317
        %v1336 = vrcp.pop %v1320
        %v1337 = vrcp.pop %v1323
        %v1338 = vrcp.pop %v1326
        %v1339 = vrcp.pop %v1329
        %v1340 = vrcp.pop %v1332
        %v1341 = vmul.f32 %v1294, %v1333
        %v1342 = vmul.f32 %v1296, %v1334
        %v1343 = vmul.f32 %v1298, %v1335
        %v1344 = vmul.f32 %v1300, %v1336
        %v1345 = vmul.f32 %v1302, %v1337
        %v1346 = vmul.f32 %v1304, %v1338
        %v1347 = vmul.f32 %v1306, %v1339
        %v1348 = vmul.f32 %v1308, %v1340
        %v1349 = vpack.c.bf16 %v1342, %v1341
        %v1350 = vpack.c.bf16 %v1344, %v1343
        %v1351 = vpack.c.bf16 %v1346, %v1345
        %v1352 = vpack.c.bf16 %v1348, %v1347
        %1353 = vrot.lane.b32.xlu0 %v747, 96
        %v1354 = vpop.permute.xlu0 %1353
        %1355 = vrot.lane.b32.xlu0 %v748, 96
        %v1356 = vpop.permute.xlu0 %1355
        %1357 = vrot.lane.b32.xlu0 %v749, 96
        %v1358 = vpop.permute.xlu0 %1357
        %1359 = vrot.lane.b32.xlu0 %v750, 96
        %v1360 = vpop.permute.xlu0 %1359
        %v1366 = vsel %vm620, %v1349, 0
        %v1369 = vsel %vm620, %v1350, 0
        %v1372 = vsel %vm620, %v1351, 0
        %v1375 = vsel %vm620, %v1352, 0
        %1377 = vmatpush.bf16.msra.mxu0 0
        %1378 = vmatpush.bf16.msra.mxu0 0
        %1379 = vmatpush.bf16.msra.mxu0 0
        %1380 = vmatpush.bf16.msra.mxu0 0
        %1381 = vmatpush.bf16.msra.mxu0 %v1360
        %1382 = vmatpush.bf16.msra.mxu0 %v1358
        %1383 = vmatpush.bf16.msra.mxu0 %v1356
        %1384 = vmatpush.bf16.msra.mxu0 %v1354
        %1385 = vmatmul.bf16.gmra.mxu0 %v1366
        %v1386 = vpop.f32.mrf.mxu0
        %v1387 = vadd.f32 0.0, %v1386
        %v1388 = vpop.f32.mrf.mxu0
        %v1389 = vadd.f32 0.0, %v1388
        %1390 = vmatmul.bf16.gmra.mxu0 %v1369
        %v1391 = vpop.f32.mrf.mxu0
        %v1392 = vadd.f32 0.0, %v1391
        %v1393 = vpop.f32.mrf.mxu0
        %v1394 = vadd.f32 0.0, %v1393
        %1395 = vmatmul.bf16.gmra.mxu0 %v1372
        %v1396 = vpop.f32.mrf.mxu0
        %v1397 = vadd.f32 0.0, %v1396
        %v1398 = vpop.f32.mrf.mxu0
        %v1399 = vadd.f32 0.0, %v1398
        %1400 = vmatmul.bf16.gmra.mxu0 %v1375
        %v1401 = vpop.f32.mrf.mxu0
        %v1402 = vadd.f32 0.0, %v1401
        %v1403 = vpop.f32.mrf.mxu0
        %v1404 = vadd.f32 0.0, %v1403
        %1405 = vdwg.mxu0
        %1406 = vrot.lane.b32.xlu0 %v743, 80
        %v1407 = vpop.permute.xlu0 %1406
        %1408 = vrot.lane.b32.xlu0 %v744, 80
        %v1409 = vpop.permute.xlu0 %1408
        %1410 = vrot.lane.b32.xlu0 %v745, 80
        %v1411 = vpop.permute.xlu0 %1410
        %1412 = vrot.lane.b32.xlu0 %v746, 80
        %v1413 = vpop.permute.xlu0 %1412
        %1414 = vrot.lane.b32.xlu0 %v743, 16
        %v1415 = vpop.permute.xlu0 %1414
        %1416 = vrot.lane.b32.xlu0 %v744, 16
        %v1417 = vpop.permute.xlu0 %1416
        %1418 = vrot.lane.b32.xlu0 %v745, 16
        %v1419 = vpop.permute.xlu0 %1418
        %1420 = vrot.lane.b32.xlu0 %v746, 16
        %v1421 = vpop.permute.xlu0 %1420
        %v1423 = vsel %vm763, %v1407, 0
        %v1426 = vsel %vm763, %v1409, 0
        %v1429 = vsel %vm763, %v1411, 0
        %v1432 = vsel %vm763, %v1413, 0
        %v1435 = vsel %vm763, %v1415, 0
        %v1438 = vsel %vm763, %v1417, 0
        %v1441 = vsel %vm763, %v1419, 0
        %v1444 = vsel %vm763, %v1421, 0
        %1446 = vmatpush.bf16.xpose.msra.mxu0 0
        %1447 = vmatpush.bf16.xpose.msra.mxu0 0
        %1448 = vmatpush.bf16.xpose.msra.mxu0 0
        %1449 = vmatpush.bf16.xpose.msra.mxu0 0
        %1450 = vmatpush.bf16.xpose.msra.mxu0 %v1444
        %1451 = vmatpush.bf16.xpose.msra.mxu0 %v1441
        %1452 = vmatpush.bf16.xpose.msra.mxu0 %v1438
        %1453 = vmatpush.bf16.xpose.msra.mxu0 %v1435
        %1454 = vmatmul.bf16.gmra.mxu0 %v1423
        %v1455 = vpop.f32.mrf.mxu0
        %v1456 = vadd.f32 0.0, %v1455
        %v1457 = vpop.f32.mrf.mxu0
        %v1458 = vadd.f32 0.0, %v1457
        %1459 = vmatmul.bf16.gmra.mxu0 %v1426
        %v1460 = vpop.f32.mrf.mxu0
        %v1461 = vadd.f32 0.0, %v1460
        %v1462 = vpop.f32.mrf.mxu0
        %v1463 = vadd.f32 0.0, %v1462
        %1464 = vmatmul.bf16.gmra.mxu0 %v1429
        %v1465 = vpop.f32.mrf.mxu0
        %v1466 = vadd.f32 0.0, %v1465
        %v1467 = vpop.f32.mrf.mxu0
        %v1468 = vadd.f32 0.0, %v1467
        %1469 = vmatmul.bf16.gmra.mxu0 %v1432
        %v1470 = vpop.f32.mrf.mxu0
        %v1471 = vadd.f32 0.0, %v1470
        %v1472 = vpop.f32.mrf.mxu0
        %v1473 = vadd.f32 0.0, %v1472
        %1474 = vdwg.mxu0
        %v1475 = vmul.f32 %v1456, 0.25
        %v1476 = vmul.f32 %v1458, 0.25
        %v1477 = vmul.f32 %v1461, 0.25
        %v1478 = vmul.f32 %v1463, 0.25
        %v1479 = vmul.f32 %v1466, 0.25
        %v1480 = vmul.f32 %v1468, 0.25
        %v1481 = vmul.f32 %v1471, 0.25
        %v1482 = vmul.f32 %v1473, 0.25
        %v1483 = vsel %vm620, %v1475, -inf
        %1484 = vmax.xlane.f32.xlu0 %v1483
        %v1485 = vpop.xlane.xlu0 %1484
        %v1486 = vsel %vm620, %v1476, -inf
        %1487 = vmax.xlane.f32.xlu0 %v1486
        %v1488 = vpop.xlane.xlu0 %1487
        %v1489 = vsel %vm620, %v1477, -inf
        %1490 = vmax.xlane.f32.xlu0 %v1489
        %v1491 = vpop.xlane.xlu0 %1490
        %v1492 = vsel %vm620, %v1478, -inf
        %1493 = vmax.xlane.f32.xlu0 %v1492
        %v1494 = vpop.xlane.xlu0 %1493
        %v1495 = vsel %vm620, %v1479, -inf
        %1496 = vmax.xlane.f32.xlu0 %v1495
        %v1497 = vpop.xlane.xlu0 %1496
        %v1498 = vsel %vm620, %v1480, -inf
        %1499 = vmax.xlane.f32.xlu0 %v1498
        %v1500 = vpop.xlane.xlu0 %1499
        %v1501 = vsel %vm620, %v1481, -inf
        %1502 = vmax.xlane.f32.xlu0 %v1501
        %v1503 = vpop.xlane.xlu0 %1502
        %v1504 = vsel %vm620, %v1482, -inf
        %1505 = vmax.xlane.f32.xlu0 %v1504
        %v1506 = vpop.xlane.xlu0 %1505
        %v1507 = vsub.f32 %v1475, %v1485
        %v1508 = vsub.f32 %v1476, %v1488
        %v1509 = vsub.f32 %v1477, %v1491
        %v1510 = vsub.f32 %v1478, %v1494
        %v1511 = vsub.f32 %v1479, %v1497
        %v1512 = vsub.f32 %v1480, %v1500
        %v1513 = vsub.f32 %v1481, %v1503
        %v1514 = vsub.f32 %v1482, %v1506
        %v1515 = vmul.f32 %v1507, 1.442695
        %v1516 = vpow.pop %v1515
        %v1517 = vmul.f32 %v1508, 1.442695
        %v1518 = vpow.pop %v1517
        %v1519 = vmul.f32 %v1509, 1.442695
        %v1520 = vpow.pop %v1519
        %v1521 = vmul.f32 %v1510, 1.442695
        %v1522 = vpow.pop %v1521
        %v1523 = vmul.f32 %v1511, 1.442695
        %v1524 = vpow.pop %v1523
        %v1525 = vmul.f32 %v1512, 1.442695
        %v1526 = vpow.pop %v1525
        %v1527 = vmul.f32 %v1513, 1.442695
        %v1528 = vpow.pop %v1527
        %v1529 = vmul.f32 %v1514, 1.442695
        %v1530 = vpow.pop %v1529
        %v1531 = vsel %vm620, %v1516, 0.0
        %1532 = vadd.xlane.f32.xlu0 %v1531
        %v1533 = vpop.xlane.xlu0 %1532
        %v1534 = vsel %vm620, %v1518, 0.0
        %1535 = vadd.xlane.f32.xlu0 %v1534
        %v1536 = vpop.xlane.xlu0 %1535
        %v1537 = vsel %vm620, %v1520, 0.0
        %1538 = vadd.xlane.f32.xlu0 %v1537
        %v1539 = vpop.xlane.xlu0 %1538
        %v1540 = vsel %vm620, %v1522, 0.0
        %1541 = vadd.xlane.f32.xlu0 %v1540
        %v1542 = vpop.xlane.xlu0 %1541
        %v1543 = vsel %vm620, %v1524, 0.0
        %1544 = vadd.xlane.f32.xlu0 %v1543
        %v1545 = vpop.xlane.xlu0 %1544
        %v1546 = vsel %vm620, %v1526, 0.0
        %1547 = vadd.xlane.f32.xlu0 %v1546
        %v1548 = vpop.xlane.xlu0 %1547
        %v1549 = vsel %vm620, %v1528, 0.0
        %1550 = vadd.xlane.f32.xlu0 %v1549
        %v1551 = vpop.xlane.xlu0 %1550
        %v1552 = vsel %vm620, %v1530, 0.0
        %1553 = vadd.xlane.f32.xlu0 %v1552
        %v1554 = vpop.xlane.xlu0 %1553
        %v1555 = vrcp.pop %v1533
        %v1556 = vrcp.pop %v1536
        %v1557 = vrcp.pop %v1539
        %v1558 = vrcp.pop %v1542
        %v1559 = vrcp.pop %v1545
        %v1560 = vrcp.pop %v1548
        %v1561 = vrcp.pop %v1551
        %v1562 = vrcp.pop %v1554
        %v1563 = vmul.f32 %v1516, %v1555
        %v1564 = vmul.f32 %v1518, %v1556
        %v1565 = vmul.f32 %v1520, %v1557
        %v1566 = vmul.f32 %v1522, %v1558
        %v1567 = vmul.f32 %v1524, %v1559
        %v1568 = vmul.f32 %v1526, %v1560
        %v1569 = vmul.f32 %v1528, %v1561
        %v1570 = vmul.f32 %v1530, %v1562
        %v1571 = vpack.c.bf16 %v1564, %v1563
        %v1572 = vpack.c.bf16 %v1566, %v1565
        %v1573 = vpack.c.bf16 %v1568, %v1567
        %v1574 = vpack.c.bf16 %v1570, %v1569
        %1575 = vrot.lane.b32.xlu0 %v747, 80
        %v1576 = vpop.permute.xlu0 %1575
        %1577 = vrot.lane.b32.xlu0 %v748, 80
        %v1578 = vpop.permute.xlu0 %1577
        %1579 = vrot.lane.b32.xlu0 %v749, 80
        %v1580 = vpop.permute.xlu0 %1579
        %1581 = vrot.lane.b32.xlu0 %v750, 80
        %v1582 = vpop.permute.xlu0 %1581
        %v1588 = vsel %vm620, %v1571, 0
        %v1591 = vsel %vm620, %v1572, 0
        %v1594 = vsel %vm620, %v1573, 0
        %v1597 = vsel %vm620, %v1574, 0
        %1599 = vmatpush.bf16.msra.mxu0 0
        %1600 = vmatpush.bf16.msra.mxu0 0
        %1601 = vmatpush.bf16.msra.mxu0 0
        %1602 = vmatpush.bf16.msra.mxu0 0
        %1603 = vmatpush.bf16.msra.mxu0 %v1582
        %1604 = vmatpush.bf16.msra.mxu0 %v1580
        %1605 = vmatpush.bf16.msra.mxu0 %v1578
        %1606 = vmatpush.bf16.msra.mxu0 %v1576
        %1607 = vmatmul.bf16.gmra.mxu0 %v1588
        %v1608 = vpop.f32.mrf.mxu0
        %v1609 = vadd.f32 0.0, %v1608
        %v1610 = vpop.f32.mrf.mxu0
        %v1611 = vadd.f32 0.0, %v1610
        %1612 = vmatmul.bf16.gmra.mxu0 %v1591
        %v1613 = vpop.f32.mrf.mxu0
        %v1614 = vadd.f32 0.0, %v1613
        %v1615 = vpop.f32.mrf.mxu0
        %v1616 = vadd.f32 0.0, %v1615
        %1617 = vmatmul.bf16.gmra.mxu0 %v1594
        %v1618 = vpop.f32.mrf.mxu0
        %v1619 = vadd.f32 0.0, %v1618
        %v1620 = vpop.f32.mrf.mxu0
        %v1621 = vadd.f32 0.0, %v1620
        %1622 = vmatmul.bf16.gmra.mxu0 %v1597
        %v1623 = vpop.f32.mrf.mxu0
        %v1624 = vadd.f32 0.0, %v1623
        %v1625 = vpop.f32.mrf.mxu0
        %v1626 = vadd.f32 0.0, %v1625
        %1627 = vdwg.mxu0
        %1636 = vrot.lane.b32.xlu0 %v1165, 16
        %v1637 = vpop.permute.xlu0 %1636
        %1638 = vrot.lane.b32.xlu0 %v1167, 16
        %v1639 = vpop.permute.xlu0 %1638
        %1640 = vrot.lane.b32.xlu0 %v1170, 16
        %v1641 = vpop.permute.xlu0 %1640
        %1642 = vrot.lane.b32.xlu0 %v1172, 16
        %v1643 = vpop.permute.xlu0 %1642
        %1644 = vrot.lane.b32.xlu0 %v1175, 16
        %v1645 = vpop.permute.xlu0 %1644
        %1646 = vrot.lane.b32.xlu0 %v1177, 16
        %v1647 = vpop.permute.xlu0 %1646
        %1648 = vrot.lane.b32.xlu0 %v1180, 16
        %v1649 = vpop.permute.xlu0 %1648
        %1650 = vrot.lane.b32.xlu0 %v1182, 16
        %v1651 = vpop.permute.xlu0 %1650
        %1668 = vrot.lane.b32.xlu0 %v1387, 32
        %v1669 = vpop.permute.xlu0 %1668
        %1670 = vrot.lane.b32.xlu0 %v1389, 32
        %v1671 = vpop.permute.xlu0 %1670
        %1672 = vrot.lane.b32.xlu0 %v1392, 32
        %v1673 = vpop.permute.xlu0 %1672
        %1674 = vrot.lane.b32.xlu0 %v1394, 32
        %v1675 = vpop.permute.xlu0 %1674
        %1676 = vrot.lane.b32.xlu0 %v1397, 32
        %v1677 = vpop.permute.xlu0 %1676
        %1678 = vrot.lane.b32.xlu0 %v1399, 32
        %v1679 = vpop.permute.xlu0 %1678
        %1680 = vrot.lane.b32.xlu0 %v1402, 32
        %v1681 = vpop.permute.xlu0 %1680
        %1682 = vrot.lane.b32.xlu0 %v1404, 32
        %v1683 = vpop.permute.xlu0 %1682
        %1700 = vrot.lane.b32.xlu0 %v1609, 48
        %v1701 = vpop.permute.xlu0 %1700
        %1702 = vrot.lane.b32.xlu0 %v1611, 48
        %v1703 = vpop.permute.xlu0 %1702
        %1704 = vrot.lane.b32.xlu0 %v1614, 48
        %v1705 = vpop.permute.xlu0 %1704
        %1706 = vrot.lane.b32.xlu0 %v1616, 48
        %v1707 = vpop.permute.xlu0 %1706
        %1708 = vrot.lane.b32.xlu0 %v1619, 48
        %v1709 = vpop.permute.xlu0 %1708
        %1710 = vrot.lane.b32.xlu0 %v1621, 48
        %v1711 = vpop.permute.xlu0 %1710
        %1712 = vrot.lane.b32.xlu0 %v1624, 48
        %v1713 = vpop.permute.xlu0 %1712
        %1714 = vrot.lane.b32.xlu0 %v1626, 48
        %v1715 = vpop.permute.xlu0 %1714
        %v1724 = vsel %vm763, %v939, %v1637
        %v1725 = vsel %vm763, %v941, %v1639
        %v1726 = vsel %vm763, %v944, %v1641
        %v1727 = vsel %vm763, %v946, %v1643
        %v1728 = vsel %vm763, %v949, %v1645
        %v1729 = vsel %vm763, %v951, %v1647
        %v1730 = vsel %vm763, %v954, %v1649
        %v1731 = vsel %vm763, %v956, %v1651
        %vm1732 = vcmask 261120
        %v1733 = vsel %vm1732, %v1724, %v1669
        %v1734 = vsel %vm1732, %v1725, %v1671
        %v1735 = vsel %vm1732, %v1726, %v1673
        %v1736 = vsel %vm1732, %v1727, %v1675
        %v1737 = vsel %vm1732, %v1728, %v1677
        %v1738 = vsel %vm1732, %v1729, %v1679
        %v1739 = vsel %vm1732, %v1730, %v1681
        %v1740 = vsel %vm1732, %v1731, %v1683
        %vm1741 = vcmask 392192
        %v1742 = vsel %vm1741, %v1733, %v1701
        %v1743 = vsel %vm1741, %v1734, %v1703
        %v1744 = vsel %vm1741, %v1735, %v1705
        %v1745 = vsel %vm1741, %v1736, %v1707
        %v1746 = vsel %vm1741, %v1737, %v1709
        %v1747 = vsel %vm1741, %v1738, %v1711
        %v1748 = vsel %vm1741, %v1739, %v1713
        %v1749 = vsel %vm1741, %v1740, %v1715
        %v1750 = vpack.c.bf16 %v677, %v675
        %v1751 = vpack.c.bf16 %v682, %v680
        %v1752 = vpack.c.bf16 %v687, %v685
        %v1753 = vpack.c.bf16 %v692, %v690
        %v1754 = vpack.c.bf16 %v726, %v724
        %v1755 = vpack.c.bf16 %v731, %v729
        %v1756 = vpack.c.bf16 %v736, %v734
        %v1757 = vpack.c.bf16 %v741, %v739
        %1762 = vrot.lane.b32.xlu0 %v1750, 64
        %v1763 = vpop.permute.xlu0 %1762
        %1764 = vrot.lane.b32.xlu0 %v1751, 64
        %v1765 = vpop.permute.xlu0 %1764
        %1766 = vrot.lane.b32.xlu0 %v1752, 64
        %v1767 = vpop.permute.xlu0 %1766
        %1768 = vrot.lane.b32.xlu0 %v1753, 64
        %v1769 = vpop.permute.xlu0 %1768
        %v1771 = vsel %vm763, %v1750, 0
        %v1774 = vsel %vm763, %v1751, 0
        %v1777 = vsel %vm763, %v1752, 0
        %v1780 = vsel %vm763, %v1753, 0
        %v1783 = vsel %vm763, %v1763, 0
        %v1786 = vsel %vm763, %v1765, 0
        %v1789 = vsel %vm763, %v1767, 0
        %v1792 = vsel %vm763, %v1769, 0
        %1794 = vmatpush.bf16.xpose.msra.mxu0 0
        %1795 = vmatpush.bf16.xpose.msra.mxu0 0
        %1796 = vmatpush.bf16.xpose.msra.mxu0 0
        %1797 = vmatpush.bf16.xpose.msra.mxu0 0
        %1798 = vmatpush.bf16.xpose.msra.mxu0 %v1792
        %1799 = vmatpush.bf16.xpose.msra.mxu0 %v1789
        %1800 = vmatpush.bf16.xpose.msra.mxu0 %v1786
        %1801 = vmatpush.bf16.xpose.msra.mxu0 %v1783
        %1802 = vmatmul.bf16.gmra.mxu0 %v1771
        %v1803 = vpop.f32.mrf.mxu0
        %v1804 = vadd.f32 0.0, %v1803
        %v1805 = vpop.f32.mrf.mxu0
        %v1806 = vadd.f32 0.0, %v1805
        %1807 = vmatmul.bf16.gmra.mxu0 %v1774
        %v1808 = vpop.f32.mrf.mxu0
        %v1809 = vadd.f32 0.0, %v1808
        %v1810 = vpop.f32.mrf.mxu0
        %v1811 = vadd.f32 0.0, %v1810
        %1812 = vmatmul.bf16.gmra.mxu0 %v1777
        %v1813 = vpop.f32.mrf.mxu0
        %v1814 = vadd.f32 0.0, %v1813
        %v1815 = vpop.f32.mrf.mxu0
        %v1816 = vadd.f32 0.0, %v1815
        %1817 = vmatmul.bf16.gmra.mxu0 %v1780
        %v1818 = vpop.f32.mrf.mxu0
        %v1819 = vadd.f32 0.0, %v1818
        %v1820 = vpop.f32.mrf.mxu0
        %v1821 = vadd.f32 0.0, %v1820
        %1822 = vdwg.mxu0
        %v1823 = vmul.f32 %v1804, 0.25
        %v1824 = vmul.f32 %v1806, 0.25
        %v1825 = vmul.f32 %v1809, 0.25
        %v1826 = vmul.f32 %v1811, 0.25
        %v1827 = vmul.f32 %v1814, 0.25
        %v1828 = vmul.f32 %v1816, 0.25
        %v1829 = vmul.f32 %v1819, 0.25
        %v1830 = vmul.f32 %v1821, 0.25
        %v1831 = vsel %vm620, %v1823, -inf
        %1832 = vmax.xlane.f32.xlu0 %v1831
        %v1833 = vpop.xlane.xlu0 %1832
        %v1834 = vsel %vm620, %v1824, -inf
        %1835 = vmax.xlane.f32.xlu0 %v1834
        %v1836 = vpop.xlane.xlu0 %1835
        %v1837 = vsel %vm620, %v1825, -inf
        %1838 = vmax.xlane.f32.xlu0 %v1837
        %v1839 = vpop.xlane.xlu0 %1838
        %v1840 = vsel %vm620, %v1826, -inf
        %1841 = vmax.xlane.f32.xlu0 %v1840
        %v1842 = vpop.xlane.xlu0 %1841
        %v1843 = vsel %vm620, %v1827, -inf
        %1844 = vmax.xlane.f32.xlu0 %v1843
        %v1845 = vpop.xlane.xlu0 %1844
        %v1846 = vsel %vm620, %v1828, -inf
        %1847 = vmax.xlane.f32.xlu0 %v1846
        %v1848 = vpop.xlane.xlu0 %1847
        %v1849 = vsel %vm620, %v1829, -inf
        %1850 = vmax.xlane.f32.xlu0 %v1849
        %v1851 = vpop.xlane.xlu0 %1850
        %v1852 = vsel %vm620, %v1830, -inf
        %1853 = vmax.xlane.f32.xlu0 %v1852
        %v1854 = vpop.xlane.xlu0 %1853
        %v1855 = vsub.f32 %v1823, %v1833
        %v1856 = vsub.f32 %v1824, %v1836
        %v1857 = vsub.f32 %v1825, %v1839
        %v1858 = vsub.f32 %v1826, %v1842
        %v1859 = vsub.f32 %v1827, %v1845
        %v1860 = vsub.f32 %v1828, %v1848
        %v1861 = vsub.f32 %v1829, %v1851
        %v1862 = vsub.f32 %v1830, %v1854
        %v1863 = vmul.f32 %v1855, 1.442695
        %v1864 = vpow.pop %v1863
        %v1865 = vmul.f32 %v1856, 1.442695
        %v1866 = vpow.pop %v1865
        %v1867 = vmul.f32 %v1857, 1.442695
        %v1868 = vpow.pop %v1867
        %v1869 = vmul.f32 %v1858, 1.442695
        %v1870 = vpow.pop %v1869
        %v1871 = vmul.f32 %v1859, 1.442695
        %v1872 = vpow.pop %v1871
        %v1873 = vmul.f32 %v1860, 1.442695
        %v1874 = vpow.pop %v1873
        %v1875 = vmul.f32 %v1861, 1.442695
        %v1876 = vpow.pop %v1875
        %v1877 = vmul.f32 %v1862, 1.442695
        %v1878 = vpow.pop %v1877
        %v1879 = vsel %vm620, %v1864, 0.0
        %1880 = vadd.xlane.f32.xlu0 %v1879
        %v1881 = vpop.xlane.xlu0 %1880
        %v1882 = vsel %vm620, %v1866, 0.0
        %1883 = vadd.xlane.f32.xlu0 %v1882
        %v1884 = vpop.xlane.xlu0 %1883
        %v1885 = vsel %vm620, %v1868, 0.0
        %1886 = vadd.xlane.f32.xlu0 %v1885
        %v1887 = vpop.xlane.xlu0 %1886
        %v1888 = vsel %vm620, %v1870, 0.0
        %1889 = vadd.xlane.f32.xlu0 %v1888
        %v1890 = vpop.xlane.xlu0 %1889
        %v1891 = vsel %vm620, %v1872, 0.0
        %1892 = vadd.xlane.f32.xlu0 %v1891
        %v1893 = vpop.xlane.xlu0 %1892
        %v1894 = vsel %vm620, %v1874, 0.0
        %1895 = vadd.xlane.f32.xlu0 %v1894
        %v1896 = vpop.xlane.xlu0 %1895
        %v1897 = vsel %vm620, %v1876, 0.0
        %1898 = vadd.xlane.f32.xlu0 %v1897
        %v1899 = vpop.xlane.xlu0 %1898
        %v1900 = vsel %vm620, %v1878, 0.0
        %1901 = vadd.xlane.f32.xlu0 %v1900
        %v1902 = vpop.xlane.xlu0 %1901
        %v1903 = vrcp.pop %v1881
        %v1904 = vrcp.pop %v1884
        %v1905 = vrcp.pop %v1887
        %v1906 = vrcp.pop %v1890
        %v1907 = vrcp.pop %v1893
        %v1908 = vrcp.pop %v1896
        %v1909 = vrcp.pop %v1899
        %v1910 = vrcp.pop %v1902
        %v1911 = vmul.f32 %v1864, %v1903
        %v1912 = vmul.f32 %v1866, %v1904
        %v1913 = vmul.f32 %v1868, %v1905
        %v1914 = vmul.f32 %v1870, %v1906
        %v1915 = vmul.f32 %v1872, %v1907
        %v1916 = vmul.f32 %v1874, %v1908
        %v1917 = vmul.f32 %v1876, %v1909
        %v1918 = vmul.f32 %v1878, %v1910
        %v1919 = vpack.c.bf16 %v1912, %v1911
        %v1920 = vpack.c.bf16 %v1914, %v1913
        %v1921 = vpack.c.bf16 %v1916, %v1915
        %v1922 = vpack.c.bf16 %v1918, %v1917
        %v1924 = vsel %vm620, %v1919, 0
        %v1927 = vsel %vm620, %v1920, 0
        %v1930 = vsel %vm620, %v1921, 0
        %v1933 = vsel %vm620, %v1922, 0
        %1935 = vmatpush.bf16.msra.mxu0 0
        %1936 = vmatpush.bf16.msra.mxu0 0
        %1937 = vmatpush.bf16.msra.mxu0 0
        %1938 = vmatpush.bf16.msra.mxu0 0
        %1939 = vmatpush.bf16.msra.mxu0 %v1757
        %1940 = vmatpush.bf16.msra.mxu0 %v1756
        %1941 = vmatpush.bf16.msra.mxu0 %v1755
        %1942 = vmatpush.bf16.msra.mxu0 %v1754
        %1943 = vmatmul.bf16.gmra.mxu0 %v1924
        %v1944 = vpop.f32.mrf.mxu0
        %v1945 = vadd.f32 0.0, %v1944
        %v1946 = vpop.f32.mrf.mxu0
        %v1947 = vadd.f32 0.0, %v1946
        %1948 = vmatmul.bf16.gmra.mxu0 %v1927
        %v1949 = vpop.f32.mrf.mxu0
        %v1950 = vadd.f32 0.0, %v1949
        %v1951 = vpop.f32.mrf.mxu0
        %v1952 = vadd.f32 0.0, %v1951
        %1953 = vmatmul.bf16.gmra.mxu0 %v1930
        %v1954 = vpop.f32.mrf.mxu0
        %v1955 = vadd.f32 0.0, %v1954
        %v1956 = vpop.f32.mrf.mxu0
        %v1957 = vadd.f32 0.0, %v1956
        %1958 = vmatmul.bf16.gmra.mxu0 %v1933
        %v1959 = vpop.f32.mrf.mxu0
        %v1960 = vadd.f32 0.0, %v1959
        %v1961 = vpop.f32.mrf.mxu0
        %v1962 = vadd.f32 0.0, %v1961
        %1963 = vdwg.mxu0
        %1964 = vrot.lane.b32.xlu0 %v1750, 112
        %v1965 = vpop.permute.xlu0 %1964
        %1966 = vrot.lane.b32.xlu0 %v1751, 112
        %v1967 = vpop.permute.xlu0 %1966
        %1968 = vrot.lane.b32.xlu0 %v1752, 112
        %v1969 = vpop.permute.xlu0 %1968
        %1970 = vrot.lane.b32.xlu0 %v1753, 112
        %v1971 = vpop.permute.xlu0 %1970
        %1972 = vrot.lane.b32.xlu0 %v1750, 48
        %v1973 = vpop.permute.xlu0 %1972
        %1974 = vrot.lane.b32.xlu0 %v1751, 48
        %v1975 = vpop.permute.xlu0 %1974
        %1976 = vrot.lane.b32.xlu0 %v1752, 48
        %v1977 = vpop.permute.xlu0 %1976
        %1978 = vrot.lane.b32.xlu0 %v1753, 48
        %v1979 = vpop.permute.xlu0 %1978
        %v1981 = vsel %vm763, %v1965, 0
        %v1984 = vsel %vm763, %v1967, 0
        %v1987 = vsel %vm763, %v1969, 0
        %v1990 = vsel %vm763, %v1971, 0
        %v1993 = vsel %vm763, %v1973, 0
        %v1996 = vsel %vm763, %v1975, 0
        %v1999 = vsel %vm763, %v1977, 0
        %v2002 = vsel %vm763, %v1979, 0
        %2004 = vmatpush.bf16.xpose.msra.mxu0 0
        %2005 = vmatpush.bf16.xpose.msra.mxu0 0
        %2006 = vmatpush.bf16.xpose.msra.mxu0 0
        %2007 = vmatpush.bf16.xpose.msra.mxu0 0
        %2008 = vmatpush.bf16.xpose.msra.mxu0 %v2002
        %2009 = vmatpush.bf16.xpose.msra.mxu0 %v1999
        %2010 = vmatpush.bf16.xpose.msra.mxu0 %v1996
        %2011 = vmatpush.bf16.xpose.msra.mxu0 %v1993
        %2012 = vmatmul.bf16.gmra.mxu0 %v1981
        %v2013 = vpop.f32.mrf.mxu0
        %v2014 = vadd.f32 0.0, %v2013
        %v2015 = vpop.f32.mrf.mxu0
        %v2016 = vadd.f32 0.0, %v2015
        %2017 = vmatmul.bf16.gmra.mxu0 %v1984
        %v2018 = vpop.f32.mrf.mxu0
        %v2019 = vadd.f32 0.0, %v2018
        %v2020 = vpop.f32.mrf.mxu0
        %v2021 = vadd.f32 0.0, %v2020
        %2022 = vmatmul.bf16.gmra.mxu0 %v1987
        %v2023 = vpop.f32.mrf.mxu0
        %v2024 = vadd.f32 0.0, %v2023
        %v2025 = vpop.f32.mrf.mxu0
        %v2026 = vadd.f32 0.0, %v2025
        %2027 = vmatmul.bf16.gmra.mxu0 %v1990
        %v2028 = vpop.f32.mrf.mxu0
        %v2029 = vadd.f32 0.0, %v2028
        %v2030 = vpop.f32.mrf.mxu0
        %v2031 = vadd.f32 0.0, %v2030
        %2032 = vdwg.mxu0
        %v2033 = vmul.f32 %v2014, 0.25
        %v2034 = vmul.f32 %v2016, 0.25
        %v2035 = vmul.f32 %v2019, 0.25
        %v2036 = vmul.f32 %v2021, 0.25
        %v2037 = vmul.f32 %v2024, 0.25
        %v2038 = vmul.f32 %v2026, 0.25
        %v2039 = vmul.f32 %v2029, 0.25
        %v2040 = vmul.f32 %v2031, 0.25
        %v2041 = vsel %vm620, %v2033, -inf
        %2042 = vmax.xlane.f32.xlu0 %v2041
        %v2043 = vpop.xlane.xlu0 %2042
        %v2044 = vsel %vm620, %v2034, -inf
        %2045 = vmax.xlane.f32.xlu0 %v2044
        %v2046 = vpop.xlane.xlu0 %2045
        %v2047 = vsel %vm620, %v2035, -inf
        %2048 = vmax.xlane.f32.xlu0 %v2047
        %v2049 = vpop.xlane.xlu0 %2048
        %v2050 = vsel %vm620, %v2036, -inf
        %2051 = vmax.xlane.f32.xlu0 %v2050
        %v2052 = vpop.xlane.xlu0 %2051
        %v2053 = vsel %vm620, %v2037, -inf
        %2054 = vmax.xlane.f32.xlu0 %v2053
        %v2055 = vpop.xlane.xlu0 %2054
        %v2056 = vsel %vm620, %v2038, -inf
        %2057 = vmax.xlane.f32.xlu0 %v2056
        %v2058 = vpop.xlane.xlu0 %2057
        %v2059 = vsel %vm620, %v2039, -inf
        %2060 = vmax.xlane.f32.xlu0 %v2059
        %v2061 = vpop.xlane.xlu0 %2060
        %v2062 = vsel %vm620, %v2040, -inf
        %2063 = vmax.xlane.f32.xlu0 %v2062
        %v2064 = vpop.xlane.xlu0 %2063
        %v2065 = vsub.f32 %v2033, %v2043
        %v2066 = vsub.f32 %v2034, %v2046
        %v2067 = vsub.f32 %v2035, %v2049
        %v2068 = vsub.f32 %v2036, %v2052
        %v2069 = vsub.f32 %v2037, %v2055
        %v2070 = vsub.f32 %v2038, %v2058
        %v2071 = vsub.f32 %v2039, %v2061
        %v2072 = vsub.f32 %v2040, %v2064
        %v2073 = vmul.f32 %v2065, 1.442695
        %v2074 = vpow.pop %v2073
        %v2075 = vmul.f32 %v2066, 1.442695
        %v2076 = vpow.pop %v2075
        %v2077 = vmul.f32 %v2067, 1.442695
        %v2078 = vpow.pop %v2077
        %v2079 = vmul.f32 %v2068, 1.442695
        %v2080 = vpow.pop %v2079
        %v2081 = vmul.f32 %v2069, 1.442695
        %v2082 = vpow.pop %v2081
        %v2083 = vmul.f32 %v2070, 1.442695
        %v2084 = vpow.pop %v2083
        %v2085 = vmul.f32 %v2071, 1.442695
        %v2086 = vpow.pop %v2085
        %v2087 = vmul.f32 %v2072, 1.442695
        %v2088 = vpow.pop %v2087
        %v2089 = vsel %vm620, %v2074, 0.0
        %2090 = vadd.xlane.f32.xlu0 %v2089
        %v2091 = vpop.xlane.xlu0 %2090
        %v2092 = vsel %vm620, %v2076, 0.0
        %2093 = vadd.xlane.f32.xlu0 %v2092
        %v2094 = vpop.xlane.xlu0 %2093
        %v2095 = vsel %vm620, %v2078, 0.0
        %2096 = vadd.xlane.f32.xlu0 %v2095
        %v2097 = vpop.xlane.xlu0 %2096
        %v2098 = vsel %vm620, %v2080, 0.0
        %2099 = vadd.xlane.f32.xlu0 %v2098
        %v2100 = vpop.xlane.xlu0 %2099
        %v2101 = vsel %vm620, %v2082, 0.0
        %2102 = vadd.xlane.f32.xlu0 %v2101
        %v2103 = vpop.xlane.xlu0 %2102
        %v2104 = vsel %vm620, %v2084, 0.0
        %2105 = vadd.xlane.f32.xlu0 %v2104
        %v2106 = vpop.xlane.xlu0 %2105
        %v2107 = vsel %vm620, %v2086, 0.0
        %2108 = vadd.xlane.f32.xlu0 %v2107
        %v2109 = vpop.xlane.xlu0 %2108
        %v2110 = vsel %vm620, %v2088, 0.0
        %2111 = vadd.xlane.f32.xlu0 %v2110
        %v2112 = vpop.xlane.xlu0 %2111
        %v2113 = vrcp.pop %v2091
        %v2114 = vrcp.pop %v2094
        %v2115 = vrcp.pop %v2097
        %v2116 = vrcp.pop %v2100
        %v2117 = vrcp.pop %v2103
        %v2118 = vrcp.pop %v2106
        %v2119 = vrcp.pop %v2109
        %v2120 = vrcp.pop %v2112
        %v2121 = vmul.f32 %v2074, %v2113
        %v2122 = vmul.f32 %v2076, %v2114
        %v2123 = vmul.f32 %v2078, %v2115
        %v2124 = vmul.f32 %v2080, %v2116
        %v2125 = vmul.f32 %v2082, %v2117
        %v2126 = vmul.f32 %v2084, %v2118
        %v2127 = vmul.f32 %v2086, %v2119
        %v2128 = vmul.f32 %v2088, %v2120
        %v2129 = vpack.c.bf16 %v2122, %v2121
        %v2130 = vpack.c.bf16 %v2124, %v2123
        %v2131 = vpack.c.bf16 %v2126, %v2125
        %v2132 = vpack.c.bf16 %v2128, %v2127
        %2137 = vrot.lane.b32.xlu0 %v1754, 112
        %v2138 = vpop.permute.xlu0 %2137
        %2139 = vrot.lane.b32.xlu0 %v1755, 112
        %v2140 = vpop.permute.xlu0 %2139
        %2141 = vrot.lane.b32.xlu0 %v1756, 112
        %v2142 = vpop.permute.xlu0 %2141
        %2143 = vrot.lane.b32.xlu0 %v1757, 112
        %v2144 = vpop.permute.xlu0 %2143
        %v2150 = vsel %vm620, %v2129, 0
        %v2153 = vsel %vm620, %v2130, 0
        %v2156 = vsel %vm620, %v2131, 0
        %v2159 = vsel %vm620, %v2132, 0
        %2161 = vmatpush.bf16.msra.mxu0 0
        %2162 = vmatpush.bf16.msra.mxu0 0
        %2163 = vmatpush.bf16.msra.mxu0 0
        %2164 = vmatpush.bf16.msra.mxu0 0
        %2165 = vmatpush.bf16.msra.mxu0 %v2144
        %2166 = vmatpush.bf16.msra.mxu0 %v2142
        %2167 = vmatpush.bf16.msra.mxu0 %v2140
        %2168 = vmatpush.bf16.msra.mxu0 %v2138
        %2169 = vmatmul.bf16.gmra.mxu0 %v2150
        %v2170 = vpop.f32.mrf.mxu0
        %v2171 = vadd.f32 0.0, %v2170
        %v2172 = vpop.f32.mrf.mxu0
        %v2173 = vadd.f32 0.0, %v2172
        %2174 = vmatmul.bf16.gmra.mxu0 %v2153
        %v2175 = vpop.f32.mrf.mxu0
        %v2176 = vadd.f32 0.0, %v2175
        %v2177 = vpop.f32.mrf.mxu0
        %v2178 = vadd.f32 0.0, %v2177
        %2179 = vmatmul.bf16.gmra.mxu0 %v2156
        %v2180 = vpop.f32.mrf.mxu0
        %v2181 = vadd.f32 0.0, %v2180
        %v2182 = vpop.f32.mrf.mxu0
        %v2183 = vadd.f32 0.0, %v2182
        %2184 = vmatmul.bf16.gmra.mxu0 %v2159
        %v2185 = vpop.f32.mrf.mxu0
        %v2186 = vadd.f32 0.0, %v2185
        %v2187 = vpop.f32.mrf.mxu0
        %v2188 = vadd.f32 0.0, %v2187
        %2189 = vdwg.mxu0
        %2190 = vrot.lane.b32.xlu0 %v1750, 96
        %v2191 = vpop.permute.xlu0 %2190
        %2192 = vrot.lane.b32.xlu0 %v1751, 96
        %v2193 = vpop.permute.xlu0 %2192
        %2194 = vrot.lane.b32.xlu0 %v1752, 96
        %v2195 = vpop.permute.xlu0 %2194
        %2196 = vrot.lane.b32.xlu0 %v1753, 96
        %v2197 = vpop.permute.xlu0 %2196
        %2198 = vrot.lane.b32.xlu0 %v1750, 32
        %v2199 = vpop.permute.xlu0 %2198
        %2200 = vrot.lane.b32.xlu0 %v1751, 32
        %v2201 = vpop.permute.xlu0 %2200
        %2202 = vrot.lane.b32.xlu0 %v1752, 32
        %v2203 = vpop.permute.xlu0 %2202
        %2204 = vrot.lane.b32.xlu0 %v1753, 32
        %v2205 = vpop.permute.xlu0 %2204
        %v2207 = vsel %vm763, %v2191, 0
        %v2210 = vsel %vm763, %v2193, 0
        %v2213 = vsel %vm763, %v2195, 0
        %v2216 = vsel %vm763, %v2197, 0
        %v2219 = vsel %vm763, %v2199, 0
        %v2222 = vsel %vm763, %v2201, 0
        %v2225 = vsel %vm763, %v2203, 0
        %v2228 = vsel %vm763, %v2205, 0
        %2230 = vmatpush.bf16.xpose.msra.mxu0 0
        %2231 = vmatpush.bf16.xpose.msra.mxu0 0
        %2232 = vmatpush.bf16.xpose.msra.mxu0 0
        %2233 = vmatpush.bf16.xpose.msra.mxu0 0
        %2234 = vmatpush.bf16.xpose.msra.mxu0 %v2228
        %2235 = vmatpush.bf16.xpose.msra.mxu0 %v2225
        %2236 = vmatpush.bf16.xpose.msra.mxu0 %v2222
        %2237 = vmatpush.bf16.xpose.msra.mxu0 %v2219
        %2238 = vmatmul.bf16.gmra.mxu0 %v2207
        %v2239 = vpop.f32.mrf.mxu0
        %v2240 = vadd.f32 0.0, %v2239
        %v2241 = vpop.f32.mrf.mxu0
        %v2242 = vadd.f32 0.0, %v2241
        %2243 = vmatmul.bf16.gmra.mxu0 %v2210
        %v2244 = vpop.f32.mrf.mxu0
        %v2245 = vadd.f32 0.0, %v2244
        %v2246 = vpop.f32.mrf.mxu0
        %v2247 = vadd.f32 0.0, %v2246
        %2248 = vmatmul.bf16.gmra.mxu0 %v2213
        %v2249 = vpop.f32.mrf.mxu0
        %v2250 = vadd.f32 0.0, %v2249
        %v2251 = vpop.f32.mrf.mxu0
        %v2252 = vadd.f32 0.0, %v2251
        %2253 = vmatmul.bf16.gmra.mxu0 %v2216
        %v2254 = vpop.f32.mrf.mxu0
        %v2255 = vadd.f32 0.0, %v2254
        %v2256 = vpop.f32.mrf.mxu0
        %v2257 = vadd.f32 0.0, %v2256
        %2258 = vdwg.mxu0
        %v2259 = vmul.f32 %v2240, 0.25
        %v2260 = vmul.f32 %v2242, 0.25
        %v2261 = vmul.f32 %v2245, 0.25
        %v2262 = vmul.f32 %v2247, 0.25
        %v2263 = vmul.f32 %v2250, 0.25
        %v2264 = vmul.f32 %v2252, 0.25
        %v2265 = vmul.f32 %v2255, 0.25
        %v2266 = vmul.f32 %v2257, 0.25
        %v2267 = vsel %vm620, %v2259, -inf
        %2268 = vmax.xlane.f32.xlu0 %v2267
        %v2269 = vpop.xlane.xlu0 %2268
        %v2270 = vsel %vm620, %v2260, -inf
        %2271 = vmax.xlane.f32.xlu0 %v2270
        %v2272 = vpop.xlane.xlu0 %2271
        %v2273 = vsel %vm620, %v2261, -inf
        %2274 = vmax.xlane.f32.xlu0 %v2273
        %v2275 = vpop.xlane.xlu0 %2274
        %v2276 = vsel %vm620, %v2262, -inf
        %2277 = vmax.xlane.f32.xlu0 %v2276
        %v2278 = vpop.xlane.xlu0 %2277
        %v2279 = vsel %vm620, %v2263, -inf
        %2280 = vmax.xlane.f32.xlu0 %v2279
        %v2281 = vpop.xlane.xlu0 %2280
        %v2282 = vsel %vm620, %v2264, -inf
        %2283 = vmax.xlane.f32.xlu0 %v2282
        %v2284 = vpop.xlane.xlu0 %2283
        %v2285 = vsel %vm620, %v2265, -inf
        %2286 = vmax.xlane.f32.xlu0 %v2285
        %v2287 = vpop.xlane.xlu0 %2286
        %v2288 = vsel %vm620, %v2266, -inf
        %2289 = vmax.xlane.f32.xlu0 %v2288
        %v2290 = vpop.xlane.xlu0 %2289
        %v2291 = vsub.f32 %v2259, %v2269
        %v2292 = vsub.f32 %v2260, %v2272
        %v2293 = vsub.f32 %v2261, %v2275
        %v2294 = vsub.f32 %v2262, %v2278
        %v2295 = vsub.f32 %v2263, %v2281
        %v2296 = vsub.f32 %v2264, %v2284
        %v2297 = vsub.f32 %v2265, %v2287
        %v2298 = vsub.f32 %v2266, %v2290
        %v2299 = vmul.f32 %v2291, 1.442695
        %v2300 = vpow.pop %v2299
        %v2301 = vmul.f32 %v2292, 1.442695
        %v2302 = vpow.pop %v2301
        %v2303 = vmul.f32 %v2293, 1.442695
        %v2304 = vpow.pop %v2303
        %v2305 = vmul.f32 %v2294, 1.442695
        %v2306 = vpow.pop %v2305
        %v2307 = vmul.f32 %v2295, 1.442695
        %v2308 = vpow.pop %v2307
        %v2309 = vmul.f32 %v2296, 1.442695
        %v2310 = vpow.pop %v2309
        %v2311 = vmul.f32 %v2297, 1.442695
        %v2312 = vpow.pop %v2311
        %v2313 = vmul.f32 %v2298, 1.442695
        %v2314 = vpow.pop %v2313
        %v2315 = vsel %vm620, %v2300, 0.0
        %2316 = vadd.xlane.f32.xlu0 %v2315
        %v2317 = vpop.xlane.xlu0 %2316
        %v2318 = vsel %vm620, %v2302, 0.0
        %2319 = vadd.xlane.f32.xlu0 %v2318
        %v2320 = vpop.xlane.xlu0 %2319
        %v2321 = vsel %vm620, %v2304, 0.0
        %2322 = vadd.xlane.f32.xlu0 %v2321
        %v2323 = vpop.xlane.xlu0 %2322
        %v2324 = vsel %vm620, %v2306, 0.0
        %2325 = vadd.xlane.f32.xlu0 %v2324
        %v2326 = vpop.xlane.xlu0 %2325
        %v2327 = vsel %vm620, %v2308, 0.0
        %2328 = vadd.xlane.f32.xlu0 %v2327
        %v2329 = vpop.xlane.xlu0 %2328
        %v2330 = vsel %vm620, %v2310, 0.0
        %2331 = vadd.xlane.f32.xlu0 %v2330
        %v2332 = vpop.xlane.xlu0 %2331
        %v2333 = vsel %vm620, %v2312, 0.0
        %2334 = vadd.xlane.f32.xlu0 %v2333
        %v2335 = vpop.xlane.xlu0 %2334
        %v2336 = vsel %vm620, %v2314, 0.0
        %2337 = vadd.xlane.f32.xlu0 %v2336
        %v2338 = vpop.xlane.xlu0 %2337
        %v2339 = vrcp.pop %v2317
        %v2340 = vrcp.pop %v2320
        %v2341 = vrcp.pop %v2323
        %v2342 = vrcp.pop %v2326
        %v2343 = vrcp.pop %v2329
        %v2344 = vrcp.pop %v2332
        %v2345 = vrcp.pop %v2335
        %v2346 = vrcp.pop %v2338
        %v2347 = vmul.f32 %v2300, %v2339
        %v2348 = vmul.f32 %v2302, %v2340
        %v2349 = vmul.f32 %v2304, %v2341
        %v2350 = vmul.f32 %v2306, %v2342
        %v2351 = vmul.f32 %v2308, %v2343
        %v2352 = vmul.f32 %v2310, %v2344
        %v2353 = vmul.f32 %v2312, %v2345
        %v2354 = vmul.f32 %v2314, %v2346
        %v2355 = vpack.c.bf16 %v2348, %v2347
        %v2356 = vpack.c.bf16 %v2350, %v2349
        %v2357 = vpack.c.bf16 %v2352, %v2351
        %v2358 = vpack.c.bf16 %v2354, %v2353
        %2359 = vrot.lane.b32.xlu0 %v1754, 96
        %v2360 = vpop.permute.xlu0 %2359
        %2361 = vrot.lane.b32.xlu0 %v1755, 96
        %v2362 = vpop.permute.xlu0 %2361
        %2363 = vrot.lane.b32.xlu0 %v1756, 96
        %v2364 = vpop.permute.xlu0 %2363
        %2365 = vrot.lane.b32.xlu0 %v1757, 96
        %v2366 = vpop.permute.xlu0 %2365
        %v2372 = vsel %vm620, %v2355, 0
        %v2375 = vsel %vm620, %v2356, 0
        %v2378 = vsel %vm620, %v2357, 0
        %v2381 = vsel %vm620, %v2358, 0
        %2383 = vmatpush.bf16.msra.mxu0 0
        %2384 = vmatpush.bf16.msra.mxu0 0
        %2385 = vmatpush.bf16.msra.mxu0 0
        %2386 = vmatpush.bf16.msra.mxu0 0
        %2387 = vmatpush.bf16.msra.mxu0 %v2366
        %2388 = vmatpush.bf16.msra.mxu0 %v2364
        %2389 = vmatpush.bf16.msra.mxu0 %v2362
        %2390 = vmatpush.bf16.msra.mxu0 %v2360
        %2391 = vmatmul.bf16.gmra.mxu0 %v2372
        %v2392 = vpop.f32.mrf.mxu0
        %v2393 = vadd.f32 0.0, %v2392
        %v2394 = vpop.f32.mrf.mxu0
        %v2395 = vadd.f32 0.0, %v2394
        %2396 = vmatmul.bf16.gmra.mxu0 %v2375
        %v2397 = vpop.f32.mrf.mxu0
        %v2398 = vadd.f32 0.0, %v2397
        %v2399 = vpop.f32.mrf.mxu0
        %v2400 = vadd.f32 0.0, %v2399
        %2401 = vmatmul.bf16.gmra.mxu0 %v2378
        %v2402 = vpop.f32.mrf.mxu0
        %v2403 = vadd.f32 0.0, %v2402
        %v2404 = vpop.f32.mrf.mxu0
        %v2405 = vadd.f32 0.0, %v2404
        %2406 = vmatmul.bf16.gmra.mxu0 %v2381
        %v2407 = vpop.f32.mrf.mxu0
        %v2408 = vadd.f32 0.0, %v2407
        %v2409 = vpop.f32.mrf.mxu0
        %v2410 = vadd.f32 0.0, %v2409
        %2411 = vdwg.mxu0
        %2412 = vrot.lane.b32.xlu0 %v1750, 80
        %v2413 = vpop.permute.xlu0 %2412
        %2414 = vrot.lane.b32.xlu0 %v1751, 80
        %v2415 = vpop.permute.xlu0 %2414
        %2416 = vrot.lane.b32.xlu0 %v1752, 80
        %v2417 = vpop.permute.xlu0 %2416
        %2418 = vrot.lane.b32.xlu0 %v1753, 80
        %v2419 = vpop.permute.xlu0 %2418
        %2420 = vrot.lane.b32.xlu0 %v1750, 16
        %v2421 = vpop.permute.xlu0 %2420
        %2422 = vrot.lane.b32.xlu0 %v1751, 16
        %v2423 = vpop.permute.xlu0 %2422
        %2424 = vrot.lane.b32.xlu0 %v1752, 16
        %v2425 = vpop.permute.xlu0 %2424
        %2426 = vrot.lane.b32.xlu0 %v1753, 16
        %v2427 = vpop.permute.xlu0 %2426
        %v2429 = vsel %vm763, %v2413, 0
        %v2432 = vsel %vm763, %v2415, 0
        %v2435 = vsel %vm763, %v2417, 0
        %v2438 = vsel %vm763, %v2419, 0
        %v2441 = vsel %vm763, %v2421, 0
        %v2444 = vsel %vm763, %v2423, 0
        %v2447 = vsel %vm763, %v2425, 0
        %v2450 = vsel %vm763, %v2427, 0
        %2452 = vmatpush.bf16.xpose.msra.mxu0 0
        %2453 = vmatpush.bf16.xpose.msra.mxu0 0
        %2454 = vmatpush.bf16.xpose.msra.mxu0 0
        %2455 = vmatpush.bf16.xpose.msra.mxu0 0
        %2456 = vmatpush.bf16.xpose.msra.mxu0 %v2450
        %2457 = vmatpush.bf16.xpose.msra.mxu0 %v2447
        %2458 = vmatpush.bf16.xpose.msra.mxu0 %v2444
        %2459 = vmatpush.bf16.xpose.msra.mxu0 %v2441
        %2460 = vmatmul.bf16.gmra.mxu0 %v2429
        %v2461 = vpop.f32.mrf.mxu0
        %v2462 = vadd.f32 0.0, %v2461
        %v2463 = vpop.f32.mrf.mxu0
        %v2464 = vadd.f32 0.0, %v2463
        %2465 = vmatmul.bf16.gmra.mxu0 %v2432
        %v2466 = vpop.f32.mrf.mxu0
        %v2467 = vadd.f32 0.0, %v2466
        %v2468 = vpop.f32.mrf.mxu0
        %v2469 = vadd.f32 0.0, %v2468
        %2470 = vmatmul.bf16.gmra.mxu0 %v2435
        %v2471 = vpop.f32.mrf.mxu0
        %v2472 = vadd.f32 0.0, %v2471
        %v2473 = vpop.f32.mrf.mxu0
        %v2474 = vadd.f32 0.0, %v2473
        %2475 = vmatmul.bf16.gmra.mxu0 %v2438
        %v2476 = vpop.f32.mrf.mxu0
        %v2477 = vadd.f32 0.0, %v2476
        %v2478 = vpop.f32.mrf.mxu0
        %v2479 = vadd.f32 0.0, %v2478
        %2480 = vdwg.mxu0
        %v2481 = vmul.f32 %v2462, 0.25
        %v2482 = vmul.f32 %v2464, 0.25
        %v2483 = vmul.f32 %v2467, 0.25
        %v2484 = vmul.f32 %v2469, 0.25
        %v2485 = vmul.f32 %v2472, 0.25
        %v2486 = vmul.f32 %v2474, 0.25
        %v2487 = vmul.f32 %v2477, 0.25
        %v2488 = vmul.f32 %v2479, 0.25
        %v2489 = vsel %vm620, %v2481, -inf
        %2490 = vmax.xlane.f32.xlu0 %v2489
        %v2491 = vpop.xlane.xlu0 %2490
        %v2492 = vsel %vm620, %v2482, -inf
        %2493 = vmax.xlane.f32.xlu0 %v2492
        %v2494 = vpop.xlane.xlu0 %2493
        %v2495 = vsel %vm620, %v2483, -inf
        %2496 = vmax.xlane.f32.xlu0 %v2495
        %v2497 = vpop.xlane.xlu0 %2496
        %v2498 = vsel %vm620, %v2484, -inf
        %2499 = vmax.xlane.f32.xlu0 %v2498
        %v2500 = vpop.xlane.xlu0 %2499
        %v2501 = vsel %vm620, %v2485, -inf
        %2502 = vmax.xlane.f32.xlu0 %v2501
        %v2503 = vpop.xlane.xlu0 %2502
        %v2504 = vsel %vm620, %v2486, -inf
        %2505 = vmax.xlane.f32.xlu0 %v2504
        %v2506 = vpop.xlane.xlu0 %2505
        %v2507 = vsel %vm620, %v2487, -inf
        %2508 = vmax.xlane.f32.xlu0 %v2507
        %v2509 = vpop.xlane.xlu0 %2508
        %v2510 = vsel %vm620, %v2488, -inf
        %2511 = vmax.xlane.f32.xlu0 %v2510
        %v2512 = vpop.xlane.xlu0 %2511
        %v2513 = vsub.f32 %v2481, %v2491
        %v2514 = vsub.f32 %v2482, %v2494
        %v2515 = vsub.f32 %v2483, %v2497
        %v2516 = vsub.f32 %v2484, %v2500
        %v2517 = vsub.f32 %v2485, %v2503
        %v2518 = vsub.f32 %v2486, %v2506
        %v2519 = vsub.f32 %v2487, %v2509
        %v2520 = vsub.f32 %v2488, %v2512
        %v2521 = vmul.f32 %v2513, 1.442695
        %v2522 = vpow.pop %v2521
        %v2523 = vmul.f32 %v2514, 1.442695
        %v2524 = vpow.pop %v2523
        %v2525 = vmul.f32 %v2515, 1.442695
        %v2526 = vpow.pop %v2525
        %v2527 = vmul.f32 %v2516, 1.442695
        %v2528 = vpow.pop %v2527
        %v2529 = vmul.f32 %v2517, 1.442695
        %v2530 = vpow.pop %v2529
        %v2531 = vmul.f32 %v2518, 1.442695
        %v2532 = vpow.pop %v2531
        %v2533 = vmul.f32 %v2519, 1.442695
        %v2534 = vpow.pop %v2533
        %v2535 = vmul.f32 %v2520, 1.442695
        %v2536 = vpow.pop %v2535
        %v2537 = vsel %vm620, %v2522, 0.0
        %2538 = vadd.xlane.f32.xlu0 %v2537
        %v2539 = vpop.xlane.xlu0 %2538
        %v2540 = vsel %vm620, %v2524, 0.0
        %2541 = vadd.xlane.f32.xlu0 %v2540
        %v2542 = vpop.xlane.xlu0 %2541
        %v2543 = vsel %vm620, %v2526, 0.0
        %2544 = vadd.xlane.f32.xlu0 %v2543
        %v2545 = vpop.xlane.xlu0 %2544
        %v2546 = vsel %vm620, %v2528, 0.0
        %2547 = vadd.xlane.f32.xlu0 %v2546
        %v2548 = vpop.xlane.xlu0 %2547
        %v2549 = vsel %vm620, %v2530, 0.0
        %2550 = vadd.xlane.f32.xlu0 %v2549
        %v2551 = vpop.xlane.xlu0 %2550
        %v2552 = vsel %vm620, %v2532, 0.0
        %2553 = vadd.xlane.f32.xlu0 %v2552
        %v2554 = vpop.xlane.xlu0 %2553
        %v2555 = vsel %vm620, %v2534, 0.0
        %2556 = vadd.xlane.f32.xlu0 %v2555
        %v2557 = vpop.xlane.xlu0 %2556
        %v2558 = vsel %vm620, %v2536, 0.0
        %2559 = vadd.xlane.f32.xlu0 %v2558
        %v2560 = vpop.xlane.xlu0 %2559
        %v2561 = vrcp.pop %v2539
        %v2562 = vrcp.pop %v2542
        %v2563 = vrcp.pop %v2545
        %v2564 = vrcp.pop %v2548
        %v2565 = vrcp.pop %v2551
        %v2566 = vrcp.pop %v2554
        %v2567 = vrcp.pop %v2557
        %v2568 = vrcp.pop %v2560
        %v2569 = vmul.f32 %v2522, %v2561
        %v2570 = vmul.f32 %v2524, %v2562
        %v2571 = vmul.f32 %v2526, %v2563
        %v2572 = vmul.f32 %v2528, %v2564
        %v2573 = vmul.f32 %v2530, %v2565
        %v2574 = vmul.f32 %v2532, %v2566
        %v2575 = vmul.f32 %v2534, %v2567
        %v2576 = vmul.f32 %v2536, %v2568
        %v2577 = vpack.c.bf16 %v2570, %v2569
        %v2578 = vpack.c.bf16 %v2572, %v2571
        %v2579 = vpack.c.bf16 %v2574, %v2573
        %v2580 = vpack.c.bf16 %v2576, %v2575
        %2581 = vrot.lane.b32.xlu0 %v1754, 80
        %v2582 = vpop.permute.xlu0 %2581
        %2583 = vrot.lane.b32.xlu0 %v1755, 80
        %v2584 = vpop.permute.xlu0 %2583
        %2585 = vrot.lane.b32.xlu0 %v1756, 80
        %v2586 = vpop.permute.xlu0 %2585
        %2587 = vrot.lane.b32.xlu0 %v1757, 80
        %v2588 = vpop.permute.xlu0 %2587
        %v2594 = vsel %vm620, %v2577, 0
        %v2597 = vsel %vm620, %v2578, 0
        %v2600 = vsel %vm620, %v2579, 0
        %v2603 = vsel %vm620, %v2580, 0
        %2605 = vmatpush.bf16.msra.mxu0 0
        %2606 = vmatpush.bf16.msra.mxu0 0
        %2607 = vmatpush.bf16.msra.mxu0 0
        %2608 = vmatpush.bf16.msra.mxu0 0
        %2609 = vmatpush.bf16.msra.mxu0 %v2588
        %2610 = vmatpush.bf16.msra.mxu0 %v2586
        %2611 = vmatpush.bf16.msra.mxu0 %v2584
        %2612 = vmatpush.bf16.msra.mxu0 %v2582
        %2613 = vmatmul.bf16.gmra.mxu0 %v2594
        %v2614 = vpop.f32.mrf.mxu0
        %v2615 = vadd.f32 0.0, %v2614
        %v2616 = vpop.f32.mrf.mxu0
        %v2617 = vadd.f32 0.0, %v2616
        %2618 = vmatmul.bf16.gmra.mxu0 %v2597
        %v2619 = vpop.f32.mrf.mxu0
        %v2620 = vadd.f32 0.0, %v2619
        %v2621 = vpop.f32.mrf.mxu0
        %v2622 = vadd.f32 0.0, %v2621
        %2623 = vmatmul.bf16.gmra.mxu0 %v2600
        %v2624 = vpop.f32.mrf.mxu0
        %v2625 = vadd.f32 0.0, %v2624
        %v2626 = vpop.f32.mrf.mxu0
        %v2627 = vadd.f32 0.0, %v2626
        %2628 = vmatmul.bf16.gmra.mxu0 %v2603
        %v2629 = vpop.f32.mrf.mxu0
        %v2630 = vadd.f32 0.0, %v2629
        %v2631 = vpop.f32.mrf.mxu0
        %v2632 = vadd.f32 0.0, %v2631
        %2633 = vdwg.mxu0
        %2642 = vrot.lane.b32.xlu0 %v2171, 16
        %v2643 = vpop.permute.xlu0 %2642
        %2644 = vrot.lane.b32.xlu0 %v2173, 16
        %v2645 = vpop.permute.xlu0 %2644
        %2646 = vrot.lane.b32.xlu0 %v2176, 16
        %v2647 = vpop.permute.xlu0 %2646
        %2648 = vrot.lane.b32.xlu0 %v2178, 16
        %v2649 = vpop.permute.xlu0 %2648
        %2650 = vrot.lane.b32.xlu0 %v2181, 16
        %v2651 = vpop.permute.xlu0 %2650
        %2652 = vrot.lane.b32.xlu0 %v2183, 16
        %v2653 = vpop.permute.xlu0 %2652
        %2654 = vrot.lane.b32.xlu0 %v2186, 16
        %v2655 = vpop.permute.xlu0 %2654
        %2656 = vrot.lane.b32.xlu0 %v2188, 16
        %v2657 = vpop.permute.xlu0 %2656
        %2674 = vrot.lane.b32.xlu0 %v2393, 32
        %v2675 = vpop.permute.xlu0 %2674
        %2676 = vrot.lane.b32.xlu0 %v2395, 32
        %v2677 = vpop.permute.xlu0 %2676
        %2678 = vrot.lane.b32.xlu0 %v2398, 32
        %v2679 = vpop.permute.xlu0 %2678
        %2680 = vrot.lane.b32.xlu0 %v2400, 32
        %v2681 = vpop.permute.xlu0 %2680
        %2682 = vrot.lane.b32.xlu0 %v2403, 32
        %v2683 = vpop.permute.xlu0 %2682
        %2684 = vrot.lane.b32.xlu0 %v2405, 32
        %v2685 = vpop.permute.xlu0 %2684
        %2686 = vrot.lane.b32.xlu0 %v2408, 32
        %v2687 = vpop.permute.xlu0 %2686
        %2688 = vrot.lane.b32.xlu0 %v2410, 32
        %v2689 = vpop.permute.xlu0 %2688
        %2706 = vrot.lane.b32.xlu0 %v2615, 48
        %v2707 = vpop.permute.xlu0 %2706
        %2708 = vrot.lane.b32.xlu0 %v2617, 48
        %v2709 = vpop.permute.xlu0 %2708
        %2710 = vrot.lane.b32.xlu0 %v2620, 48
        %v2711 = vpop.permute.xlu0 %2710
        %2712 = vrot.lane.b32.xlu0 %v2622, 48
        %v2713 = vpop.permute.xlu0 %2712
        %2714 = vrot.lane.b32.xlu0 %v2625, 48
        %v2715 = vpop.permute.xlu0 %2714
        %2716 = vrot.lane.b32.xlu0 %v2627, 48
        %v2717 = vpop.permute.xlu0 %2716
        %2718 = vrot.lane.b32.xlu0 %v2630, 48
        %v2719 = vpop.permute.xlu0 %2718
        %2720 = vrot.lane.b32.xlu0 %v2632, 48
        %v2721 = vpop.permute.xlu0 %2720
        %v2730 = vsel %vm763, %v1945, %v2643
        %v2731 = vsel %vm763, %v1947, %v2645
        %v2732 = vsel %vm763, %v1950, %v2647
        %v2733 = vsel %vm763, %v1952, %v2649
        %v2734 = vsel %vm763, %v1955, %v2651
        %v2735 = vsel %vm763, %v1957, %v2653
        %v2736 = vsel %vm763, %v1960, %v2655
        %v2737 = vsel %vm763, %v1962, %v2657
        %v2738 = vsel %vm1732, %v2730, %v2675
        %v2739 = vsel %vm1732, %v2731, %v2677
        %v2740 = vsel %vm1732, %v2732, %v2679
        %v2741 = vsel %vm1732, %v2733, %v2681
        %v2742 = vsel %vm1732, %v2734, %v2683
        %v2743 = vsel %vm1732, %v2735, %v2685
        %v2744 = vsel %vm1732, %v2736, %v2687
        %v2745 = vsel %vm1732, %v2737, %v2689
        %v2746 = vsel %vm1741, %v2738, %v2707
        %v2747 = vsel %vm1741, %v2739, %v2709
        %v2748 = vsel %vm1741, %v2740, %v2711
        %v2749 = vsel %vm1741, %v2741, %v2713
        %v2750 = vsel %vm1741, %v2742, %v2715
        %v2751 = vsel %vm1741, %v2743, %v2717
        %v2752 = vsel %vm1741, %v2744, %v2719
        %v2753 = vsel %vm1741, %v2745, %v2721
        %v2754 = vld [vmem:[%s464] sm:$0x1]
        %v2755 = vld [vmem:[%s464 + $0x1] sm:$0x1]
        %v2756 = vld [vmem:[%s464 + $0x2] sm:$0x1]
        %v2757 = vld [vmem:[%s464 + $0x3] sm:$0x1]
        %v2758 = vld [vmem:[%s464 + $0x4] sm:$0x1]
        %v2759 = vld [vmem:[%s464 + $0x5] sm:$0x1]
        %v2760 = vpack.c.bf16 %v1743, %v1742
        %v2761 = vpack.c.bf16 %v1745, %v1744
        %v2762 = vpack.c.bf16 %v1747, %v1746
        %v2763 = vpack.c.bf16 %v1749, %v1748
        %v2764 = vpack.c.bf16 %v2747, %v2746
        %v2765 = vpack.c.bf16 %v2749, %v2748
        %v2766 = vpack.c.bf16 %v2751, %v2750
        %v2767 = vpack.c.bf16 %v2753, %v2752
        %v2768 = vld [vmem:[%s460] sm:$0xf]
        %v2769 = vld [vmem:[%s460 + $0x4] sm:$0xf]
        %v2770 = vld [vmem:[%s460 + $0x8] sm:$0xf]
        %v2771 = vld [vmem:[%s460 + $0xc] sm:$0xf]
        %v2772 = vld [vmem:[%s460 + $0x10] sm:$0xf]
        %v2773 = vld [vmem:[%s460 + $0x14] sm:$0xf]
        %v2774 = vld [vmem:[%s460 + $0x18] sm:$0xf]
        %v2775 = vld [vmem:[%s460 + $0x1c] sm:$0xf]
        %v2776 = vperm.slane %v2754, 0
        %v2785 = vunpack.c.l.b16 %v2768
        %v2786 = vunpack.c.l.b16 %v2769
        %v2787 = vunpack.c.l.b16 %v2770
        %v2788 = vunpack.c.l.b16 %v2771
        %v2789 = vunpack.c.l.b16 %v2772
        %v2790 = vunpack.c.l.b16 %v2773
        %v2791 = vunpack.c.l.b16 %v2774
        %v2792 = vunpack.c.l.b16 %v2775
        %v2793 = vpack.c.b16 %v2786, %v2785
        %v2794 = vpack.c.b16 %v2788, %v2787
        %v2795 = vpack.c.b16 %v2790, %v2789
        %v2796 = vpack.c.b16 %v2792, %v2791
        %v2802 = vsel %vm620, %v2760, 0
        %v2805 = vsel %vm620, %v2761, 0
        %v2808 = vsel %vm620, %v2762, 0
        %v2811 = vsel %vm620, %v2763, 0
        %v2814 = vsel %vm620, %v2764, 0
        %v2817 = vsel %vm620, %v2765, 0
        %v2820 = vsel %vm620, %v2766, 0
        %v2823 = vsel %vm620, %v2767, 0
        %2825 = vmatpush.bf16.msra.mxu0 0
        %2826 = vmatpush.bf16.msra.mxu0 0
        %2827 = vmatpush.bf16.msra.mxu0 0
        %2828 = vmatpush.bf16.msra.mxu0 0
        %2829 = vmatpush.bf16.msra.mxu0 %v2796
        %2830 = vmatpush.bf16.msra.mxu0 %v2795
        %2831 = vmatpush.bf16.msra.mxu0 %v2794
        %2832 = vmatpush.bf16.msra.mxu0 %v2793
        %2833 = vmatmul.bf16.gmra.mxu0 %v2802
        %v2834 = vpop.f32.mrf.mxu0
        %v2835 = vadd.f32 %v2776, %v2834
        %v2836 = vpop.f32.mrf.mxu0
        %v2837 = vadd.f32 %v2776, %v2836
        %2838 = vmatmul.bf16.gmra.mxu0 %v2805
        %v2839 = vpop.f32.mrf.mxu0
        %v2840 = vadd.f32 %v2776, %v2839
        %v2841 = vpop.f32.mrf.mxu0
        %v2842 = vadd.f32 %v2776, %v2841
        %2843 = vmatmul.bf16.gmra.mxu0 %v2808
        %v2844 = vpop.f32.mrf.mxu0
        %v2845 = vadd.f32 %v2776, %v2844
        %v2846 = vpop.f32.mrf.mxu0
        %v2847 = vadd.f32 %v2776, %v2846
        %2848 = vmatmul.bf16.gmra.mxu0 %v2811
        %v2849 = vpop.f32.mrf.mxu0
        %v2850 = vadd.f32 %v2776, %v2849
        %v2851 = vpop.f32.mrf.mxu0
        %v2852 = vadd.f32 %v2776, %v2851
        %2853 = vmatmul.bf16.gmra.mxu0 %v2814
        %v2854 = vpop.f32.mrf.mxu0
        %v2855 = vadd.f32 %v2776, %v2854
        %v2856 = vpop.f32.mrf.mxu0
        %v2857 = vadd.f32 %v2776, %v2856
        %2858 = vmatmul.bf16.gmra.mxu0 %v2817
        %v2859 = vpop.f32.mrf.mxu0
        %v2860 = vadd.f32 %v2776, %v2859
        %v2861 = vpop.f32.mrf.mxu0
        %v2862 = vadd.f32 %v2776, %v2861
        %2863 = vmatmul.bf16.gmra.mxu0 %v2820
        %v2864 = vpop.f32.mrf.mxu0
        %v2865 = vadd.f32 %v2776, %v2864
        %v2866 = vpop.f32.mrf.mxu0
        %v2867 = vadd.f32 %v2776, %v2866
        %2868 = vmatmul.bf16.gmra.mxu0 %v2823
        %v2869 = vpop.f32.mrf.mxu0
        %v2870 = vadd.f32 %v2776, %v2869
        %v2871 = vpop.f32.mrf.mxu0
        %v2872 = vadd.f32 %v2776, %v2871
        %2873 = vdwg.mxu0
        %v2874 = vadd.f32 %v542, %v2835
        %v2875 = vadd.f32 %v543, %v2837
        %v2876 = vadd.f32 %v544, %v2840
        %v2877 = vadd.f32 %v545, %v2842
        %v2878 = vadd.f32 %v546, %v2845
        %v2879 = vadd.f32 %v547, %v2847
        %v2880 = vadd.f32 %v548, %v2850
        %v2881 = vadd.f32 %v549, %v2852
        %v2882 = vadd.f32 %v550, %v2855
        %v2883 = vadd.f32 %v551, %v2857
        %v2884 = vadd.f32 %v552, %v2860
        %v2885 = vadd.f32 %v553, %v2862
        %v2886 = vadd.f32 %v554, %v2865
        %v2887 = vadd.f32 %v555, %v2867
        %v2888 = vadd.f32 %v556, %v2870
        %v2889 = vadd.f32 %v557, %v2872
        %v2890 = vsel %vm620, %v2874, 0.0
        %2891 = vadd.xlane.f32.xlu0 %v2890
        %v2892 = vpop.xlane.xlu0 %2891
        %v2893 = vsel %vm620, %v2875, 0.0
        %2894 = vadd.xlane.f32.xlu0 %v2893
        %v2895 = vpop.xlane.xlu0 %2894
        %v2896 = vsel %vm620, %v2876, 0.0
        %2897 = vadd.xlane.f32.xlu0 %v2896
        %v2898 = vpop.xlane.xlu0 %2897
        %v2899 = vsel %vm620, %v2877, 0.0
        %2900 = vadd.xlane.f32.xlu0 %v2899
        %v2901 = vpop.xlane.xlu0 %2900
        %v2902 = vsel %vm620, %v2878, 0.0
        %2903 = vadd.xlane.f32.xlu0 %v2902
        %v2904 = vpop.xlane.xlu0 %2903
        %v2905 = vsel %vm620, %v2879, 0.0
        %2906 = vadd.xlane.f32.xlu0 %v2905
        %v2907 = vpop.xlane.xlu0 %2906
        %v2908 = vsel %vm620, %v2880, 0.0
        %2909 = vadd.xlane.f32.xlu0 %v2908
        %v2910 = vpop.xlane.xlu0 %2909
        %v2911 = vsel %vm620, %v2881, 0.0
        %2912 = vadd.xlane.f32.xlu0 %v2911
        %v2913 = vpop.xlane.xlu0 %2912
        %v2914 = vsel %vm620, %v2882, 0.0
        %2915 = vadd.xlane.f32.xlu0 %v2914
        %v2916 = vpop.xlane.xlu0 %2915
        %v2917 = vsel %vm620, %v2883, 0.0
        %2918 = vadd.xlane.f32.xlu0 %v2917
        %v2919 = vpop.xlane.xlu0 %2918
        %v2920 = vsel %vm620, %v2884, 0.0
        %2921 = vadd.xlane.f32.xlu0 %v2920
        %v2922 = vpop.xlane.xlu0 %2921
        %v2923 = vsel %vm620, %v2885, 0.0
        %2924 = vadd.xlane.f32.xlu0 %v2923
        %v2925 = vpop.xlane.xlu0 %2924
        %v2926 = vsel %vm620, %v2886, 0.0
        %2927 = vadd.xlane.f32.xlu0 %v2926
        %v2928 = vpop.xlane.xlu0 %2927
        %v2929 = vsel %vm620, %v2887, 0.0
        %2930 = vadd.xlane.f32.xlu0 %v2929
        %v2931 = vpop.xlane.xlu0 %2930
        %v2932 = vsel %vm620, %v2888, 0.0
        %2933 = vadd.xlane.f32.xlu0 %v2932
        %v2934 = vpop.xlane.xlu0 %2933
        %v2935 = vsel %vm620, %v2889, 0.0
        %2936 = vadd.xlane.f32.xlu0 %v2935
        %v2937 = vpop.xlane.xlu0 %2936
        %v2938 = vrcp.pop 64.0
        %v2939 = vmul.f32 64.0, %v2938
        %v2940 = vsub.f32 1.0, %v2939
        %v2941 = vmul.f32 %v2938, %v2940
        %v2942 = vadd.f32 %v2938, %v2941
        %vm2943 = vweird.f32 %v2938
        %v2944 = vsel %vm2943, %v2938, %v2942
        %v2945 = vmul.f32 %v2892, %v2944
        %v2946 = vmul.f32 %v2895, %v2944
        %v2947 = vmul.f32 %v2898, %v2944
        %v2948 = vmul.f32 %v2901, %v2944
        %v2949 = vmul.f32 %v2904, %v2944
        %v2950 = vmul.f32 %v2907, %v2944
        %v2951 = vmul.f32 %v2910, %v2944
        %v2952 = vmul.f32 %v2913, %v2944
        %v2953 = vmul.f32 %v2916, %v2944
        %v2954 = vmul.f32 %v2919, %v2944
        %v2955 = vmul.f32 %v2922, %v2944
        %v2956 = vmul.f32 %v2925, %v2944
        %v2957 = vmul.f32 %v2928, %v2944
        %v2958 = vmul.f32 %v2931, %v2944
        %v2959 = vmul.f32 %v2934, %v2944
        %v2960 = vmul.f32 %v2937, %v2944
        %v2961 = vsub.f32 %v2874, %v2945
        %v2962 = vsub.f32 %v2875, %v2946
        %v2963 = vsub.f32 %v2876, %v2947
        %v2964 = vsub.f32 %v2877, %v2948
        %v2965 = vsub.f32 %v2878, %v2949
        %v2966 = vsub.f32 %v2879, %v2950
        %v2967 = vsub.f32 %v2880, %v2951
        %v2968 = vsub.f32 %v2881, %v2952
        %v2969 = vsub.f32 %v2882, %v2953
        %v2970 = vsub.f32 %v2883, %v2954
        %v2971 = vsub.f32 %v2884, %v2955
        %v2972 = vsub.f32 %v2885, %v2956
        %v2973 = vsub.f32 %v2886, %v2957
        %v2974 = vsub.f32 %v2887, %v2958
        %v2975 = vsub.f32 %v2888, %v2959
        %v2976 = vsub.f32 %v2889, %v2960
        %v2977 = vmul.f32 %v2961, %v2961
        %v2978 = vmul.f32 %v2962, %v2962
        %v2979 = vmul.f32 %v2963, %v2963
        %v2980 = vmul.f32 %v2964, %v2964
        %v2981 = vmul.f32 %v2965, %v2965
        %v2982 = vmul.f32 %v2966, %v2966
        %v2983 = vmul.f32 %v2967, %v2967
        %v2984 = vmul.f32 %v2968, %v2968
        %v2985 = vmul.f32 %v2969, %v2969
        %v2986 = vmul.f32 %v2970, %v2970
        %v2987 = vmul.f32 %v2971, %v2971
        %v2988 = vmul.f32 %v2972, %v2972
        %v2989 = vmul.f32 %v2973, %v2973
        %v2990 = vmul.f32 %v2974, %v2974
        %v2991 = vmul.f32 %v2975, %v2975
        %v2992 = vmul.f32 %v2976, %v2976
        %v2993 = vsel %vm620, %v2977, 0.0
        %2994 = vadd.xlane.f32.xlu0 %v2993
        %v2995 = vpop.xlane.xlu0 %2994
        %v2996 = vsel %vm620, %v2978, 0.0
        %2997 = vadd.xlane.f32.xlu0 %v2996
        %v2998 = vpop.xlane.xlu0 %2997
        %v2999 = vsel %vm620, %v2979, 0.0
        %3000 = vadd.xlane.f32.xlu0 %v2999
        %v3001 = vpop.xlane.xlu0 %3000
        %v3002 = vsel %vm620, %v2980, 0.0
        %3003 = vadd.xlane.f32.xlu0 %v3002
        %v3004 = vpop.xlane.xlu0 %3003
        %v3005 = vsel %vm620, %v2981, 0.0
        %3006 = vadd.xlane.f32.xlu0 %v3005
        %v3007 = vpop.xlane.xlu0 %3006
        %v3008 = vsel %vm620, %v2982, 0.0
        %3009 = vadd.xlane.f32.xlu0 %v3008
        %v3010 = vpop.xlane.xlu0 %3009
        %v3011 = vsel %vm620, %v2983, 0.0
        %3012 = vadd.xlane.f32.xlu0 %v3011
        %v3013 = vpop.xlane.xlu0 %3012
        %v3014 = vsel %vm620, %v2984, 0.0
        %3015 = vadd.xlane.f32.xlu0 %v3014
        %v3016 = vpop.xlane.xlu0 %3015
        %v3017 = vsel %vm620, %v2985, 0.0
        %3018 = vadd.xlane.f32.xlu0 %v3017
        %v3019 = vpop.xlane.xlu0 %3018
        %v3020 = vsel %vm620, %v2986, 0.0
        %3021 = vadd.xlane.f32.xlu0 %v3020
        %v3022 = vpop.xlane.xlu0 %3021
        %v3023 = vsel %vm620, %v2987, 0.0
        %3024 = vadd.xlane.f32.xlu0 %v3023
        %v3025 = vpop.xlane.xlu0 %3024
        %v3026 = vsel %vm620, %v2988, 0.0
        %3027 = vadd.xlane.f32.xlu0 %v3026
        %v3028 = vpop.xlane.xlu0 %3027
        %v3029 = vsel %vm620, %v2989, 0.0
        %3030 = vadd.xlane.f32.xlu0 %v3029
        %v3031 = vpop.xlane.xlu0 %3030
        %v3032 = vsel %vm620, %v2990, 0.0
        %3033 = vadd.xlane.f32.xlu0 %v3032
        %v3034 = vpop.xlane.xlu0 %3033
        %v3035 = vsel %vm620, %v2991, 0.0
        %3036 = vadd.xlane.f32.xlu0 %v3035
        %v3037 = vpop.xlane.xlu0 %3036
        %v3038 = vsel %vm620, %v2992, 0.0
        %3039 = vadd.xlane.f32.xlu0 %v3038
        %v3040 = vpop.xlane.xlu0 %3039
        %v3041 = vmul.f32 %v2995, %v2944
        %v3042 = vmul.f32 %v2998, %v2944
        %v3043 = vmul.f32 %v3001, %v2944
        %v3044 = vmul.f32 %v3004, %v2944
        %v3045 = vmul.f32 %v3007, %v2944
        %v3046 = vmul.f32 %v3010, %v2944
        %v3047 = vmul.f32 %v3013, %v2944
        %v3048 = vmul.f32 %v3016, %v2944
        %v3049 = vmul.f32 %v3019, %v2944
        %v3050 = vmul.f32 %v3022, %v2944
        %v3051 = vmul.f32 %v3025, %v2944
        %v3052 = vmul.f32 %v3028, %v2944
        %v3053 = vmul.f32 %v3031, %v2944
        %v3054 = vmul.f32 %v3034, %v2944
        %v3055 = vmul.f32 %v3037, %v2944
        %v3056 = vmul.f32 %v3040, %v2944
        %v3057 = vadd.f32 %v3041, 1e-05
        %v3058 = vadd.f32 %v3042, 1e-05
        %v3059 = vadd.f32 %v3043, 1e-05
        %v3060 = vadd.f32 %v3044, 1e-05
        %v3061 = vadd.f32 %v3045, 1e-05
        %v3062 = vadd.f32 %v3046, 1e-05
        %v3063 = vadd.f32 %v3047, 1e-05
        %v3064 = vadd.f32 %v3048, 1e-05
        %v3065 = vadd.f32 %v3049, 1e-05
        %v3066 = vadd.f32 %v3050, 1e-05
        %v3067 = vadd.f32 %v3051, 1e-05
        %v3068 = vadd.f32 %v3052, 1e-05
        %v3069 = vadd.f32 %v3053, 1e-05
        %v3070 = vadd.f32 %v3054, 1e-05
        %v3071 = vadd.f32 %v3055, 1e-05
        %v3072 = vadd.f32 %v3056, 1e-05
        %v3073 = vrsqrt.pop %v3057
        %v3074 = vmul.f32 %v3073, %v3057
        %v3075 = vmul.f32 %v3074, %v3073
        %v3076 = vmul.f32 0.5, %v3075
        %v3077 = vsub.f32 1.5, %v3076
        %v3078 = vmul.f32 %v3073, %v3077
        %vm3079 = vweird.f32 %v3057
        %vm3080 = vweird.f32 %v3073
        %vm3081 = vmor %vm3079, %vm3080
        %v3082 = vsel %vm3081, %v3073, %v3078
        %v3083 = vrsqrt.pop %v3058
        %v3084 = vmul.f32 %v3083, %v3058
        %v3085 = vmul.f32 %v3084, %v3083
        %v3086 = vmul.f32 0.5, %v3085
        %v3087 = vsub.f32 1.5, %v3086
        %v3088 = vmul.f32 %v3083, %v3087
        %vm3089 = vweird.f32 %v3058
        %vm3090 = vweird.f32 %v3083
        %vm3091 = vmor %vm3089, %vm3090
        %v3092 = vsel %vm3091, %v3083, %v3088
        %v3093 = vrsqrt.pop %v3059
        %v3094 = vmul.f32 %v3093, %v3059
        %v3095 = vmul.f32 %v3094, %v3093
        %v3096 = vmul.f32 0.5, %v3095
        %v3097 = vsub.f32 1.5, %v3096
        %v3098 = vmul.f32 %v3093, %v3097
        %vm3099 = vweird.f32 %v3059
        %vm3100 = vweird.f32 %v3093
        %vm3101 = vmor %vm3099, %vm3100
        %v3102 = vsel %vm3101, %v3093, %v3098
        %v3103 = vrsqrt.pop %v3060
        %v3104 = vmul.f32 %v3103, %v3060
        %v3105 = vmul.f32 %v3104, %v3103
        %v3106 = vmul.f32 0.5, %v3105
        %v3107 = vsub.f32 1.5, %v3106
        %v3108 = vmul.f32 %v3103, %v3107
        %vm3109 = vweird.f32 %v3060
        %vm3110 = vweird.f32 %v3103
        %vm3111 = vmor %vm3109, %vm3110
        %v3112 = vsel %vm3111, %v3103, %v3108
        %v3113 = vrsqrt.pop %v3061
        %v3114 = vmul.f32 %v3113, %v3061
        %v3115 = vmul.f32 %v3114, %v3113
        %v3116 = vmul.f32 0.5, %v3115
        %v3117 = vsub.f32 1.5, %v3116
        %v3118 = vmul.f32 %v3113, %v3117
        %vm3119 = vweird.f32 %v3061
        %vm3120 = vweird.f32 %v3113
        %vm3121 = vmor %vm3119, %vm3120
        %v3122 = vsel %vm3121, %v3113, %v3118
        %v3123 = vrsqrt.pop %v3062
        %v3124 = vmul.f32 %v3123, %v3062
        %v3125 = vmul.f32 %v3124, %v3123
        %v3126 = vmul.f32 0.5, %v3125
        %v3127 = vsub.f32 1.5, %v3126
        %v3128 = vmul.f32 %v3123, %v3127
        %vm3129 = vweird.f32 %v3062
        %vm3130 = vweird.f32 %v3123
        %vm3131 = vmor %vm3129, %vm3130
        %v3132 = vsel %vm3131, %v3123, %v3128
        %v3133 = vrsqrt.pop %v3063
        %v3134 = vmul.f32 %v3133, %v3063
        %v3135 = vmul.f32 %v3134, %v3133
        %v3136 = vmul.f32 0.5, %v3135
        %v3137 = vsub.f32 1.5, %v3136
        %v3138 = vmul.f32 %v3133, %v3137
        %vm3139 = vweird.f32 %v3063
        %vm3140 = vweird.f32 %v3133
        %vm3141 = vmor %vm3139, %vm3140
        %v3142 = vsel %vm3141, %v3133, %v3138
        %v3143 = vrsqrt.pop %v3064
        %v3144 = vmul.f32 %v3143, %v3064
        %v3145 = vmul.f32 %v3144, %v3143
        %v3146 = vmul.f32 0.5, %v3145
        %v3147 = vsub.f32 1.5, %v3146
        %v3148 = vmul.f32 %v3143, %v3147
        %vm3149 = vweird.f32 %v3064
        %vm3150 = vweird.f32 %v3143
        %vm3151 = vmor %vm3149, %vm3150
        %v3152 = vsel %vm3151, %v3143, %v3148
        %v3153 = vrsqrt.pop %v3065
        %v3154 = vmul.f32 %v3153, %v3065
        %v3155 = vmul.f32 %v3154, %v3153
        %v3156 = vmul.f32 0.5, %v3155
        %v3157 = vsub.f32 1.5, %v3156
        %v3158 = vmul.f32 %v3153, %v3157
        %vm3159 = vweird.f32 %v3065
        %vm3160 = vweird.f32 %v3153
        %vm3161 = vmor %vm3159, %vm3160
        %v3162 = vsel %vm3161, %v3153, %v3158
        %v3163 = vrsqrt.pop %v3066
        %v3164 = vmul.f32 %v3163, %v3066
        %v3165 = vmul.f32 %v3164, %v3163
        %v3166 = vmul.f32 0.5, %v3165
        %v3167 = vsub.f32 1.5, %v3166
        %v3168 = vmul.f32 %v3163, %v3167
        %vm3169 = vweird.f32 %v3066
        %vm3170 = vweird.f32 %v3163
        %vm3171 = vmor %vm3169, %vm3170
        %v3172 = vsel %vm3171, %v3163, %v3168
        %v3173 = vrsqrt.pop %v3067
        %v3174 = vmul.f32 %v3173, %v3067
        %v3175 = vmul.f32 %v3174, %v3173
        %v3176 = vmul.f32 0.5, %v3175
        %v3177 = vsub.f32 1.5, %v3176
        %v3178 = vmul.f32 %v3173, %v3177
        %vm3179 = vweird.f32 %v3067
        %vm3180 = vweird.f32 %v3173
        %vm3181 = vmor %vm3179, %vm3180
        %v3182 = vsel %vm3181, %v3173, %v3178
        %v3183 = vrsqrt.pop %v3068
        %v3184 = vmul.f32 %v3183, %v3068
        %v3185 = vmul.f32 %v3184, %v3183
        %v3186 = vmul.f32 0.5, %v3185
        %v3187 = vsub.f32 1.5, %v3186
        %v3188 = vmul.f32 %v3183, %v3187
        %vm3189 = vweird.f32 %v3068
        %vm3190 = vweird.f32 %v3183
        %vm3191 = vmor %vm3189, %vm3190
        %v3192 = vsel %vm3191, %v3183, %v3188
        %v3193 = vrsqrt.pop %v3069
        %v3194 = vmul.f32 %v3193, %v3069
        %v3195 = vmul.f32 %v3194, %v3193
        %v3196 = vmul.f32 0.5, %v3195
        %v3197 = vsub.f32 1.5, %v3196
        %v3198 = vmul.f32 %v3193, %v3197
        %vm3199 = vweird.f32 %v3069
        %vm3200 = vweird.f32 %v3193
        %vm3201 = vmor %vm3199, %vm3200
        %v3202 = vsel %vm3201, %v3193, %v3198
        %v3203 = vrsqrt.pop %v3070
        %v3204 = vmul.f32 %v3203, %v3070
        %v3205 = vmul.f32 %v3204, %v3203
        %v3206 = vmul.f32 0.5, %v3205
        %v3207 = vsub.f32 1.5, %v3206
        %v3208 = vmul.f32 %v3203, %v3207
        %vm3209 = vweird.f32 %v3070
        %vm3210 = vweird.f32 %v3203
        %vm3211 = vmor %vm3209, %vm3210
        %v3212 = vsel %vm3211, %v3203, %v3208
        %v3213 = vrsqrt.pop %v3071
        %v3214 = vmul.f32 %v3213, %v3071
        %v3215 = vmul.f32 %v3214, %v3213
        %v3216 = vmul.f32 0.5, %v3215
        %v3217 = vsub.f32 1.5, %v3216
        %v3218 = vmul.f32 %v3213, %v3217
        %vm3219 = vweird.f32 %v3071
        %vm3220 = vweird.f32 %v3213
        %vm3221 = vmor %vm3219, %vm3220
        %v3222 = vsel %vm3221, %v3213, %v3218
        %v3223 = vrsqrt.pop %v3072
        %v3224 = vmul.f32 %v3223, %v3072
        %v3225 = vmul.f32 %v3224, %v3223
        %v3226 = vmul.f32 0.5, %v3225
        %v3227 = vsub.f32 1.5, %v3226
        %v3228 = vmul.f32 %v3223, %v3227
        %vm3229 = vweird.f32 %v3072
        %vm3230 = vweird.f32 %v3223
        %vm3231 = vmor %vm3229, %vm3230
        %v3232 = vsel %vm3231, %v3223, %v3228
        %v3233 = vmul.f32 %v2961, %v3082
        %v3234 = vmul.f32 %v2962, %v3092
        %v3235 = vmul.f32 %v2963, %v3102
        %v3236 = vmul.f32 %v2964, %v3112
        %v3237 = vmul.f32 %v2965, %v3122
        %v3238 = vmul.f32 %v2966, %v3132
        %v3239 = vmul.f32 %v2967, %v3142
        %v3240 = vmul.f32 %v2968, %v3152
        %v3241 = vmul.f32 %v2969, %v3162
        %v3242 = vmul.f32 %v2970, %v3172
        %v3243 = vmul.f32 %v2971, %v3182
        %v3244 = vmul.f32 %v2972, %v3192
        %v3245 = vmul.f32 %v2973, %v3202
        %v3246 = vmul.f32 %v2974, %v3212
        %v3247 = vmul.f32 %v2975, %v3222
        %v3248 = vmul.f32 %v2976, %v3232
        %v3249 = vperm.slane %v2756, 0
        %v3250 = vmul.f32 %v3233, %v3249
        %v3251 = vmul.f32 %v3234, %v3249
        %v3252 = vmul.f32 %v3235, %v3249
        %v3253 = vmul.f32 %v3236, %v3249
        %v3254 = vmul.f32 %v3237, %v3249
        %v3255 = vmul.f32 %v3238, %v3249
        %v3256 = vmul.f32 %v3239, %v3249
        %v3257 = vmul.f32 %v3240, %v3249
        %v3258 = vmul.f32 %v3241, %v3249
        %v3259 = vmul.f32 %v3242, %v3249
        %v3260 = vmul.f32 %v3243, %v3249
        %v3261 = vmul.f32 %v3244, %v3249
        %v3262 = vmul.f32 %v3245, %v3249
        %v3263 = vmul.f32 %v3246, %v3249
        %v3264 = vmul.f32 %v3247, %v3249
        %v3265 = vmul.f32 %v3248, %v3249
        %v3266 = vperm.slane %v2757, 0
        %v3267 = vadd.f32 %v3250, %v3266
        %v3268 = vadd.f32 %v3251, %v3266
        %v3269 = vadd.f32 %v3252, %v3266
        %v3270 = vadd.f32 %v3253, %v3266
        %v3271 = vadd.f32 %v3254, %v3266
        %v3272 = vadd.f32 %v3255, %v3266
        %v3273 = vadd.f32 %v3256, %v3266
        %v3274 = vadd.f32 %v3257, %v3266
        %v3275 = vadd.f32 %v3258, %v3266
        %v3276 = vadd.f32 %v3259, %v3266
        %v3277 = vadd.f32 %v3260, %v3266
        %v3278 = vadd.f32 %v3261, %v3266
        %v3279 = vadd.f32 %v3262, %v3266
        %v3280 = vadd.f32 %v3263, %v3266
        %v3281 = vadd.f32 %v3264, %v3266
        %v3282 = vadd.f32 %v3265, %v3266
        %v3283 = vpack.c.bf16 %v3268, %v3267
        %v3284 = vpack.c.bf16 %v3270, %v3269
        %v3285 = vpack.c.bf16 %v3272, %v3271
        %v3286 = vpack.c.bf16 %v3274, %v3273
        %v3287 = vpack.c.bf16 %v3276, %v3275
        %v3288 = vpack.c.bf16 %v3278, %v3277
        %v3289 = vpack.c.bf16 %v3280, %v3279
        %v3290 = vpack.c.bf16 %v3282, %v3281
        loop: start=0, step=1, limit=4
        $region61: #{tpu_custom_call.1} parent=55 // loop_pre_header
          _
        $region62: #{tpu_custom_call.1} parent=55 // loop_header
          %s3292 = sphi 0, %s3296
          %p3293 = scmp.ge.s32.totalorder %s3292, 4
          %v3297 = vphi 0.0, %v4707
          %v3298 = vphi 0.0, %v4708
          %v3299 = vphi 0.0, %v4709
          %v3300 = vphi 0.0, %v4710
          %v3301 = vphi 0.0, %v4711
          %v3302 = vphi 0.0, %v4712
          %v3303 = vphi 0.0, %v4713
          %v3304 = vphi 0.0, %v4714
          %v3305 = vphi 0.0, %v4715
          %v3306 = vphi 0.0, %v4716
          %v3307 = vphi 0.0, %v4717
          %v3308 = vphi 0.0, %v4718
          %v3309 = vphi 0.0, %v4719
          %v3310 = vphi 0.0, %v4720
          %v3311 = vphi 0.0, %v4721
          %v3312 = vphi 0.0, %v4722
        $region63: #{tpu_custom_call.1} parent=55 // loop_header_branch
          %3295 = sbr.rel (%p3293) target = $region67
        $region64: #{tpu_custom_call.1} parent=55 // loop_body
          %s3313 = smul.u32 %s3292, 32
          %s3314 = smul.addr %s3313, 4
          %s3315 = scalar_lea.vmem %s469, %s3314
          %v3316 = vld [vmem:[%s3315] sm:$0xff]
          %v3317 = vld [vmem:[%s3315 + $0x8] sm:$0xff]
          %v3318 = vld [vmem:[%s3315 + $0x10] sm:$0xff]
          %v3319 = vld [vmem:[%s3315 + $0x18] sm:$0xff]
          %v3320 = vld [vmem:[%s3315 + $0x20] sm:$0xff]
          %v3321 = vld [vmem:[%s3315 + $0x28] sm:$0xff]
          %v3322 = vld [vmem:[%s3315 + $0x30] sm:$0xff]
          %v3323 = vld [vmem:[%s3315 + $0x38] sm:$0xff]
          %v3324 = vld [vmem:[%s3315 + $0x40] sm:$0xff]
          %v3325 = vld [vmem:[%s3315 + $0x48] sm:$0xff]
          %v3326 = vld [vmem:[%s3315 + $0x50] sm:$0xff]
          %v3327 = vld [vmem:[%s3315 + $0x58] sm:$0xff]
          %v3328 = vld [vmem:[%s3315 + $0x60] sm:$0xff]
          %v3329 = vld [vmem:[%s3315 + $0x68] sm:$0xff]
          %v3330 = vld [vmem:[%s3315 + $0x70] sm:$0xff]
          %v3331 = vld [vmem:[%s3315 + $0x78] sm:$0xff]
          %s3332 = smul.u32 %s3292, 4
          %s3333 = scalar_lea.vmem %s473, %s3332
          %v3334 = vld [vmem:[%s3333] sm:$0xf]
          %v3336 = vperm.slane %v3334, 0
          %v3337 = vperm.slane %v3334, 1
          %v3338 = vperm.slane %v3334, 2
          %v3339 = vperm.slane %v3334, 3
          %v3360 = vunpack.c.l.b16 %v3316
          %v3361 = vunpack.c.h.b16 %v3316
          %v3362 = vunpack.c.l.b16 %v3317
          %v3363 = vunpack.c.h.b16 %v3317
          %v3364 = vunpack.c.l.b16 %v3318
          %v3365 = vunpack.c.h.b16 %v3318
          %v3366 = vunpack.c.l.b16 %v3319
          %v3367 = vunpack.c.h.b16 %v3319
          %v3368 = vunpack.c.l.b16 %v3320
          %v3369 = vunpack.c.h.b16 %v3320
          %v3370 = vunpack.c.l.b16 %v3321
          %v3371 = vunpack.c.h.b16 %v3321
          %v3372 = vunpack.c.l.b16 %v3322
          %v3373 = vunpack.c.h.b16 %v3322
          %v3374 = vunpack.c.l.b16 %v3323
          %v3375 = vunpack.c.h.b16 %v3323
          %v3376 = vunpack.c.l.b16 %v3324
          %v3377 = vunpack.c.h.b16 %v3324
          %v3378 = vunpack.c.l.b16 %v3325
          %v3379 = vunpack.c.h.b16 %v3325
          %v3380 = vunpack.c.l.b16 %v3326
          %v3381 = vunpack.c.h.b16 %v3326
          %v3382 = vunpack.c.l.b16 %v3327
          %v3383 = vunpack.c.h.b16 %v3327
          %v3384 = vunpack.c.l.b16 %v3328
          %v3385 = vunpack.c.h.b16 %v3328
          %v3386 = vunpack.c.l.b16 %v3329
          %v3387 = vunpack.c.h.b16 %v3329
          %v3388 = vunpack.c.l.b16 %v3330
          %v3389 = vunpack.c.h.b16 %v3330
          %v3390 = vunpack.c.l.b16 %v3331
          %v3391 = vunpack.c.h.b16 %v3331
          %v3392 = vpack.c.b16 %v3364, %v3360
          %v3393 = vpack.c.b16 %v3365, %v3361
          %v3394 = vpack.c.b16 %v3366, %v3362
          %v3395 = vpack.c.b16 %v3367, %v3363
          %v3396 = vpack.c.b16 %v3372, %v3368
          %v3397 = vpack.c.b16 %v3373, %v3369
          %v3398 = vpack.c.b16 %v3374, %v3370
          %v3399 = vpack.c.b16 %v3375, %v3371
          %v3400 = vpack.c.b16 %v3380, %v3376
          %v3401 = vpack.c.b16 %v3381, %v3377
          %v3402 = vpack.c.b16 %v3382, %v3378
          %v3403 = vpack.c.b16 %v3383, %v3379
          %v3404 = vpack.c.b16 %v3388, %v3384
          %v3405 = vpack.c.b16 %v3389, %v3385
          %v3406 = vpack.c.b16 %v3390, %v3386
          %v3407 = vpack.c.b16 %v3391, %v3387
          %v3425 = vsel %vm620, %v3283, 0
          %v3428 = vsel %vm620, %v3284, 0
          %v3431 = vsel %vm620, %v3285, 0
          %v3434 = vsel %vm620, %v3286, 0
          %v3437 = vsel %vm620, %v3287, 0
          %v3440 = vsel %vm620, %v3288, 0
          %v3443 = vsel %vm620, %v3289, 0
          %v3446 = vsel %vm620, %v3290, 0
          %3448 = vmatpush.bf16.msra.mxu0 0
          %3449 = vmatpush.bf16.msra.mxu0 0
          %3450 = vmatpush.bf16.msra.mxu0 0
          %3451 = vmatpush.bf16.msra.mxu0 0
          %3452 = vmatpush.bf16.msra.mxu0 %v3404
          %3453 = vmatpush.bf16.msra.mxu0 %v3400
          %3454 = vmatpush.bf16.msra.mxu0 %v3396
          %3455 = vmatpush.bf16.msra.mxu0 %v3392
          %3456 = vmatmul.bf16.gmra.mxu0 %v3425
          %v3457 = vpop.f32.mrf.mxu0
          %v3458 = vadd.f32 %v3336, %v3457
          %v3459 = vpop.f32.mrf.mxu0
          %v3460 = vadd.f32 %v3336, %v3459
          %3461 = vmatmul.bf16.gmra.mxu0 %v3428
          %v3462 = vpop.f32.mrf.mxu0
          %v3463 = vadd.f32 %v3336, %v3462
          %v3464 = vpop.f32.mrf.mxu0
          %v3465 = vadd.f32 %v3336, %v3464
          %3466 = vmatmul.bf16.gmra.mxu0 %v3431
          %v3467 = vpop.f32.mrf.mxu0
          %v3468 = vadd.f32 %v3336, %v3467
          %v3469 = vpop.f32.mrf.mxu0
          %v3470 = vadd.f32 %v3336, %v3469
          %3471 = vmatmul.bf16.gmra.mxu0 %v3434
          %v3472 = vpop.f32.mrf.mxu0
          %v3473 = vadd.f32 %v3336, %v3472
          %v3474 = vpop.f32.mrf.mxu0
          %v3475 = vadd.f32 %v3336, %v3474
          %3476 = vmatmul.bf16.gmra.mxu0 %v3437
          %v3477 = vpop.f32.mrf.mxu0
          %v3478 = vadd.f32 %v3336, %v3477
          %v3479 = vpop.f32.mrf.mxu0
          %v3480 = vadd.f32 %v3336, %v3479
          %3481 = vmatmul.bf16.gmra.mxu0 %v3440
          %v3482 = vpop.f32.mrf.mxu0
          %v3483 = vadd.f32 %v3336, %v3482
          %v3484 = vpop.f32.mrf.mxu0
          %v3485 = vadd.f32 %v3336, %v3484
          %3486 = vmatmul.bf16.gmra.mxu0 %v3443
          %v3487 = vpop.f32.mrf.mxu0
          %v3488 = vadd.f32 %v3336, %v3487
          %v3489 = vpop.f32.mrf.mxu0
          %v3490 = vadd.f32 %v3336, %v3489
          %3491 = vmatmul.bf16.gmra.mxu0 %v3446
          %v3492 = vpop.f32.mrf.mxu0
          %v3493 = vadd.f32 %v3336, %v3492
          %v3494 = vpop.f32.mrf.mxu0
          %v3495 = vadd.f32 %v3336, %v3494
          %3496 = vdwg.mxu0
          %3497 = vmatpush.bf16.msra.mxu0 0
          %3498 = vmatpush.bf16.msra.mxu0 0
          %3499 = vmatpush.bf16.msra.mxu0 0
          %3500 = vmatpush.bf16.msra.mxu0 0
          %3501 = vmatpush.bf16.msra.mxu0 %v3405
          %3502 = vmatpush.bf16.msra.mxu0 %v3401
          %3503 = vmatpush.bf16.msra.mxu0 %v3397
          %3504 = vmatpush.bf16.msra.mxu0 %v3393
          %3505 = vmatmul.bf16.gmra.mxu0 %v3425
          %v3506 = vpop.f32.mrf.mxu0
          %v3507 = vadd.f32 %v3337, %v3506
          %v3508 = vpop.f32.mrf.mxu0
          %v3509 = vadd.f32 %v3337, %v3508
          %3510 = vmatmul.bf16.gmra.mxu0 %v3428
          %v3511 = vpop.f32.mrf.mxu0
          %v3512 = vadd.f32 %v3337, %v3511
          %v3513 = vpop.f32.mrf.mxu0
          %v3514 = vadd.f32 %v3337, %v3513
          %3515 = vmatmul.bf16.gmra.mxu0 %v3431
          %v3516 = vpop.f32.mrf.mxu0
          %v3517 = vadd.f32 %v3337, %v3516
          %v3518 = vpop.f32.mrf.mxu0
          %v3519 = vadd.f32 %v3337, %v3518
          %3520 = vmatmul.bf16.gmra.mxu0 %v3434
          %v3521 = vpop.f32.mrf.mxu0
          %v3522 = vadd.f32 %v3337, %v3521
          %v3523 = vpop.f32.mrf.mxu0
          %v3524 = vadd.f32 %v3337, %v3523
          %3525 = vmatmul.bf16.gmra.mxu0 %v3437
          %v3526 = vpop.f32.mrf.mxu0
          %v3527 = vadd.f32 %v3337, %v3526
          %v3528 = vpop.f32.mrf.mxu0
          %v3529 = vadd.f32 %v3337, %v3528
          %3530 = vmatmul.bf16.gmra.mxu0 %v3440
          %v3531 = vpop.f32.mrf.mxu0
          %v3532 = vadd.f32 %v3337, %v3531
          %v3533 = vpop.f32.mrf.mxu0
          %v3534 = vadd.f32 %v3337, %v3533
          %3535 = vmatmul.bf16.gmra.mxu0 %v3443
          %v3536 = vpop.f32.mrf.mxu0
          %v3537 = vadd.f32 %v3337, %v3536
          %v3538 = vpop.f32.mrf.mxu0
          %v3539 = vadd.f32 %v3337, %v3538
          %3540 = vmatmul.bf16.gmra.mxu0 %v3446
          %v3541 = vpop.f32.mrf.mxu0
          %v3542 = vadd.f32 %v3337, %v3541
          %v3543 = vpop.f32.mrf.mxu0
          %v3544 = vadd.f32 %v3337, %v3543
          %3545 = vdwg.mxu0
          %3546 = vmatpush.bf16.msra.mxu0 0
          %3547 = vmatpush.bf16.msra.mxu0 0
          %3548 = vmatpush.bf16.msra.mxu0 0
          %3549 = vmatpush.bf16.msra.mxu0 0
          %3550 = vmatpush.bf16.msra.mxu0 %v3406
          %3551 = vmatpush.bf16.msra.mxu0 %v3402
          %3552 = vmatpush.bf16.msra.mxu0 %v3398
          %3553 = vmatpush.bf16.msra.mxu0 %v3394
          %3554 = vmatmul.bf16.gmra.mxu0 %v3425
          %v3555 = vpop.f32.mrf.mxu0
          %v3556 = vadd.f32 %v3338, %v3555
          %v3557 = vpop.f32.mrf.mxu0
          %v3558 = vadd.f32 %v3338, %v3557
          %3559 = vmatmul.bf16.gmra.mxu0 %v3428
          %v3560 = vpop.f32.mrf.mxu0
          %v3561 = vadd.f32 %v3338, %v3560
          %v3562 = vpop.f32.mrf.mxu0
          %v3563 = vadd.f32 %v3338, %v3562
          %3564 = vmatmul.bf16.gmra.mxu0 %v3431
          %v3565 = vpop.f32.mrf.mxu0
          %v3566 = vadd.f32 %v3338, %v3565
          %v3567 = vpop.f32.mrf.mxu0
          %v3568 = vadd.f32 %v3338, %v3567
          %3569 = vmatmul.bf16.gmra.mxu0 %v3434
          %v3570 = vpop.f32.mrf.mxu0
          %v3571 = vadd.f32 %v3338, %v3570
          %v3572 = vpop.f32.mrf.mxu0
          %v3573 = vadd.f32 %v3338, %v3572
          %3574 = vmatmul.bf16.gmra.mxu0 %v3437
          %v3575 = vpop.f32.mrf.mxu0
          %v3576 = vadd.f32 %v3338, %v3575
          %v3577 = vpop.f32.mrf.mxu0
          %v3578 = vadd.f32 %v3338, %v3577
          %3579 = vmatmul.bf16.gmra.mxu0 %v3440
          %v3580 = vpop.f32.mrf.mxu0
          %v3581 = vadd.f32 %v3338, %v3580
          %v3582 = vpop.f32.mrf.mxu0
          %v3583 = vadd.f32 %v3338, %v3582
          %3584 = vmatmul.bf16.gmra.mxu0 %v3443
          %v3585 = vpop.f32.mrf.mxu0
          %v3586 = vadd.f32 %v3338, %v3585
          %v3587 = vpop.f32.mrf.mxu0
          %v3588 = vadd.f32 %v3338, %v3587
          %3589 = vmatmul.bf16.gmra.mxu0 %v3446
          %v3590 = vpop.f32.mrf.mxu0
          %v3591 = vadd.f32 %v3338, %v3590
          %v3592 = vpop.f32.mrf.mxu0
          %v3593 = vadd.f32 %v3338, %v3592
          %3594 = vdwg.mxu0
          %3595 = vmatpush.bf16.msra.mxu0 0
          %3596 = vmatpush.bf16.msra.mxu0 0
          %3597 = vmatpush.bf16.msra.mxu0 0
          %3598 = vmatpush.bf16.msra.mxu0 0
          %3599 = vmatpush.bf16.msra.mxu0 %v3407
          %3600 = vmatpush.bf16.msra.mxu0 %v3403
          %3601 = vmatpush.bf16.msra.mxu0 %v3399
          %3602 = vmatpush.bf16.msra.mxu0 %v3395
          %3603 = vmatmul.bf16.gmra.mxu0 %v3425
          %v3604 = vpop.f32.mrf.mxu0
          %v3605 = vadd.f32 %v3339, %v3604
          %v3606 = vpop.f32.mrf.mxu0
          %v3607 = vadd.f32 %v3339, %v3606
          %3608 = vmatmul.bf16.gmra.mxu0 %v3428
          %v3609 = vpop.f32.mrf.mxu0
          %v3610 = vadd.f32 %v3339, %v3609
          %v3611 = vpop.f32.mrf.mxu0
          %v3612 = vadd.f32 %v3339, %v3611
          %3613 = vmatmul.bf16.gmra.mxu0 %v3431
          %v3614 = vpop.f32.mrf.mxu0
          %v3615 = vadd.f32 %v3339, %v3614
          %v3616 = vpop.f32.mrf.mxu0
          %v3617 = vadd.f32 %v3339, %v3616
          %3618 = vmatmul.bf16.gmra.mxu0 %v3434
          %v3619 = vpop.f32.mrf.mxu0
          %v3620 = vadd.f32 %v3339, %v3619
          %v3621 = vpop.f32.mrf.mxu0
          %v3622 = vadd.f32 %v3339, %v3621
          %3623 = vmatmul.bf16.gmra.mxu0 %v3437
          %v3624 = vpop.f32.mrf.mxu0
          %v3625 = vadd.f32 %v3339, %v3624
          %v3626 = vpop.f32.mrf.mxu0
          %v3627 = vadd.f32 %v3339, %v3626
          %3628 = vmatmul.bf16.gmra.mxu0 %v3440
          %v3629 = vpop.f32.mrf.mxu0
          %v3630 = vadd.f32 %v3339, %v3629
          %v3631 = vpop.f32.mrf.mxu0
          %v3632 = vadd.f32 %v3339, %v3631
          %3633 = vmatmul.bf16.gmra.mxu0 %v3443
          %v3634 = vpop.f32.mrf.mxu0
          %v3635 = vadd.f32 %v3339, %v3634
          %v3636 = vpop.f32.mrf.mxu0
          %v3637 = vadd.f32 %v3339, %v3636
          %3638 = vmatmul.bf16.gmra.mxu0 %v3446
          %v3639 = vpop.f32.mrf.mxu0
          %v3640 = vadd.f32 %v3339, %v3639
          %v3641 = vpop.f32.mrf.mxu0
          %v3642 = vadd.f32 %v3339, %v3641
          %3643 = vdwg.mxu0
          %v3644 = vmul.f32 %v3458, 0.5
          %v3645 = vmul.f32 %v3507, 0.5
          %v3646 = vmul.f32 %v3556, 0.5
          %v3647 = vmul.f32 %v3605, 0.5
          %v3648 = vmul.f32 %v3460, 0.5
          %v3649 = vmul.f32 %v3509, 0.5
          %v3650 = vmul.f32 %v3558, 0.5
          %v3651 = vmul.f32 %v3607, 0.5
          %v3652 = vmul.f32 %v3463, 0.5
          %v3653 = vmul.f32 %v3512, 0.5
          %v3654 = vmul.f32 %v3561, 0.5
          %v3655 = vmul.f32 %v3610, 0.5
          %v3656 = vmul.f32 %v3465, 0.5
          %v3657 = vmul.f32 %v3514, 0.5
          %v3658 = vmul.f32 %v3563, 0.5
          %v3659 = vmul.f32 %v3612, 0.5
          %v3660 = vmul.f32 %v3468, 0.5
          %v3661 = vmul.f32 %v3517, 0.5
          %v3662 = vmul.f32 %v3566, 0.5
          %v3663 = vmul.f32 %v3615, 0.5
          %v3664 = vmul.f32 %v3470, 0.5
          %v3665 = vmul.f32 %v3519, 0.5
          %v3666 = vmul.f32 %v3568, 0.5
          %v3667 = vmul.f32 %v3617, 0.5
          %v3668 = vmul.f32 %v3473, 0.5
          %v3669 = vmul.f32 %v3522, 0.5
          %v3670 = vmul.f32 %v3571, 0.5
          %v3671 = vmul.f32 %v3620, 0.5
          %v3672 = vmul.f32 %v3475, 0.5
          %v3673 = vmul.f32 %v3524, 0.5
          %v3674 = vmul.f32 %v3573, 0.5
          %v3675 = vmul.f32 %v3622, 0.5
          %v3676 = vmul.f32 %v3478, 0.5
          %v3677 = vmul.f32 %v3527, 0.5
          %v3678 = vmul.f32 %v3576, 0.5
          %v3679 = vmul.f32 %v3625, 0.5
          %v3680 = vmul.f32 %v3480, 0.5
          %v3681 = vmul.f32 %v3529, 0.5
          %v3682 = vmul.f32 %v3578, 0.5
          %v3683 = vmul.f32 %v3627, 0.5
          %v3684 = vmul.f32 %v3483, 0.5
          %v3685 = vmul.f32 %v3532, 0.5
          %v3686 = vmul.f32 %v3581, 0.5
          %v3687 = vmul.f32 %v3630, 0.5
          %v3688 = vmul.f32 %v3485, 0.5
          %v3689 = vmul.f32 %v3534, 0.5
          %v3690 = vmul.f32 %v3583, 0.5
          %v3691 = vmul.f32 %v3632, 0.5
          %v3692 = vmul.f32 %v3488, 0.5
          %v3693 = vmul.f32 %v3537, 0.5
          %v3694 = vmul.f32 %v3586, 0.5
          %v3695 = vmul.f32 %v3635, 0.5
          %v3696 = vmul.f32 %v3490, 0.5
          %v3697 = vmul.f32 %v3539, 0.5
          %v3698 = vmul.f32 %v3588, 0.5
          %v3699 = vmul.f32 %v3637, 0.5
          %v3700 = vmul.f32 %v3493, 0.5
          %v3701 = vmul.f32 %v3542, 0.5
          %v3702 = vmul.f32 %v3591, 0.5
          %v3703 = vmul.f32 %v3640, 0.5
          %v3704 = vmul.f32 %v3495, 0.5
          %v3705 = vmul.f32 %v3544, 0.5
          %v3706 = vmul.f32 %v3593, 0.5
          %v3707 = vmul.f32 %v3642, 0.5
          %v3708 = vmul.f32 %v3458, 0.044715
          %v3709 = vmul.f32 %v3507, 0.044715
          %v3710 = vmul.f32 %v3556, 0.044715
          %v3711 = vmul.f32 %v3605, 0.044715
          %v3712 = vmul.f32 %v3460, 0.044715
          %v3713 = vmul.f32 %v3509, 0.044715
          %v3714 = vmul.f32 %v3558, 0.044715
          %v3715 = vmul.f32 %v3607, 0.044715
          %v3716 = vmul.f32 %v3463, 0.044715
          %v3717 = vmul.f32 %v3512, 0.044715
          %v3718 = vmul.f32 %v3561, 0.044715
          %v3719 = vmul.f32 %v3610, 0.044715
          %v3720 = vmul.f32 %v3465, 0.044715
          %v3721 = vmul.f32 %v3514, 0.044715
          %v3722 = vmul.f32 %v3563, 0.044715
          %v3723 = vmul.f32 %v3612, 0.044715
          %v3724 = vmul.f32 %v3468, 0.044715
          %v3725 = vmul.f32 %v3517, 0.044715
          %v3726 = vmul.f32 %v3566, 0.044715
          %v3727 = vmul.f32 %v3615, 0.044715
          %v3728 = vmul.f32 %v3470, 0.044715
          %v3729 = vmul.f32 %v3519, 0.044715
          %v3730 = vmul.f32 %v3568, 0.044715
          %v3731 = vmul.f32 %v3617, 0.044715
          %v3732 = vmul.f32 %v3473, 0.044715
          %v3733 = vmul.f32 %v3522, 0.044715
          %v3734 = vmul.f32 %v3571, 0.044715
          %v3735 = vmul.f32 %v3620, 0.044715
          %v3736 = vmul.f32 %v3475, 0.044715
          %v3737 = vmul.f32 %v3524, 0.044715
          %v3738 = vmul.f32 %v3573, 0.044715
          %v3739 = vmul.f32 %v3622, 0.044715
          %v3740 = vmul.f32 %v3478, 0.044715
          %v3741 = vmul.f32 %v3527, 0.044715
          %v3742 = vmul.f32 %v3576, 0.044715
          %v3743 = vmul.f32 %v3625, 0.044715
          %v3744 = vmul.f32 %v3480, 0.044715
          %v3745 = vmul.f32 %v3529, 0.044715
          %v3746 = vmul.f32 %v3578, 0.044715
          %v3747 = vmul.f32 %v3627, 0.044715
          %v3748 = vmul.f32 %v3483, 0.044715
          %v3749 = vmul.f32 %v3532, 0.044715
          %v3750 = vmul.f32 %v3581, 0.044715
          %v3751 = vmul.f32 %v3630, 0.044715
          %v3752 = vmul.f32 %v3485, 0.044715
          %v3753 = vmul.f32 %v3534, 0.044715
          %v3754 = vmul.f32 %v3583, 0.044715
          %v3755 = vmul.f32 %v3632, 0.044715
          %v3756 = vmul.f32 %v3488, 0.044715
          %v3757 = vmul.f32 %v3537, 0.044715
          %v3758 = vmul.f32 %v3586, 0.044715
          %v3759 = vmul.f32 %v3635, 0.044715
          %v3760 = vmul.f32 %v3490, 0.044715
          %v3761 = vmul.f32 %v3539, 0.044715
          %v3762 = vmul.f32 %v3588, 0.044715
          %v3763 = vmul.f32 %v3637, 0.044715
          %v3764 = vmul.f32 %v3493, 0.044715
          %v3765 = vmul.f32 %v3542, 0.044715
          %v3766 = vmul.f32 %v3591, 0.044715
          %v3767 = vmul.f32 %v3640, 0.044715
          %v3768 = vmul.f32 %v3495, 0.044715
          %v3769 = vmul.f32 %v3544, 0.044715
          %v3770 = vmul.f32 %v3593, 0.044715
          %v3771 = vmul.f32 %v3642, 0.044715
          %v3772 = vmul.f32 %v3708, %v3458
          %v3773 = vmul.f32 %v3709, %v3507
          %v3774 = vmul.f32 %v3710, %v3556
          %v3775 = vmul.f32 %v3711, %v3605
          %v3776 = vmul.f32 %v3712, %v3460
          %v3777 = vmul.f32 %v3713, %v3509
          %v3778 = vmul.f32 %v3714, %v3558
          %v3779 = vmul.f32 %v3715, %v3607
          %v3780 = vmul.f32 %v3716, %v3463
          %v3781 = vmul.f32 %v3717, %v3512
          %v3782 = vmul.f32 %v3718, %v3561
          %v3783 = vmul.f32 %v3719, %v3610
          %v3784 = vmul.f32 %v3720, %v3465
          %v3785 = vmul.f32 %v3721, %v3514
          %v3786 = vmul.f32 %v3722, %v3563
          %v3787 = vmul.f32 %v3723, %v3612
          %v3788 = vmul.f32 %v3724, %v3468
          %v3789 = vmul.f32 %v3725, %v3517
          %v3790 = vmul.f32 %v3726, %v3566
          %v3791 = vmul.f32 %v3727, %v3615
          %v3792 = vmul.f32 %v3728, %v3470
          %v3793 = vmul.f32 %v3729, %v3519
          %v3794 = vmul.f32 %v3730, %v3568
          %v3795 = vmul.f32 %v3731, %v3617
          %v3796 = vmul.f32 %v3732, %v3473
          %v3797 = vmul.f32 %v3733, %v3522
          %v3798 = vmul.f32 %v3734, %v3571
          %v3799 = vmul.f32 %v3735, %v3620
          %v3800 = vmul.f32 %v3736, %v3475
          %v3801 = vmul.f32 %v3737, %v3524
          %v3802 = vmul.f32 %v3738, %v3573
          %v3803 = vmul.f32 %v3739, %v3622
          %v3804 = vmul.f32 %v3740, %v3478
          %v3805 = vmul.f32 %v3741, %v3527
          %v3806 = vmul.f32 %v3742, %v3576
          %v3807 = vmul.f32 %v3743, %v3625
          %v3808 = vmul.f32 %v3744, %v3480
          %v3809 = vmul.f32 %v3745, %v3529
          %v3810 = vmul.f32 %v3746, %v3578
          %v3811 = vmul.f32 %v3747, %v3627
          %v3812 = vmul.f32 %v3748, %v3483
          %v3813 = vmul.f32 %v3749, %v3532
          %v3814 = vmul.f32 %v3750, %v3581
          %v3815 = vmul.f32 %v3751, %v3630
          %v3816 = vmul.f32 %v3752, %v3485
          %v3817 = vmul.f32 %v3753, %v3534
          %v3818 = vmul.f32 %v3754, %v3583
          %v3819 = vmul.f32 %v3755, %v3632
          %v3820 = vmul.f32 %v3756, %v3488
          %v3821 = vmul.f32 %v3757, %v3537
          %v3822 = vmul.f32 %v3758, %v3586
          %v3823 = vmul.f32 %v3759, %v3635
          %v3824 = vmul.f32 %v3760, %v3490
          %v3825 = vmul.f32 %v3761, %v3539
          %v3826 = vmul.f32 %v3762, %v3588
          %v3827 = vmul.f32 %v3763, %v3637
          %v3828 = vmul.f32 %v3764, %v3493
          %v3829 = vmul.f32 %v3765, %v3542
          %v3830 = vmul.f32 %v3766, %v3591
          %v3831 = vmul.f32 %v3767, %v3640
          %v3832 = vmul.f32 %v3768, %v3495
          %v3833 = vmul.f32 %v3769, %v3544
          %v3834 = vmul.f32 %v3770, %v3593
          %v3835 = vmul.f32 %v3771, %v3642
          %v3836 = vmul.f32 %v3772, %v3458
          %v3837 = vmul.f32 %v3773, %v3507
          %v3838 = vmul.f32 %v3774, %v3556
          %v3839 = vmul.f32 %v3775, %v3605
          %v3840 = vmul.f32 %v3776, %v3460
          %v3841 = vmul.f32 %v3777, %v3509
          %v3842 = vmul.f32 %v3778, %v3558
          %v3843 = vmul.f32 %v3779, %v3607
          %v3844 = vmul.f32 %v3780, %v3463
          %v3845 = vmul.f32 %v3781, %v3512
          %v3846 = vmul.f32 %v3782, %v3561
          %v3847 = vmul.f32 %v3783, %v3610
          %v3848 = vmul.f32 %v3784, %v3465
          %v3849 = vmul.f32 %v3785, %v3514
          %v3850 = vmul.f32 %v3786, %v3563
          %v3851 = vmul.f32 %v3787, %v3612
          %v3852 = vmul.f32 %v3788, %v3468
          %v3853 = vmul.f32 %v3789, %v3517
          %v3854 = vmul.f32 %v3790, %v3566
          %v3855 = vmul.f32 %v3791, %v3615
          %v3856 = vmul.f32 %v3792, %v3470
          %v3857 = vmul.f32 %v3793, %v3519
          %v3858 = vmul.f32 %v3794, %v3568
          %v3859 = vmul.f32 %v3795, %v3617
          %v3860 = vmul.f32 %v3796, %v3473
          %v3861 = vmul.f32 %v3797, %v3522
          %v3862 = vmul.f32 %v3798, %v3571
          %v3863 = vmul.f32 %v3799, %v3620
          %v3864 = vmul.f32 %v3800, %v3475
          %v3865 = vmul.f32 %v3801, %v3524
          %v3866 = vmul.f32 %v3802, %v3573
          %v3867 = vmul.f32 %v3803, %v3622
          %v3868 = vmul.f32 %v3804, %v3478
          %v3869 = vmul.f32 %v3805, %v3527
          %v3870 = vmul.f32 %v3806, %v3576
          %v3871 = vmul.f32 %v3807, %v3625
          %v3872 = vmul.f32 %v3808, %v3480
          %v3873 = vmul.f32 %v3809, %v3529
          %v3874 = vmul.f32 %v3810, %v3578
          %v3875 = vmul.f32 %v3811, %v3627
          %v3876 = vmul.f32 %v3812, %v3483
          %v3877 = vmul.f32 %v3813, %v3532
          %v3878 = vmul.f32 %v3814, %v3581
          %v3879 = vmul.f32 %v3815, %v3630
          %v3880 = vmul.f32 %v3816, %v3485
          %v3881 = vmul.f32 %v3817, %v3534
          %v3882 = vmul.f32 %v3818, %v3583
          %v3883 = vmul.f32 %v3819, %v3632
          %v3884 = vmul.f32 %v3820, %v3488
          %v3885 = vmul.f32 %v3821, %v3537
          %v3886 = vmul.f32 %v3822, %v3586
          %v3887 = vmul.f32 %v3823, %v3635
          %v3888 = vmul.f32 %v3824, %v3490
          %v3889 = vmul.f32 %v3825, %v3539
          %v3890 = vmul.f32 %v3826, %v3588
          %v3891 = vmul.f32 %v3827, %v3637
          %v3892 = vmul.f32 %v3828, %v3493
          %v3893 = vmul.f32 %v3829, %v3542
          %v3894 = vmul.f32 %v3830, %v3591
          %v3895 = vmul.f32 %v3831, %v3640
          %v3896 = vmul.f32 %v3832, %v3495
          %v3897 = vmul.f32 %v3833, %v3544
          %v3898 = vmul.f32 %v3834, %v3593
          %v3899 = vmul.f32 %v3835, %v3642
          %v3900 = vadd.f32 %v3458, %v3836
          %v3901 = vadd.f32 %v3507, %v3837
          %v3902 = vadd.f32 %v3556, %v3838
          %v3903 = vadd.f32 %v3605, %v3839
          %v3904 = vadd.f32 %v3460, %v3840
          %v3905 = vadd.f32 %v3509, %v3841
          %v3906 = vadd.f32 %v3558, %v3842
          %v3907 = vadd.f32 %v3607, %v3843
          %v3908 = vadd.f32 %v3463, %v3844
          %v3909 = vadd.f32 %v3512, %v3845
          %v3910 = vadd.f32 %v3561, %v3846
          %v3911 = vadd.f32 %v3610, %v3847
          %v3912 = vadd.f32 %v3465, %v3848
          %v3913 = vadd.f32 %v3514, %v3849
          %v3914 = vadd.f32 %v3563, %v3850
          %v3915 = vadd.f32 %v3612, %v3851
          %v3916 = vadd.f32 %v3468, %v3852
          %v3917 = vadd.f32 %v3517, %v3853
          %v3918 = vadd.f32 %v3566, %v3854
          %v3919 = vadd.f32 %v3615, %v3855
          %v3920 = vadd.f32 %v3470, %v3856
          %v3921 = vadd.f32 %v3519, %v3857
          %v3922 = vadd.f32 %v3568, %v3858
          %v3923 = vadd.f32 %v3617, %v3859
          %v3924 = vadd.f32 %v3473, %v3860
          %v3925 = vadd.f32 %v3522, %v3861
          %v3926 = vadd.f32 %v3571, %v3862
          %v3927 = vadd.f32 %v3620, %v3863
          %v3928 = vadd.f32 %v3475, %v3864
          %v3929 = vadd.f32 %v3524, %v3865
          %v3930 = vadd.f32 %v3573, %v3866
          %v3931 = vadd.f32 %v3622, %v3867
          %v3932 = vadd.f32 %v3478, %v3868
          %v3933 = vadd.f32 %v3527, %v3869
          %v3934 = vadd.f32 %v3576, %v3870
          %v3935 = vadd.f32 %v3625, %v3871
          %v3936 = vadd.f32 %v3480, %v3872
          %v3937 = vadd.f32 %v3529, %v3873
          %v3938 = vadd.f32 %v3578, %v3874
          %v3939 = vadd.f32 %v3627, %v3875
          %v3940 = vadd.f32 %v3483, %v3876
          %v3941 = vadd.f32 %v3532, %v3877
          %v3942 = vadd.f32 %v3581, %v3878
          %v3943 = vadd.f32 %v3630, %v3879
          %v3944 = vadd.f32 %v3485, %v3880
          %v3945 = vadd.f32 %v3534, %v3881
          %v3946 = vadd.f32 %v3583, %v3882
          %v3947 = vadd.f32 %v3632, %v3883
          %v3948 = vadd.f32 %v3488, %v3884
          %v3949 = vadd.f32 %v3537, %v3885
          %v3950 = vadd.f32 %v3586, %v3886
          %v3951 = vadd.f32 %v3635, %v3887
          %v3952 = vadd.f32 %v3490, %v3888
          %v3953 = vadd.f32 %v3539, %v3889
          %v3954 = vadd.f32 %v3588, %v3890
          %v3955 = vadd.f32 %v3637, %v3891
          %v3956 = vadd.f32 %v3493, %v3892
          %v3957 = vadd.f32 %v3542, %v3893
          %v3958 = vadd.f32 %v3591, %v3894
          %v3959 = vadd.f32 %v3640, %v3895
          %v3960 = vadd.f32 %v3495, %v3896
          %v3961 = vadd.f32 %v3544, %v3897
          %v3962 = vadd.f32 %v3593, %v3898
          %v3963 = vadd.f32 %v3642, %v3899
          %v3964 = vmul.f32 %v3900, 0.7978846
          %v3965 = vmul.f32 %v3901, 0.7978846
          %v3966 = vmul.f32 %v3902, 0.7978846
          %v3967 = vmul.f32 %v3903, 0.7978846
          %v3968 = vmul.f32 %v3904, 0.7978846
          %v3969 = vmul.f32 %v3905, 0.7978846
          %v3970 = vmul.f32 %v3906, 0.7978846
          %v3971 = vmul.f32 %v3907, 0.7978846
          %v3972 = vmul.f32 %v3908, 0.7978846
          %v3973 = vmul.f32 %v3909, 0.7978846
          %v3974 = vmul.f32 %v3910, 0.7978846
          %v3975 = vmul.f32 %v3911, 0.7978846
          %v3976 = vmul.f32 %v3912, 0.7978846
          %v3977 = vmul.f32 %v3913, 0.7978846
          %v3978 = vmul.f32 %v3914, 0.7978846
          %v3979 = vmul.f32 %v3915, 0.7978846
          %v3980 = vmul.f32 %v3916, 0.7978846
          %v3981 = vmul.f32 %v3917, 0.7978846
          %v3982 = vmul.f32 %v3918, 0.7978846
          %v3983 = vmul.f32 %v3919, 0.7978846
          %v3984 = vmul.f32 %v3920, 0.7978846
          %v3985 = vmul.f32 %v3921, 0.7978846
          %v3986 = vmul.f32 %v3922, 0.7978846
          %v3987 = vmul.f32 %v3923, 0.7978846
          %v3988 = vmul.f32 %v3924, 0.7978846
          %v3989 = vmul.f32 %v3925, 0.7978846
          %v3990 = vmul.f32 %v3926, 0.7978846
          %v3991 = vmul.f32 %v3927, 0.7978846
          %v3992 = vmul.f32 %v3928, 0.7978846
          %v3993 = vmul.f32 %v3929, 0.7978846
          %v3994 = vmul.f32 %v3930, 0.7978846
          %v3995 = vmul.f32 %v3931, 0.7978846
          %v3996 = vmul.f32 %v3932, 0.7978846
          %v3997 = vmul.f32 %v3933, 0.7978846
          %v3998 = vmul.f32 %v3934, 0.7978846
          %v3999 = vmul.f32 %v3935, 0.7978846
          %v4000 = vmul.f32 %v3936, 0.7978846
          %v4001 = vmul.f32 %v3937, 0.7978846
          %v4002 = vmul.f32 %v3938, 0.7978846
          %v4003 = vmul.f32 %v3939, 0.7978846
          %v4004 = vmul.f32 %v3940, 0.7978846
          %v4005 = vmul.f32 %v3941, 0.7978846
          %v4006 = vmul.f32 %v3942, 0.7978846
          %v4007 = vmul.f32 %v3943, 0.7978846
          %v4008 = vmul.f32 %v3944, 0.7978846
          %v4009 = vmul.f32 %v3945, 0.7978846
          %v4010 = vmul.f32 %v3946, 0.7978846
          %v4011 = vmul.f32 %v3947, 0.7978846
          %v4012 = vmul.f32 %v3948, 0.7978846
          %v4013 = vmul.f32 %v3949, 0.7978846
          %v4014 = vmul.f32 %v3950, 0.7978846
          %v4015 = vmul.f32 %v3951, 0.7978846
          %v4016 = vmul.f32 %v3952, 0.7978846
          %v4017 = vmul.f32 %v3953, 0.7978846
          %v4018 = vmul.f32 %v3954, 0.7978846
          %v4019 = vmul.f32 %v3955, 0.7978846
          %v4020 = vmul.f32 %v3956, 0.7978846
          %v4021 = vmul.f32 %v3957, 0.7978846
          %v4022 = vmul.f32 %v3958, 0.7978846
          %v4023 = vmul.f32 %v3959, 0.7978846
          %v4024 = vmul.f32 %v3960, 0.7978846
          %v4025 = vmul.f32 %v3961, 0.7978846
          %v4026 = vmul.f32 %v3962, 0.7978846
          %v4027 = vmul.f32 %v3963, 0.7978846
          %v4028 = vtanh.pop %v3964
          %v4029 = vtanh.pop %v3965
          %v4030 = vtanh.pop %v3966
          %v4031 = vtanh.pop %v3967
          %v4032 = vtanh.pop %v3968
          %v4033 = vtanh.pop %v3969
          %v4034 = vtanh.pop %v3970
          %v4035 = vtanh.pop %v3971
          %v4036 = vtanh.pop %v3972
          %v4037 = vtanh.pop %v3973
          %v4038 = vtanh.pop %v3974
          %v4039 = vtanh.pop %v3975
          %v4040 = vtanh.pop %v3976
          %v4041 = vtanh.pop %v3977
          %v4042 = vtanh.pop %v3978
          %v4043 = vtanh.pop %v3979
          %v4044 = vtanh.pop %v3980
          %v4045 = vtanh.pop %v3981
          %v4046 = vtanh.pop %v3982
          %v4047 = vtanh.pop %v3983
          %v4048 = vtanh.pop %v3984
          %v4049 = vtanh.pop %v3985
          %v4050 = vtanh.pop %v3986
          %v4051 = vtanh.pop %v3987
          %v4052 = vtanh.pop %v3988
          %v4053 = vtanh.pop %v3989
          %v4054 = vtanh.pop %v3990
          %v4055 = vtanh.pop %v3991
          %v4056 = vtanh.pop %v3992
          %v4057 = vtanh.pop %v3993
          %v4058 = vtanh.pop %v3994
          %v4059 = vtanh.pop %v3995
          %v4060 = vtanh.pop %v3996
          %v4061 = vtanh.pop %v3997
          %v4062 = vtanh.pop %v3998
          %v4063 = vtanh.pop %v3999
          %v4064 = vtanh.pop %v4000
          %v4065 = vtanh.pop %v4001
          %v4066 = vtanh.pop %v4002
          %v4067 = vtanh.pop %v4003
          %v4068 = vtanh.pop %v4004
          %v4069 = vtanh.pop %v4005
          %v4070 = vtanh.pop %v4006
          %v4071 = vtanh.pop %v4007
          %v4072 = vtanh.pop %v4008
          %v4073 = vtanh.pop %v4009
          %v4074 = vtanh.pop %v4010
          %v4075 = vtanh.pop %v4011
          %v4076 = vtanh.pop %v4012
          %v4077 = vtanh.pop %v4013
          %v4078 = vtanh.pop %v4014
          %v4079 = vtanh.pop %v4015
          %v4080 = vtanh.pop %v4016
          %v4081 = vtanh.pop %v4017
          %v4082 = vtanh.pop %v4018
          %v4083 = vtanh.pop %v4019
          %v4084 = vtanh.pop %v4020
          %v4085 = vtanh.pop %v4021
          %v4086 = vtanh.pop %v4022
          %v4087 = vtanh.pop %v4023
          %v4088 = vtanh.pop %v4024
          %v4089 = vtanh.pop %v4025
          %v4090 = vtanh.pop %v4026
          %v4091 = vtanh.pop %v4027
          %v4092 = vadd.f32 %v4028, 1.0
          %v4093 = vadd.f32 %v4029, 1.0
          %v4094 = vadd.f32 %v4030, 1.0
          %v4095 = vadd.f32 %v4031, 1.0
          %v4096 = vadd.f32 %v4032, 1.0
          %v4097 = vadd.f32 %v4033, 1.0
          %v4098 = vadd.f32 %v4034, 1.0
          %v4099 = vadd.f32 %v4035, 1.0
          %v4100 = vadd.f32 %v4036, 1.0
          %v4101 = vadd.f32 %v4037, 1.0
          %v4102 = vadd.f32 %v4038, 1.0
          %v4103 = vadd.f32 %v4039, 1.0
          %v4104 = vadd.f32 %v4040, 1.0
          %v4105 = vadd.f32 %v4041, 1.0
          %v4106 = vadd.f32 %v4042, 1.0
          %v4107 = vadd.f32 %v4043, 1.0
          %v4108 = vadd.f32 %v4044, 1.0
          %v4109 = vadd.f32 %v4045, 1.0
          %v4110 = vadd.f32 %v4046, 1.0
          %v4111 = vadd.f32 %v4047, 1.0
          %v4112 = vadd.f32 %v4048, 1.0
          %v4113 = vadd.f32 %v4049, 1.0
          %v4114 = vadd.f32 %v4050, 1.0
          %v4115 = vadd.f32 %v4051, 1.0
          %v4116 = vadd.f32 %v4052, 1.0
          %v4117 = vadd.f32 %v4053, 1.0
          %v4118 = vadd.f32 %v4054, 1.0
          %v4119 = vadd.f32 %v4055, 1.0
          %v4120 = vadd.f32 %v4056, 1.0
          %v4121 = vadd.f32 %v4057, 1.0
          %v4122 = vadd.f32 %v4058, 1.0
          %v4123 = vadd.f32 %v4059, 1.0
          %v4124 = vadd.f32 %v4060, 1.0
          %v4125 = vadd.f32 %v4061, 1.0
          %v4126 = vadd.f32 %v4062, 1.0
          %v4127 = vadd.f32 %v4063, 1.0
          %v4128 = vadd.f32 %v4064, 1.0
          %v4129 = vadd.f32 %v4065, 1.0
          %v4130 = vadd.f32 %v4066, 1.0
          %v4131 = vadd.f32 %v4067, 1.0
          %v4132 = vadd.f32 %v4068, 1.0
          %v4133 = vadd.f32 %v4069, 1.0
          %v4134 = vadd.f32 %v4070, 1.0
          %v4135 = vadd.f32 %v4071, 1.0
          %v4136 = vadd.f32 %v4072, 1.0
          %v4137 = vadd.f32 %v4073, 1.0
          %v4138 = vadd.f32 %v4074, 1.0
          %v4139 = vadd.f32 %v4075, 1.0
          %v4140 = vadd.f32 %v4076, 1.0
          %v4141 = vadd.f32 %v4077, 1.0
          %v4142 = vadd.f32 %v4078, 1.0
          %v4143 = vadd.f32 %v4079, 1.0
          %v4144 = vadd.f32 %v4080, 1.0
          %v4145 = vadd.f32 %v4081, 1.0
          %v4146 = vadd.f32 %v4082, 1.0
          %v4147 = vadd.f32 %v4083, 1.0
          %v4148 = vadd.f32 %v4084, 1.0
          %v4149 = vadd.f32 %v4085, 1.0
          %v4150 = vadd.f32 %v4086, 1.0
          %v4151 = vadd.f32 %v4087, 1.0
          %v4152 = vadd.f32 %v4088, 1.0
          %v4153 = vadd.f32 %v4089, 1.0
          %v4154 = vadd.f32 %v4090, 1.0
          %v4155 = vadd.f32 %v4091, 1.0
          %v4156 = vmul.f32 %v3644, %v4092
          %v4157 = vmul.f32 %v3645, %v4093
          %v4158 = vmul.f32 %v3646, %v4094
          %v4159 = vmul.f32 %v3647, %v4095
          %v4160 = vmul.f32 %v3648, %v4096
          %v4161 = vmul.f32 %v3649, %v4097
          %v4162 = vmul.f32 %v3650, %v4098
          %v4163 = vmul.f32 %v3651, %v4099
          %v4164 = vmul.f32 %v3652, %v4100
          %v4165 = vmul.f32 %v3653, %v4101
          %v4166 = vmul.f32 %v3654, %v4102
          %v4167 = vmul.f32 %v3655, %v4103
          %v4168 = vmul.f32 %v3656, %v4104
          %v4169 = vmul.f32 %v3657, %v4105
          %v4170 = vmul.f32 %v3658, %v4106
          %v4171 = vmul.f32 %v3659, %v4107
          %v4172 = vmul.f32 %v3660, %v4108
          %v4173 = vmul.f32 %v3661, %v4109
          %v4174 = vmul.f32 %v3662, %v4110
          %v4175 = vmul.f32 %v3663, %v4111
          %v4176 = vmul.f32 %v3664, %v4112
          %v4177 = vmul.f32 %v3665, %v4113
          %v4178 = vmul.f32 %v3666, %v4114
          %v4179 = vmul.f32 %v3667, %v4115
          %v4180 = vmul.f32 %v3668, %v4116
          %v4181 = vmul.f32 %v3669, %v4117
          %v4182 = vmul.f32 %v3670, %v4118
          %v4183 = vmul.f32 %v3671, %v4119
          %v4184 = vmul.f32 %v3672, %v4120
          %v4185 = vmul.f32 %v3673, %v4121
          %v4186 = vmul.f32 %v3674, %v4122
          %v4187 = vmul.f32 %v3675, %v4123
          %v4188 = vmul.f32 %v3676, %v4124
          %v4189 = vmul.f32 %v3677, %v4125
          %v4190 = vmul.f32 %v3678, %v4126
          %v4191 = vmul.f32 %v3679, %v4127
          %v4192 = vmul.f32 %v3680, %v4128
          %v4193 = vmul.f32 %v3681, %v4129
          %v4194 = vmul.f32 %v3682, %v4130
          %v4195 = vmul.f32 %v3683, %v4131
          %v4196 = vmul.f32 %v3684, %v4132
          %v4197 = vmul.f32 %v3685, %v4133
          %v4198 = vmul.f32 %v3686, %v4134
          %v4199 = vmul.f32 %v3687, %v4135
          %v4200 = vmul.f32 %v3688, %v4136
          %v4201 = vmul.f32 %v3689, %v4137
          %v4202 = vmul.f32 %v3690, %v4138
          %v4203 = vmul.f32 %v3691, %v4139
          %v4204 = vmul.f32 %v3692, %v4140
          %v4205 = vmul.f32 %v3693, %v4141
          %v4206 = vmul.f32 %v3694, %v4142
          %v4207 = vmul.f32 %v3695, %v4143
          %v4208 = vmul.f32 %v3696, %v4144
          %v4209 = vmul.f32 %v3697, %v4145
          %v4210 = vmul.f32 %v3698, %v4146
          %v4211 = vmul.f32 %v3699, %v4147
          %v4212 = vmul.f32 %v3700, %v4148
          %v4213 = vmul.f32 %v3701, %v4149
          %v4214 = vmul.f32 %v3702, %v4150
          %v4215 = vmul.f32 %v3703, %v4151
          %v4216 = vmul.f32 %v3704, %v4152
          %v4217 = vmul.f32 %v3705, %v4153
          %v4218 = vmul.f32 %v3706, %v4154
          %v4219 = vmul.f32 %v3707, %v4155
          %v4220 = vpack.c.bf16 %v4160, %v4156
          %v4221 = vpack.c.bf16 %v4161, %v4157
          %v4222 = vpack.c.bf16 %v4162, %v4158
          %v4223 = vpack.c.bf16 %v4163, %v4159
          %v4224 = vpack.c.bf16 %v4168, %v4164
          %v4225 = vpack.c.bf16 %v4169, %v4165
          %v4226 = vpack.c.bf16 %v4170, %v4166
          %v4227 = vpack.c.bf16 %v4171, %v4167
          %v4228 = vpack.c.bf16 %v4176, %v4172
          %v4229 = vpack.c.bf16 %v4177, %v4173
          %v4230 = vpack.c.bf16 %v4178, %v4174
          %v4231 = vpack.c.bf16 %v4179, %v4175
          %v4232 = vpack.c.bf16 %v4184, %v4180
          %v4233 = vpack.c.bf16 %v4185, %v4181
          %v4234 = vpack.c.bf16 %v4186, %v4182
          %v4235 = vpack.c.bf16 %v4187, %v4183
          %v4236 = vpack.c.bf16 %v4192, %v4188
          %v4237 = vpack.c.bf16 %v4193, %v4189
          %v4238 = vpack.c.bf16 %v4194, %v4190
          %v4239 = vpack.c.bf16 %v4195, %v4191
          %v4240 = vpack.c.bf16 %v4200, %v4196
          %v4241 = vpack.c.bf16 %v4201, %v4197
          %v4242 = vpack.c.bf16 %v4202, %v4198
          %v4243 = vpack.c.bf16 %v4203, %v4199
          %v4244 = vpack.c.bf16 %v4208, %v4204
          %v4245 = vpack.c.bf16 %v4209, %v4205
          %v4246 = vpack.c.bf16 %v4210, %v4206
          %v4247 = vpack.c.bf16 %v4211, %v4207
          %v4248 = vpack.c.bf16 %v4216, %v4212
          %v4249 = vpack.c.bf16 %v4217, %v4213
          %v4250 = vpack.c.bf16 %v4218, %v4214
          %v4251 = vpack.c.bf16 %v4219, %v4215
          %s4252 = smul.u32 %s3292, 64
          %s4253 = smul.addr %s4252, 4
          %s4254 = scalar_lea.vmem %s478, %s4253
          %v4255 = vld [vmem:[%s4254] sm:$0xf]
          %v4256 = vld [vmem:[%s4254 + $0x4] sm:$0xf]
          %v4257 = vld [vmem:[%s4254 + $0x8] sm:$0xf]
          %v4258 = vld [vmem:[%s4254 + $0xc] sm:$0xf]
          %v4259 = vld [vmem:[%s4254 + $0x10] sm:$0xf]
          %v4260 = vld [vmem:[%s4254 + $0x14] sm:$0xf]
          %v4261 = vld [vmem:[%s4254 + $0x18] sm:$0xf]
          %v4262 = vld [vmem:[%s4254 + $0x1c] sm:$0xf]
          %v4263 = vld [vmem:[%s4254 + $0x20] sm:$0xf]
          %v4264 = vld [vmem:[%s4254 + $0x24] sm:$0xf]
          %v4265 = vld [vmem:[%s4254 + $0x28] sm:$0xf]
          %v4266 = vld [vmem:[%s4254 + $0x2c] sm:$0xf]
          %v4267 = vld [vmem:[%s4254 + $0x30] sm:$0xf]
          %v4268 = vld [vmem:[%s4254 + $0x34] sm:$0xf]
          %v4269 = vld [vmem:[%s4254 + $0x38] sm:$0xf]
          %v4270 = vld [vmem:[%s4254 + $0x3c] sm:$0xf]
          %v4271 = vld [vmem:[%s4254 + $0x40] sm:$0xf]
          %v4272 = vld [vmem:[%s4254 + $0x44] sm:$0xf]
          %v4273 = vld [vmem:[%s4254 + $0x48] sm:$0xf]
          %v4274 = vld [vmem:[%s4254 + $0x4c] sm:$0xf]
          %v4275 = vld [vmem:[%s4254 + $0x50] sm:$0xf]
          %v4276 = vld [vmem:[%s4254 + $0x54] sm:$0xf]
          %v4277 = vld [vmem:[%s4254 + $0x58] sm:$0xf]
          %v4278 = vld [vmem:[%s4254 + $0x5c] sm:$0xf]
          %v4279 = vld [vmem:[%s4254 + $0x60] sm:$0xf]
          %v4280 = vld [vmem:[%s4254 + $0x64] sm:$0xf]
          %v4281 = vld [vmem:[%s4254 + $0x68] sm:$0xf]
          %v4282 = vld [vmem:[%s4254 + $0x6c] sm:$0xf]
          %v4283 = vld [vmem:[%s4254 + $0x70] sm:$0xf]
          %v4284 = vld [vmem:[%s4254 + $0x74] sm:$0xf]
          %v4285 = vld [vmem:[%s4254 + $0x78] sm:$0xf]
          %v4286 = vld [vmem:[%s4254 + $0x7c] sm:$0xf]
          %v4287 = vld [vmem:[%s4254 + $0x80] sm:$0xf]
          %v4288 = vld [vmem:[%s4254 + $0x84] sm:$0xf]
          %v4289 = vld [vmem:[%s4254 + $0x88] sm:$0xf]
          %v4290 = vld [vmem:[%s4254 + $0x8c] sm:$0xf]
          %v4291 = vld [vmem:[%s4254 + $0x90] sm:$0xf]
          %v4292 = vld [vmem:[%s4254 + $0x94] sm:$0xf]
          %v4293 = vld [vmem:[%s4254 + $0x98] sm:$0xf]
          %v4294 = vld [vmem:[%s4254 + $0x9c] sm:$0xf]
          %v4295 = vld [vmem:[%s4254 + $0xa0] sm:$0xf]
          %v4296 = vld [vmem:[%s4254 + $0xa4] sm:$0xf]
          %v4297 = vld [vmem:[%s4254 + $0xa8] sm:$0xf]
          %v4298 = vld [vmem:[%s4254 + $0xac] sm:$0xf]
          %v4299 = vld [vmem:[%s4254 + $0xb0] sm:$0xf]
          %v4300 = vld [vmem:[%s4254 + $0xb4] sm:$0xf]
          %v4301 = vld [vmem:[%s4254 + $0xb8] sm:$0xf]
          %v4302 = vld [vmem:[%s4254 + $0xbc] sm:$0xf]
          %v4303 = vld [vmem:[%s4254 + $0xc0] sm:$0xf]
          %v4304 = vld [vmem:[%s4254 + $0xc4] sm:$0xf]
          %v4305 = vld [vmem:[%s4254 + $0xc8] sm:$0xf]
          %v4306 = vld [vmem:[%s4254 + $0xcc] sm:$0xf]
          %v4307 = vld [vmem:[%s4254 + $0xd0] sm:$0xf]
          %v4308 = vld [vmem:[%s4254 + $0xd4] sm:$0xf]
          %v4309 = vld [vmem:[%s4254 + $0xd8] sm:$0xf]
          %v4310 = vld [vmem:[%s4254 + $0xdc] sm:$0xf]
          %v4311 = vld [vmem:[%s4254 + $0xe0] sm:$0xf]
          %v4312 = vld [vmem:[%s4254 + $0xe4] sm:$0xf]
          %v4313 = vld [vmem:[%s4254 + $0xe8] sm:$0xf]
          %v4314 = vld [vmem:[%s4254 + $0xec] sm:$0xf]
          %v4315 = vld [vmem:[%s4254 + $0xf0] sm:$0xf]
          %v4316 = vld [vmem:[%s4254 + $0xf4] sm:$0xf]
          %v4317 = vld [vmem:[%s4254 + $0xf8] sm:$0xf]
          %v4318 = vld [vmem:[%s4254 + $0xfc] sm:$0xf]
          %v4383 = vunpack.c.l.b16 %v4255
          %v4384 = vunpack.c.l.b16 %v4256
          %v4385 = vunpack.c.l.b16 %v4257
          %v4386 = vunpack.c.l.b16 %v4258
          %v4387 = vunpack.c.l.b16 %v4259
          %v4388 = vunpack.c.l.b16 %v4260
          %v4389 = vunpack.c.l.b16 %v4261
          %v4390 = vunpack.c.l.b16 %v4262
          %v4391 = vunpack.c.l.b16 %v4263
          %v4392 = vunpack.c.l.b16 %v4264
          %v4393 = vunpack.c.l.b16 %v4265
          %v4394 = vunpack.c.l.b16 %v4266
          %v4395 = vunpack.c.l.b16 %v4267
          %v4396 = vunpack.c.l.b16 %v4268
          %v4397 = vunpack.c.l.b16 %v4269
          %v4398 = vunpack.c.l.b16 %v4270
          %v4399 = vunpack.c.l.b16 %v4271
          %v4400 = vunpack.c.l.b16 %v4272
          %v4401 = vunpack.c.l.b16 %v4273
          %v4402 = vunpack.c.l.b16 %v4274
          %v4403 = vunpack.c.l.b16 %v4275
          %v4404 = vunpack.c.l.b16 %v4276
          %v4405 = vunpack.c.l.b16 %v4277
          %v4406 = vunpack.c.l.b16 %v4278
          %v4407 = vunpack.c.l.b16 %v4279
          %v4408 = vunpack.c.l.b16 %v4280
          %v4409 = vunpack.c.l.b16 %v4281
          %v4410 = vunpack.c.l.b16 %v4282
          %v4411 = vunpack.c.l.b16 %v4283
          %v4412 = vunpack.c.l.b16 %v4284
          %v4413 = vunpack.c.l.b16 %v4285
          %v4414 = vunpack.c.l.b16 %v4286
          %v4415 = vunpack.c.l.b16 %v4287
          %v4416 = vunpack.c.l.b16 %v4288
          %v4417 = vunpack.c.l.b16 %v4289
          %v4418 = vunpack.c.l.b16 %v4290
          %v4419 = vunpack.c.l.b16 %v4291
          %v4420 = vunpack.c.l.b16 %v4292
          %v4421 = vunpack.c.l.b16 %v4293
          %v4422 = vunpack.c.l.b16 %v4294
          %v4423 = vunpack.c.l.b16 %v4295
          %v4424 = vunpack.c.l.b16 %v4296
          %v4425 = vunpack.c.l.b16 %v4297
          %v4426 = vunpack.c.l.b16 %v4298
          %v4427 = vunpack.c.l.b16 %v4299
          %v4428 = vunpack.c.l.b16 %v4300
          %v4429 = vunpack.c.l.b16 %v4301
          %v4430 = vunpack.c.l.b16 %v4302
          %v4431 = vunpack.c.l.b16 %v4303
          %v4432 = vunpack.c.l.b16 %v4304
          %v4433 = vunpack.c.l.b16 %v4305
          %v4434 = vunpack.c.l.b16 %v4306
          %v4435 = vunpack.c.l.b16 %v4307
          %v4436 = vunpack.c.l.b16 %v4308
          %v4437 = vunpack.c.l.b16 %v4309
          %v4438 = vunpack.c.l.b16 %v4310
          %v4439 = vunpack.c.l.b16 %v4311
          %v4440 = vunpack.c.l.b16 %v4312
          %v4441 = vunpack.c.l.b16 %v4313
          %v4442 = vunpack.c.l.b16 %v4314
          %v4443 = vunpack.c.l.b16 %v4315
          %v4444 = vunpack.c.l.b16 %v4316
          %v4445 = vunpack.c.l.b16 %v4317
          %v4446 = vunpack.c.l.b16 %v4318
          %v4447 = vpack.c.b16 %v4384, %v4383
          %v4448 = vpack.c.b16 %v4386, %v4385
          %v4449 = vpack.c.b16 %v4388, %v4387
          %v4450 = vpack.c.b16 %v4390, %v4389
          %v4451 = vpack.c.b16 %v4392, %v4391
          %v4452 = vpack.c.b16 %v4394, %v4393
          %v4453 = vpack.c.b16 %v4396, %v4395
          %v4454 = vpack.c.b16 %v4398, %v4397
          %v4455 = vpack.c.b16 %v4400, %v4399
          %v4456 = vpack.c.b16 %v4402, %v4401
          %v4457 = vpack.c.b16 %v4404, %v4403
          %v4458 = vpack.c.b16 %v4406, %v4405
          %v4459 = vpack.c.b16 %v4408, %v4407
          %v4460 = vpack.c.b16 %v4410, %v4409
          %v4461 = vpack.c.b16 %v4412, %v4411
          %v4462 = vpack.c.b16 %v4414, %v4413
          %v4463 = vpack.c.b16 %v4416, %v4415
          %v4464 = vpack.c.b16 %v4418, %v4417
          %v4465 = vpack.c.b16 %v4420, %v4419
          %v4466 = vpack.c.b16 %v4422, %v4421
          %v4467 = vpack.c.b16 %v4424, %v4423
          %v4468 = vpack.c.b16 %v4426, %v4425
          %v4469 = vpack.c.b16 %v4428, %v4427
          %v4470 = vpack.c.b16 %v4430, %v4429
          %v4471 = vpack.c.b16 %v4432, %v4431
          %v4472 = vpack.c.b16 %v4434, %v4433
          %v4473 = vpack.c.b16 %v4436, %v4435
          %v4474 = vpack.c.b16 %v4438, %v4437
          %v4475 = vpack.c.b16 %v4440, %v4439
          %v4476 = vpack.c.b16 %v4442, %v4441
          %v4477 = vpack.c.b16 %v4444, %v4443
          %v4478 = vpack.c.b16 %v4446, %v4445
          %4511 = vmatpush.bf16.msra.mxu0 %v4454
          %4512 = vmatpush.bf16.msra.mxu0 %v4453
          %4513 = vmatpush.bf16.msra.mxu0 %v4452
          %4514 = vmatpush.bf16.msra.mxu0 %v4451
          %4515 = vmatpush.bf16.msra.mxu0 %v4450
          %4516 = vmatpush.bf16.msra.mxu0 %v4449
          %4517 = vmatpush.bf16.msra.mxu0 %v4448
          %4518 = vmatpush.bf16.msra.mxu0 %v4447
          %4519 = vmatmul.bf16.gmra.mxu0 %v4220
          %v4520 = vpop.f32.mrf.mxu0
          %v4521 = vadd.f32 0.0, %v4520
          %v4522 = vpop.f32.mrf.mxu0
          %v4523 = vadd.f32 0.0, %v4522
          %4524 = vmatmul.bf16.gmra.mxu0 %v4224
          %v4525 = vpop.f32.mrf.mxu0
          %v4526 = vadd.f32 0.0, %v4525
          %v4527 = vpop.f32.mrf.mxu0
          %v4528 = vadd.f32 0.0, %v4527
          %4529 = vmatmul.bf16.gmra.mxu0 %v4228
          %v4530 = vpop.f32.mrf.mxu0
          %v4531 = vadd.f32 0.0, %v4530
          %v4532 = vpop.f32.mrf.mxu0
          %v4533 = vadd.f32 0.0, %v4532
          %4534 = vmatmul.bf16.gmra.mxu0 %v4232
          %v4535 = vpop.f32.mrf.mxu0
          %v4536 = vadd.f32 0.0, %v4535
          %v4537 = vpop.f32.mrf.mxu0
          %v4538 = vadd.f32 0.0, %v4537
          %4539 = vmatmul.bf16.gmra.mxu0 %v4236
          %v4540 = vpop.f32.mrf.mxu0
          %v4541 = vadd.f32 0.0, %v4540
          %v4542 = vpop.f32.mrf.mxu0
          %v4543 = vadd.f32 0.0, %v4542
          %4544 = vmatmul.bf16.gmra.mxu0 %v4240
          %v4545 = vpop.f32.mrf.mxu0
          %v4546 = vadd.f32 0.0, %v4545
          %v4547 = vpop.f32.mrf.mxu0
          %v4548 = vadd.f32 0.0, %v4547
          %4549 = vmatmul.bf16.gmra.mxu0 %v4244
          %v4550 = vpop.f32.mrf.mxu0
          %v4551 = vadd.f32 0.0, %v4550
          %v4552 = vpop.f32.mrf.mxu0
          %v4553 = vadd.f32 0.0, %v4552
          %4554 = vmatmul.bf16.gmra.mxu0 %v4248
          %v4555 = vpop.f32.mrf.mxu0
          %v4556 = vadd.f32 0.0, %v4555
          %v4557 = vpop.f32.mrf.mxu0
          %v4558 = vadd.f32 0.0, %v4557
          %4559 = vdwg.mxu0
          %4560 = vmatpush.bf16.msra.mxu0 %v4462
          %4561 = vmatpush.bf16.msra.mxu0 %v4461
          %4562 = vmatpush.bf16.msra.mxu0 %v4460
          %4563 = vmatpush.bf16.msra.mxu0 %v4459
          %4564 = vmatpush.bf16.msra.mxu0 %v4458
          %4565 = vmatpush.bf16.msra.mxu0 %v4457
          %4566 = vmatpush.bf16.msra.mxu0 %v4456
          %4567 = vmatpush.bf16.msra.mxu0 %v4455
          %4568 = vmatmul.bf16.gmra.mxu0 %v4221
          %v4569 = vpop.f32.mrf.mxu0
          %v4570 = vadd.f32 %v4521, %v4569
          %v4571 = vpop.f32.mrf.mxu0
          %v4572 = vadd.f32 %v4523, %v4571
          %4573 = vmatmul.bf16.gmra.mxu0 %v4225
          %v4574 = vpop.f32.mrf.mxu0
          %v4575 = vadd.f32 %v4526, %v4574
          %v4576 = vpop.f32.mrf.mxu0
          %v4577 = vadd.f32 %v4528, %v4576
          %4578 = vmatmul.bf16.gmra.mxu0 %v4229
          %v4579 = vpop.f32.mrf.mxu0
          %v4580 = vadd.f32 %v4531, %v4579
          %v4581 = vpop.f32.mrf.mxu0
          %v4582 = vadd.f32 %v4533, %v4581
          %4583 = vmatmul.bf16.gmra.mxu0 %v4233
          %v4584 = vpop.f32.mrf.mxu0
          %v4585 = vadd.f32 %v4536, %v4584
          %v4586 = vpop.f32.mrf.mxu0
          %v4587 = vadd.f32 %v4538, %v4586
          %4588 = vmatmul.bf16.gmra.mxu0 %v4237
          %v4589 = vpop.f32.mrf.mxu0
          %v4590 = vadd.f32 %v4541, %v4589
          %v4591 = vpop.f32.mrf.mxu0
          %v4592 = vadd.f32 %v4543, %v4591
          %4593 = vmatmul.bf16.gmra.mxu0 %v4241
          %v4594 = vpop.f32.mrf.mxu0
          %v4595 = vadd.f32 %v4546, %v4594
          %v4596 = vpop.f32.mrf.mxu0
          %v4597 = vadd.f32 %v4548, %v4596
          %4598 = vmatmul.bf16.gmra.mxu0 %v4245
          %v4599 = vpop.f32.mrf.mxu0
          %v4600 = vadd.f32 %v4551, %v4599
          %v4601 = vpop.f32.mrf.mxu0
          %v4602 = vadd.f32 %v4553, %v4601
          %4603 = vmatmul.bf16.gmra.mxu0 %v4249
          %v4604 = vpop.f32.mrf.mxu0
          %v4605 = vadd.f32 %v4556, %v4604
          %v4606 = vpop.f32.mrf.mxu0
          %v4607 = vadd.f32 %v4558, %v4606
          %4608 = vdwg.mxu0
          %4609 = vmatpush.bf16.msra.mxu0 %v4470
          %4610 = vmatpush.bf16.msra.mxu0 %v4469
          %4611 = vmatpush.bf16.msra.mxu0 %v4468
          %4612 = vmatpush.bf16.msra.mxu0 %v4467
          %4613 = vmatpush.bf16.msra.mxu0 %v4466
          %4614 = vmatpush.bf16.msra.mxu0 %v4465
          %4615 = vmatpush.bf16.msra.mxu0 %v4464
          %4616 = vmatpush.bf16.msra.mxu0 %v4463
          %4617 = vmatmul.bf16.gmra.mxu0 %v4222
          %v4618 = vpop.f32.mrf.mxu0
          %v4619 = vadd.f32 %v4570, %v4618
          %v4620 = vpop.f32.mrf.mxu0
          %v4621 = vadd.f32 %v4572, %v4620
          %4622 = vmatmul.bf16.gmra.mxu0 %v4226
          %v4623 = vpop.f32.mrf.mxu0
          %v4624 = vadd.f32 %v4575, %v4623
          %v4625 = vpop.f32.mrf.mxu0
          %v4626 = vadd.f32 %v4577, %v4625
          %4627 = vmatmul.bf16.gmra.mxu0 %v4230
          %v4628 = vpop.f32.mrf.mxu0
          %v4629 = vadd.f32 %v4580, %v4628
          %v4630 = vpop.f32.mrf.mxu0
          %v4631 = vadd.f32 %v4582, %v4630
          %4632 = vmatmul.bf16.gmra.mxu0 %v4234
          %v4633 = vpop.f32.mrf.mxu0
          %v4634 = vadd.f32 %v4585, %v4633
          %v4635 = vpop.f32.mrf.mxu0
          %v4636 = vadd.f32 %v4587, %v4635
          %4637 = vmatmul.bf16.gmra.mxu0 %v4238
          %v4638 = vpop.f32.mrf.mxu0
          %v4639 = vadd.f32 %v4590, %v4638
          %v4640 = vpop.f32.mrf.mxu0
          %v4641 = vadd.f32 %v4592, %v4640
          %4642 = vmatmul.bf16.gmra.mxu0 %v4242
          %v4643 = vpop.f32.mrf.mxu0
          %v4644 = vadd.f32 %v4595, %v4643
          %v4645 = vpop.f32.mrf.mxu0
          %v4646 = vadd.f32 %v4597, %v4645
          %4647 = vmatmul.bf16.gmra.mxu0 %v4246
          %v4648 = vpop.f32.mrf.mxu0
          %v4649 = vadd.f32 %v4600, %v4648
          %v4650 = vpop.f32.mrf.mxu0
          %v4651 = vadd.f32 %v4602, %v4650
          %4652 = vmatmul.bf16.gmra.mxu0 %v4250
          %v4653 = vpop.f32.mrf.mxu0
          %v4654 = vadd.f32 %v4605, %v4653
          %v4655 = vpop.f32.mrf.mxu0
          %v4656 = vadd.f32 %v4607, %v4655
          %4657 = vdwg.mxu0
          %4658 = vmatpush.bf16.msra.mxu0 %v4478
          %4659 = vmatpush.bf16.msra.mxu0 %v4477
          %4660 = vmatpush.bf16.msra.mxu0 %v4476
          %4661 = vmatpush.bf16.msra.mxu0 %v4475
          %4662 = vmatpush.bf16.msra.mxu0 %v4474
          %4663 = vmatpush.bf16.msra.mxu0 %v4473
          %4664 = vmatpush.bf16.msra.mxu0 %v4472
          %4665 = vmatpush.bf16.msra.mxu0 %v4471
          %4666 = vmatmul.bf16.gmra.mxu0 %v4223
          %v4667 = vpop.f32.mrf.mxu0
          %v4668 = vadd.f32 %v4619, %v4667
          %v4669 = vpop.f32.mrf.mxu0
          %v4670 = vadd.f32 %v4621, %v4669
          %4671 = vmatmul.bf16.gmra.mxu0 %v4227
          %v4672 = vpop.f32.mrf.mxu0
          %v4673 = vadd.f32 %v4624, %v4672
          %v4674 = vpop.f32.mrf.mxu0
          %v4675 = vadd.f32 %v4626, %v4674
          %4676 = vmatmul.bf16.gmra.mxu0 %v4231
          %v4677 = vpop.f32.mrf.mxu0
          %v4678 = vadd.f32 %v4629, %v4677
          %v4679 = vpop.f32.mrf.mxu0
          %v4680 = vadd.f32 %v4631, %v4679
          %4681 = vmatmul.bf16.gmra.mxu0 %v4235
          %v4682 = vpop.f32.mrf.mxu0
          %v4683 = vadd.f32 %v4634, %v4682
          %v4684 = vpop.f32.mrf.mxu0
          %v4685 = vadd.f32 %v4636, %v4684
          %4686 = vmatmul.bf16.gmra.mxu0 %v4239
          %v4687 = vpop.f32.mrf.mxu0
          %v4688 = vadd.f32 %v4639, %v4687
          %v4689 = vpop.f32.mrf.mxu0
          %v4690 = vadd.f32 %v4641, %v4689
          %4691 = vmatmul.bf16.gmra.mxu0 %v4243
          %v4692 = vpop.f32.mrf.mxu0
          %v4693 = vadd.f32 %v4644, %v4692
          %v4694 = vpop.f32.mrf.mxu0
          %v4695 = vadd.f32 %v4646, %v4694
          %4696 = vmatmul.bf16.gmra.mxu0 %v4247
          %v4697 = vpop.f32.mrf.mxu0
          %v4698 = vadd.f32 %v4649, %v4697
          %v4699 = vpop.f32.mrf.mxu0
          %v4700 = vadd.f32 %v4651, %v4699
          %4701 = vmatmul.bf16.gmra.mxu0 %v4251
          %v4702 = vpop.f32.mrf.mxu0
          %v4703 = vadd.f32 %v4654, %v4702
          %v4704 = vpop.f32.mrf.mxu0
          %v4705 = vadd.f32 %v4656, %v4704
          %4706 = vdwg.mxu0
          %v4707 = vadd.f32 %v3297, %v4668
          %v4708 = vadd.f32 %v3298, %v4670
          %v4709 = vadd.f32 %v3299, %v4673
          %v4710 = vadd.f32 %v3300, %v4675
          %v4711 = vadd.f32 %v3301, %v4678
          %v4712 = vadd.f32 %v3302, %v4680
          %v4713 = vadd.f32 %v3303, %v4683
          %v4714 = vadd.f32 %v3304, %v4685
          %v4715 = vadd.f32 %v3305, %v4688
          %v4716 = vadd.f32 %v3306, %v4690
          %v4717 = vadd.f32 %v3307, %v4693
          %v4718 = vadd.f32 %v3308, %v4695
          %v4719 = vadd.f32 %v3309, %v4698
          %v4720 = vadd.f32 %v3310, %v4700
          %v4721 = vadd.f32 %v3311, %v4703
          %v4722 = vadd.f32 %v3312, %v4705
        $region65: #{tpu_custom_call.1} parent=55 // loop_footer
          %s3296 = sadd.s32 1, %s3292
        $region66: #{tpu_custom_call.1} parent=55 // loop_footer_branch
          %3291 = sbr.rel target = $region62
        $region67: #{tpu_custom_call.1} parent=55 // loop_exit
          _
        %v4723 = vadd.f32 %v3267, %v3297
        %v4724 = vadd.f32 %v3268, %v3298
        %v4725 = vadd.f32 %v3269, %v3299
        %v4726 = vadd.f32 %v3270, %v3300
        %v4727 = vadd.f32 %v3271, %v3301
        %v4728 = vadd.f32 %v3272, %v3302
        %v4729 = vadd.f32 %v3273, %v3303
        %v4730 = vadd.f32 %v3274, %v3304
        %v4731 = vadd.f32 %v3275, %v3305
        %v4732 = vadd.f32 %v3276, %v3306
        %v4733 = vadd.f32 %v3277, %v3307
        %v4734 = vadd.f32 %v3278, %v3308
        %v4735 = vadd.f32 %v3279, %v3309
        %v4736 = vadd.f32 %v3280, %v3310
        %v4737 = vadd.f32 %v3281, %v3311
        %v4738 = vadd.f32 %v3282, %v3312
        %v4739 = vperm.slane %v2755, 0
        %v4740 = vadd.f32 %v4723, %v4739
        %v4741 = vadd.f32 %v4724, %v4739
        %v4742 = vadd.f32 %v4725, %v4739
        %v4743 = vadd.f32 %v4726, %v4739
        %v4744 = vadd.f32 %v4727, %v4739
        %v4745 = vadd.f32 %v4728, %v4739
        %v4746 = vadd.f32 %v4729, %v4739
        %v4747 = vadd.f32 %v4730, %v4739
        %v4748 = vadd.f32 %v4731, %v4739
        %v4749 = vadd.f32 %v4732, %v4739
        %v4750 = vadd.f32 %v4733, %v4739
        %v4751 = vadd.f32 %v4734, %v4739
        %v4752 = vadd.f32 %v4735, %v4739
        %v4753 = vadd.f32 %v4736, %v4739
        %v4754 = vadd.f32 %v4737, %v4739
        %v4755 = vadd.f32 %v4738, %v4739
        %v4756 = vsel %vm620, %v4740, 0.0
        %4757 = vadd.xlane.f32.xlu0 %v4756
        %v4758 = vpop.xlane.xlu0 %4757
        %v4759 = vsel %vm620, %v4741, 0.0
        %4760 = vadd.xlane.f32.xlu0 %v4759
        %v4761 = vpop.xlane.xlu0 %4760
        %v4762 = vsel %vm620, %v4742, 0.0
        %4763 = vadd.xlane.f32.xlu0 %v4762
        %v4764 = vpop.xlane.xlu0 %4763
        %v4765 = vsel %vm620, %v4743, 0.0
        %4766 = vadd.xlane.f32.xlu0 %v4765
        %v4767 = vpop.xlane.xlu0 %4766
        %v4768 = vsel %vm620, %v4744, 0.0
        %4769 = vadd.xlane.f32.xlu0 %v4768
        %v4770 = vpop.xlane.xlu0 %4769
        %v4771 = vsel %vm620, %v4745, 0.0
        %4772 = vadd.xlane.f32.xlu0 %v4771
        %v4773 = vpop.xlane.xlu0 %4772
        %v4774 = vsel %vm620, %v4746, 0.0
        %4775 = vadd.xlane.f32.xlu0 %v4774
        %v4776 = vpop.xlane.xlu0 %4775
        %v4777 = vsel %vm620, %v4747, 0.0
        %4778 = vadd.xlane.f32.xlu0 %v4777
        %v4779 = vpop.xlane.xlu0 %4778
        %v4780 = vsel %vm620, %v4748, 0.0
        %4781 = vadd.xlane.f32.xlu0 %v4780
        %v4782 = vpop.xlane.xlu0 %4781
        %v4783 = vsel %vm620, %v4749, 0.0
        %4784 = vadd.xlane.f32.xlu0 %v4783
        %v4785 = vpop.xlane.xlu0 %4784
        %v4786 = vsel %vm620, %v4750, 0.0
        %4787 = vadd.xlane.f32.xlu0 %v4786
        %v4788 = vpop.xlane.xlu0 %4787
        %v4789 = vsel %vm620, %v4751, 0.0
        %4790 = vadd.xlane.f32.xlu0 %v4789
        %v4791 = vpop.xlane.xlu0 %4790
        %v4792 = vsel %vm620, %v4752, 0.0
        %4793 = vadd.xlane.f32.xlu0 %v4792
        %v4794 = vpop.xlane.xlu0 %4793
        %v4795 = vsel %vm620, %v4753, 0.0
        %4796 = vadd.xlane.f32.xlu0 %v4795
        %v4797 = vpop.xlane.xlu0 %4796
        %v4798 = vsel %vm620, %v4754, 0.0
        %4799 = vadd.xlane.f32.xlu0 %v4798
        %v4800 = vpop.xlane.xlu0 %4799
        %v4801 = vsel %vm620, %v4755, 0.0
        %4802 = vadd.xlane.f32.xlu0 %v4801
        %v4803 = vpop.xlane.xlu0 %4802
        %v4804 = vmul.f32 %v4758, %v2944
        %v4805 = vmul.f32 %v4761, %v2944
        %v4806 = vmul.f32 %v4764, %v2944
        %v4807 = vmul.f32 %v4767, %v2944
        %v4808 = vmul.f32 %v4770, %v2944
        %v4809 = vmul.f32 %v4773, %v2944
        %v4810 = vmul.f32 %v4776, %v2944
        %v4811 = vmul.f32 %v4779, %v2944
        %v4812 = vmul.f32 %v4782, %v2944
        %v4813 = vmul.f32 %v4785, %v2944
        %v4814 = vmul.f32 %v4788, %v2944
        %v4815 = vmul.f32 %v4791, %v2944
        %v4816 = vmul.f32 %v4794, %v2944
        %v4817 = vmul.f32 %v4797, %v2944
        %v4818 = vmul.f32 %v4800, %v2944
        %v4819 = vmul.f32 %v4803, %v2944
        %v4820 = vsub.f32 %v4740, %v4804
        %v4821 = vsub.f32 %v4741, %v4805
        %v4822 = vsub.f32 %v4742, %v4806
        %v4823 = vsub.f32 %v4743, %v4807
        %v4824 = vsub.f32 %v4744, %v4808
        %v4825 = vsub.f32 %v4745, %v4809
        %v4826 = vsub.f32 %v4746, %v4810
        %v4827 = vsub.f32 %v4747, %v4811
        %v4828 = vsub.f32 %v4748, %v4812
        %v4829 = vsub.f32 %v4749, %v4813
        %v4830 = vsub.f32 %v4750, %v4814
        %v4831 = vsub.f32 %v4751, %v4815
        %v4832 = vsub.f32 %v4752, %v4816
        %v4833 = vsub.f32 %v4753, %v4817
        %v4834 = vsub.f32 %v4754, %v4818
        %v4835 = vsub.f32 %v4755, %v4819
        %v4836 = vmul.f32 %v4820, %v4820
        %v4837 = vmul.f32 %v4821, %v4821
        %v4838 = vmul.f32 %v4822, %v4822
        %v4839 = vmul.f32 %v4823, %v4823
        %v4840 = vmul.f32 %v4824, %v4824
        %v4841 = vmul.f32 %v4825, %v4825
        %v4842 = vmul.f32 %v4826, %v4826
        %v4843 = vmul.f32 %v4827, %v4827
        %v4844 = vmul.f32 %v4828, %v4828
        %v4845 = vmul.f32 %v4829, %v4829
        %v4846 = vmul.f32 %v4830, %v4830
        %v4847 = vmul.f32 %v4831, %v4831
        %v4848 = vmul.f32 %v4832, %v4832
        %v4849 = vmul.f32 %v4833, %v4833
        %v4850 = vmul.f32 %v4834, %v4834
        %v4851 = vmul.f32 %v4835, %v4835
        %v4852 = vsel %vm620, %v4836, 0.0
        %4853 = vadd.xlane.f32.xlu0 %v4852
        %v4854 = vpop.xlane.xlu0 %4853
        %v4855 = vsel %vm620, %v4837, 0.0
        %4856 = vadd.xlane.f32.xlu0 %v4855
        %v4857 = vpop.xlane.xlu0 %4856
        %v4858 = vsel %vm620, %v4838, 0.0
        %4859 = vadd.xlane.f32.xlu0 %v4858
        %v4860 = vpop.xlane.xlu0 %4859
        %v4861 = vsel %vm620, %v4839, 0.0
        %4862 = vadd.xlane.f32.xlu0 %v4861
        %v4863 = vpop.xlane.xlu0 %4862
        %v4864 = vsel %vm620, %v4840, 0.0
        %4865 = vadd.xlane.f32.xlu0 %v4864
        %v4866 = vpop.xlane.xlu0 %4865
        %v4867 = vsel %vm620, %v4841, 0.0
        %4868 = vadd.xlane.f32.xlu0 %v4867
        %v4869 = vpop.xlane.xlu0 %4868
        %v4870 = vsel %vm620, %v4842, 0.0
        %4871 = vadd.xlane.f32.xlu0 %v4870
        %v4872 = vpop.xlane.xlu0 %4871
        %v4873 = vsel %vm620, %v4843, 0.0
        %4874 = vadd.xlane.f32.xlu0 %v4873
        %v4875 = vpop.xlane.xlu0 %4874
        %v4876 = vsel %vm620, %v4844, 0.0
        %4877 = vadd.xlane.f32.xlu0 %v4876
        %v4878 = vpop.xlane.xlu0 %4877
        %v4879 = vsel %vm620, %v4845, 0.0
        %4880 = vadd.xlane.f32.xlu0 %v4879
        %v4881 = vpop.xlane.xlu0 %4880
        %v4882 = vsel %vm620, %v4846, 0.0
        %4883 = vadd.xlane.f32.xlu0 %v4882
        %v4884 = vpop.xlane.xlu0 %4883
        %v4885 = vsel %vm620, %v4847, 0.0
        %4886 = vadd.xlane.f32.xlu0 %v4885
        %v4887 = vpop.xlane.xlu0 %4886
        %v4888 = vsel %vm620, %v4848, 0.0
        %4889 = vadd.xlane.f32.xlu0 %v4888
        %v4890 = vpop.xlane.xlu0 %4889
        %v4891 = vsel %vm620, %v4849, 0.0
        %4892 = vadd.xlane.f32.xlu0 %v4891
        %v4893 = vpop.xlane.xlu0 %4892
        %v4894 = vsel %vm620, %v4850, 0.0
        %4895 = vadd.xlane.f32.xlu0 %v4894
        %v4896 = vpop.xlane.xlu0 %4895
        %v4897 = vsel %vm620, %v4851, 0.0
        %4898 = vadd.xlane.f32.xlu0 %v4897
        %v4899 = vpop.xlane.xlu0 %4898
        %v4900 = vmul.f32 %v4854, %v2944
        %v4901 = vmul.f32 %v4857, %v2944
        %v4902 = vmul.f32 %v4860, %v2944
        %v4903 = vmul.f32 %v4863, %v2944
        %v4904 = vmul.f32 %v4866, %v2944
        %v4905 = vmul.f32 %v4869, %v2944
        %v4906 = vmul.f32 %v4872, %v2944
        %v4907 = vmul.f32 %v4875, %v2944
        %v4908 = vmul.f32 %v4878, %v2944
        %v4909 = vmul.f32 %v4881, %v2944
        %v4910 = vmul.f32 %v4884, %v2944
        %v4911 = vmul.f32 %v4887, %v2944
        %v4912 = vmul.f32 %v4890, %v2944
        %v4913 = vmul.f32 %v4893, %v2944
        %v4914 = vmul.f32 %v4896, %v2944
        %v4915 = vmul.f32 %v4899, %v2944
        %v4916 = vadd.f32 %v4900, 1e-05
        %v4917 = vadd.f32 %v4901, 1e-05
        %v4918 = vadd.f32 %v4902, 1e-05
        %v4919 = vadd.f32 %v4903, 1e-05
        %v4920 = vadd.f32 %v4904, 1e-05
        %v4921 = vadd.f32 %v4905, 1e-05
        %v4922 = vadd.f32 %v4906, 1e-05
        %v4923 = vadd.f32 %v4907, 1e-05
        %v4924 = vadd.f32 %v4908, 1e-05
        %v4925 = vadd.f32 %v4909, 1e-05
        %v4926 = vadd.f32 %v4910, 1e-05
        %v4927 = vadd.f32 %v4911, 1e-05
        %v4928 = vadd.f32 %v4912, 1e-05
        %v4929 = vadd.f32 %v4913, 1e-05
        %v4930 = vadd.f32 %v4914, 1e-05
        %v4931 = vadd.f32 %v4915, 1e-05
        %v4932 = vrsqrt.pop %v4916
        %v4933 = vmul.f32 %v4932, %v4916
        %v4934 = vmul.f32 %v4933, %v4932
        %v4935 = vmul.f32 0.5, %v4934
        %v4936 = vsub.f32 1.5, %v4935
        %v4937 = vmul.f32 %v4932, %v4936
        %vm4938 = vweird.f32 %v4916
        %vm4939 = vweird.f32 %v4932
        %vm4940 = vmor %vm4938, %vm4939
        %v4941 = vsel %vm4940, %v4932, %v4937
        %v4942 = vrsqrt.pop %v4917
        %v4943 = vmul.f32 %v4942, %v4917
        %v4944 = vmul.f32 %v4943, %v4942
        %v4945 = vmul.f32 0.5, %v4944
        %v4946 = vsub.f32 1.5, %v4945
        %v4947 = vmul.f32 %v4942, %v4946
        %vm4948 = vweird.f32 %v4917
        %vm4949 = vweird.f32 %v4942
        %vm4950 = vmor %vm4948, %vm4949
        %v4951 = vsel %vm4950, %v4942, %v4947
        %v4952 = vrsqrt.pop %v4918
        %v4953 = vmul.f32 %v4952, %v4918
        %v4954 = vmul.f32 %v4953, %v4952
        %v4955 = vmul.f32 0.5, %v4954
        %v4956 = vsub.f32 1.5, %v4955
        %v4957 = vmul.f32 %v4952, %v4956
        %vm4958 = vweird.f32 %v4918
        %vm4959 = vweird.f32 %v4952
        %vm4960 = vmor %vm4958, %vm4959
        %v4961 = vsel %vm4960, %v4952, %v4957
        %v4962 = vrsqrt.pop %v4919
        %v4963 = vmul.f32 %v4962, %v4919
        %v4964 = vmul.f32 %v4963, %v4962
        %v4965 = vmul.f32 0.5, %v4964
        %v4966 = vsub.f32 1.5, %v4965
        %v4967 = vmul.f32 %v4962, %v4966
        %vm4968 = vweird.f32 %v4919
        %vm4969 = vweird.f32 %v4962
        %vm4970 = vmor %vm4968, %vm4969
        %v4971 = vsel %vm4970, %v4962, %v4967
        %v4972 = vrsqrt.pop %v4920
        %v4973 = vmul.f32 %v4972, %v4920
        %v4974 = vmul.f32 %v4973, %v4972
        %v4975 = vmul.f32 0.5, %v4974
        %v4976 = vsub.f32 1.5, %v4975
        %v4977 = vmul.f32 %v4972, %v4976
        %vm4978 = vweird.f32 %v4920
        %vm4979 = vweird.f32 %v4972
        %vm4980 = vmor %vm4978, %vm4979
        %v4981 = vsel %vm4980, %v4972, %v4977
        %v4982 = vrsqrt.pop %v4921
        %v4983 = vmul.f32 %v4982, %v4921
        %v4984 = vmul.f32 %v4983, %v4982
        %v4985 = vmul.f32 0.5, %v4984
        %v4986 = vsub.f32 1.5, %v4985
        %v4987 = vmul.f32 %v4982, %v4986
        %vm4988 = vweird.f32 %v4921
        %vm4989 = vweird.f32 %v4982
        %vm4990 = vmor %vm4988, %vm4989
        %v4991 = vsel %vm4990, %v4982, %v4987
        %v4992 = vrsqrt.pop %v4922
        %v4993 = vmul.f32 %v4992, %v4922
        %v4994 = vmul.f32 %v4993, %v4992
        %v4995 = vmul.f32 0.5, %v4994
        %v4996 = vsub.f32 1.5, %v4995
        %v4997 = vmul.f32 %v4992, %v4996
        %vm4998 = vweird.f32 %v4922
        %vm4999 = vweird.f32 %v4992
        %vm5000 = vmor %vm4998, %vm4999
        %v5001 = vsel %vm5000, %v4992, %v4997
        %v5002 = vrsqrt.pop %v4923
        %v5003 = vmul.f32 %v5002, %v4923
        %v5004 = vmul.f32 %v5003, %v5002
        %v5005 = vmul.f32 0.5, %v5004
        %v5006 = vsub.f32 1.5, %v5005
        %v5007 = vmul.f32 %v5002, %v5006
        %vm5008 = vweird.f32 %v4923
        %vm5009 = vweird.f32 %v5002
        %vm5010 = vmor %vm5008, %vm5009
        %v5011 = vsel %vm5010, %v5002, %v5007
        %v5012 = vrsqrt.pop %v4924
        %v5013 = vmul.f32 %v5012, %v4924
        %v5014 = vmul.f32 %v5013, %v5012
        %v5015 = vmul.f32 0.5, %v5014
        %v5016 = vsub.f32 1.5, %v5015
        %v5017 = vmul.f32 %v5012, %v5016
        %vm5018 = vweird.f32 %v4924
        %vm5019 = vweird.f32 %v5012
        %vm5020 = vmor %vm5018, %vm5019
        %v5021 = vsel %vm5020, %v5012, %v5017
        %v5022 = vrsqrt.pop %v4925
        %v5023 = vmul.f32 %v5022, %v4925
        %v5024 = vmul.f32 %v5023, %v5022
        %v5025 = vmul.f32 0.5, %v5024
        %v5026 = vsub.f32 1.5, %v5025
        %v5027 = vmul.f32 %v5022, %v5026
        %vm5028 = vweird.f32 %v4925
        %vm5029 = vweird.f32 %v5022
        %vm5030 = vmor %vm5028, %vm5029
        %v5031 = vsel %vm5030, %v5022, %v5027
        %v5032 = vrsqrt.pop %v4926
        %v5033 = vmul.f32 %v5032, %v4926
        %v5034 = vmul.f32 %v5033, %v5032
        %v5035 = vmul.f32 0.5, %v5034
        %v5036 = vsub.f32 1.5, %v5035
        %v5037 = vmul.f32 %v5032, %v5036
        %vm5038 = vweird.f32 %v4926
        %vm5039 = vweird.f32 %v5032
        %vm5040 = vmor %vm5038, %vm5039
        %v5041 = vsel %vm5040, %v5032, %v5037
        %v5042 = vrsqrt.pop %v4927
        %v5043 = vmul.f32 %v5042, %v4927
        %v5044 = vmul.f32 %v5043, %v5042
        %v5045 = vmul.f32 0.5, %v5044
        %v5046 = vsub.f32 1.5, %v5045
        %v5047 = vmul.f32 %v5042, %v5046
        %vm5048 = vweird.f32 %v4927
        %vm5049 = vweird.f32 %v5042
        %vm5050 = vmor %vm5048, %vm5049
        %v5051 = vsel %vm5050, %v5042, %v5047
        %v5052 = vrsqrt.pop %v4928
        %v5053 = vmul.f32 %v5052, %v4928
        %v5054 = vmul.f32 %v5053, %v5052
        %v5055 = vmul.f32 0.5, %v5054
        %v5056 = vsub.f32 1.5, %v5055
        %v5057 = vmul.f32 %v5052, %v5056
        %vm5058 = vweird.f32 %v4928
        %vm5059 = vweird.f32 %v5052
        %vm5060 = vmor %vm5058, %vm5059
        %v5061 = vsel %vm5060, %v5052, %v5057
        %v5062 = vrsqrt.pop %v4929
        %v5063 = vmul.f32 %v5062, %v4929
        %v5064 = vmul.f32 %v5063, %v5062
        %v5065 = vmul.f32 0.5, %v5064
        %v5066 = vsub.f32 1.5, %v5065
        %v5067 = vmul.f32 %v5062, %v5066
        %vm5068 = vweird.f32 %v4929
        %vm5069 = vweird.f32 %v5062
        %vm5070 = vmor %vm5068, %vm5069
        %v5071 = vsel %vm5070, %v5062, %v5067
        %v5072 = vrsqrt.pop %v4930
        %v5073 = vmul.f32 %v5072, %v4930
        %v5074 = vmul.f32 %v5073, %v5072
        %v5075 = vmul.f32 0.5, %v5074
        %v5076 = vsub.f32 1.5, %v5075
        %v5077 = vmul.f32 %v5072, %v5076
        %vm5078 = vweird.f32 %v4930
        %vm5079 = vweird.f32 %v5072
        %vm5080 = vmor %vm5078, %vm5079
        %v5081 = vsel %vm5080, %v5072, %v5077
        %v5082 = vrsqrt.pop %v4931
        %v5083 = vmul.f32 %v5082, %v4931
        %v5084 = vmul.f32 %v5083, %v5082
        %v5085 = vmul.f32 0.5, %v5084
        %v5086 = vsub.f32 1.5, %v5085
        %v5087 = vmul.f32 %v5082, %v5086
        %vm5088 = vweird.f32 %v4931
        %vm5089 = vweird.f32 %v5082
        %vm5090 = vmor %vm5088, %vm5089
        %v5091 = vsel %vm5090, %v5082, %v5087
        %v5092 = vmul.f32 %v4820, %v4941
        %v5093 = vmul.f32 %v4821, %v4951
        %v5094 = vmul.f32 %v4822, %v4961
        %v5095 = vmul.f32 %v4823, %v4971
        %v5096 = vmul.f32 %v4824, %v4981
        %v5097 = vmul.f32 %v4825, %v4991
        %v5098 = vmul.f32 %v4826, %v5001
        %v5099 = vmul.f32 %v4827, %v5011
        %v5100 = vmul.f32 %v4828, %v5021
        %v5101 = vmul.f32 %v4829, %v5031
        %v5102 = vmul.f32 %v4830, %v5041
        %v5103 = vmul.f32 %v4831, %v5051
        %v5104 = vmul.f32 %v4832, %v5061
        %v5105 = vmul.f32 %v4833, %v5071
        %v5106 = vmul.f32 %v4834, %v5081
        %v5107 = vmul.f32 %v4835, %v5091
        %v5108 = vperm.slane %v2758, 0
        %v5109 = vmul.f32 %v5092, %v5108
        %v5110 = vmul.f32 %v5093, %v5108
        %v5111 = vmul.f32 %v5094, %v5108
        %v5112 = vmul.f32 %v5095, %v5108
        %v5113 = vmul.f32 %v5096, %v5108
        %v5114 = vmul.f32 %v5097, %v5108
        %v5115 = vmul.f32 %v5098, %v5108
        %v5116 = vmul.f32 %v5099, %v5108
        %v5117 = vmul.f32 %v5100, %v5108
        %v5118 = vmul.f32 %v5101, %v5108
        %v5119 = vmul.f32 %v5102, %v5108
        %v5120 = vmul.f32 %v5103, %v5108
        %v5121 = vmul.f32 %v5104, %v5108
        %v5122 = vmul.f32 %v5105, %v5108
        %v5123 = vmul.f32 %v5106, %v5108
        %v5124 = vmul.f32 %v5107, %v5108
        %v5125 = vperm.slane %v2759, 0
        %v5126 = vadd.f32 %v5109, %v5125
        %v5127 = vadd.f32 %v5110, %v5125
        %v5128 = vadd.f32 %v5111, %v5125
        %v5129 = vadd.f32 %v5112, %v5125
        %v5130 = vadd.f32 %v5113, %v5125
        %v5131 = vadd.f32 %v5114, %v5125
        %v5132 = vadd.f32 %v5115, %v5125
        %v5133 = vadd.f32 %v5116, %v5125
        %v5134 = vadd.f32 %v5117, %v5125
        %v5135 = vadd.f32 %v5118, %v5125
        %v5136 = vadd.f32 %v5119, %v5125
        %v5137 = vadd.f32 %v5120, %v5125
        %v5138 = vadd.f32 %v5121, %v5125
        %v5139 = vadd.f32 %v5122, %v5125
        %v5140 = vadd.f32 %v5123, %v5125
        %v5141 = vadd.f32 %v5124, %v5125
        %5142 = vst.msk [vmem:[%s439] sm:$0xff] %vm620, %v5126
        %5143 = vst.msk [vmem:[%s439 + $0x8] sm:$0xff] %vm620, %v5127
        %5144 = vst.msk [vmem:[%s439 + $0x10] sm:$0xff] %vm620, %v5128
        %5145 = vst.msk [vmem:[%s439 + $0x18] sm:$0xff] %vm620, %v5129
        %5146 = vst.msk [vmem:[%s439 + $0x20] sm:$0xff] %vm620, %v5130
        %5147 = vst.msk [vmem:[%s439 + $0x28] sm:$0xff] %vm620, %v5131
        %5148 = vst.msk [vmem:[%s439 + $0x30] sm:$0xff] %vm620, %v5132
        %5149 = vst.msk [vmem:[%s439 + $0x38] sm:$0xff] %vm620, %v5133
        %5150 = vst.msk [vmem:[%s439 + $0x40] sm:$0xff] %vm620, %v5134
        %5151 = vst.msk [vmem:[%s439 + $0x48] sm:$0xff] %vm620, %v5135
        %5152 = vst.msk [vmem:[%s439 + $0x50] sm:$0xff] %vm620, %v5136
        %5153 = vst.msk [vmem:[%s439 + $0x58] sm:$0xff] %vm620, %v5137
        %5154 = vst.msk [vmem:[%s439 + $0x60] sm:$0xff] %vm620, %v5138
        %5155 = vst.msk [vmem:[%s439 + $0x68] sm:$0xff] %vm620, %v5139
        %5156 = vst.msk [vmem:[%s439 + $0x70] sm:$0xff] %vm620, %v5140
        %5157 = vst.msk [vmem:[%s439 + $0x78] sm:$0xff] %vm620, %v5141
        %s5158 = sand.u32 %s272, 1
        %s5159 = scalar_lea.sflag [#allocation3], %s5158
        %s5160 = sand.u32 %s272, 1
        %s5161 = smul.addr %s5160, 128
        %s5162 = scalar_lea.vmem [#allocation2], %s5161
        // Predicated region
        $region68: #{tpu_custom_call.1} parent=55 // pred_check
          %p5163 = pneg %p282
        $region69: #{tpu_custom_call.1} parent=55 // pred_check_branch
          %5165 = sbr.rel (%p5163) target = $region71
        $region70: #{tpu_custom_call.1} parent=55 // pred_region
          %s5166 = smul.u32 2, %s27
          %5168 = vsyncadd %s5159, 0
          %s5169 = smul.addr %s5166, 8
          %s5170 = smul.addr %s5169, 8
          %s5171 = scalar_lea.hbm %s9, %s5170
          %s5172 = sshll.u32 %s5162, 4
          %s5173 = int_to_ptr.vmem [resolvable:$true] %s5172
          %s5174 = sshll.u32 %s5171, 4
          %s5175 = int_to_ptr.hbm [resolvable:$true] %s5174
          %5180 = dma.vmem_to_hbm [thread:$0]  %s5173, 2048, %s5175, %s5159, 128, 128, 8
        $region71: #{tpu_custom_call.1} parent=55 // pred_fallthru
          _
      $region56: #{tpu_custom_call.1} parent=5 // pred_fallthru
        _
      %p5181 = scmp.le.s32.totalorder 2, %s18
      // Predicated region
      $region72: #{tpu_custom_call.1} parent=5 // pred_check
        %p5182 = pneg %p5181
      $region73: #{tpu_custom_call.1} parent=5 // pred_check_branch
        %5184 = sbr.rel (%p5182) target = $region75
      $region74: #{tpu_custom_call.1} parent=5 // pred_region
        %s5185 = ssub.s32 %s18, 2
        // Predicated region
        $region76: #{tpu_custom_call.1} parent=74 // pred_check
          %p5186 = pneg %p288
        $region77: #{tpu_custom_call.1} parent=74 // pred_check_branch
          %5188 = sbr.rel (%p5186) target = $region79
        $region78: #{tpu_custom_call.1} parent=74 // pred_region
          %s5189 = sand.u32 %s273, 1
          %s5190 = scalar_lea.sflag [#allocation3], %s5189
          %s5191 = sand.u32 %s273, 1
          %s5192 = smul.addr %s5191, 128
          %s5193 = scalar_lea.vmem [#allocation2], %s5192
          %5195 = dma.done %s5190, 2048
        $region79: #{tpu_custom_call.1} parent=74 // pred_fallthru
          _
      $region75: #{tpu_custom_call.1} parent=5 // pred_fallthru
        _
    $region6: #{tpu_custom_call.1} parent=1 // loop_footer
      %s22 = sadd.s32 1, %s18
    $region7: #{tpu_custom_call.1} parent=1 // loop_footer_branch
      %17 = sbr.rel target = $region3
    $region8: #{tpu_custom_call.1} parent=1 // loop_exit
      _
    %5196 = vsyncpa [#allocation3], 1
    %s5197 = scalar_lea.sflag [#allocation3], 1
    %5198 = vsyncpa %s5197, 1

</llo_original>
